<compile_context>
chip_gen: v7x
topology: tpu7x:2x2x1
jax: 0.10.0
libtpu: 0.0.40
codegen_flags: <defaults>
</compile_context>

<pallas_src>
import jax
import jax.numpy as jnp
from jax import lax
from jax.experimental import pallas as pl
from jax.experimental.pallas import tpu as pltpu


# Set to jnp.bfloat16 for production (halves weight/patch traffic, 2x MXU on
# v6e/v7x); requires relaxing the 1e-5 allclose check below.
MATMUL_DTYPE = jnp.float32


# ----------------------------- fused kernel -------------------------------- #

def _down_fused_kernel(x_ref, w1_ref, b1_ref, w2_ref, b2_ref, o_ref,
                       xpad1_ref, xpad2_ref, p1_ref, p2_ref):
    """NB images: maxpool(2) -> conv3x3+ReLU -> conv3x3+ReLU, all in VMEM.

    x_ref:     (NB, Cin, 4*Hp*Wp)   NCHW input with H,W pre-flattened (free view)
    w1_ref:    (9*Cin, C)           conv1 weight, HWIO flattened (ky, kx, cin)
    b1_ref:    (1, C)
    w2_ref:    (9*C, C)             conv2 weight
    b2_ref:    (1, C)
    o_ref:     (NB, C, Hp*Wp)       NCHW output slab (lane axis = Hp*Wp)
    xpad1_ref: VMEM (NB, Hp+2, Wp+2, Cin)  zero-padded pooled input
    xpad2_ref: VMEM (NB, Hp+2, Wp+2, C)    zero-padded conv1 output
    p1_ref:    VMEM (NB*Hp*Wp, 9*Cin)      conv1 im2col patches
    p2_ref:    VMEM (NB*Hp*Wp, 9*C)        conv2 im2col patches
    """
    NB = x_ref.shape[0]
    Cin = x_ref.shape[1]
    Hp = xpad1_ref.shape[1] - 2
    Wp = xpad1_ref.shape[2] - 2
    C = o_ref.shape[1]
    M = NB * Hp * Wp

    # ---- zero ONLY the 1-px halo strips (every step: megacore-safe).  The
    # interiors are fully overwritten below, so no full-scratch clear needed.
    xpad1_ref[:, 0:1, :, :] = jnp.zeros((NB, 1, Wp + 2, Cin), jnp.float32)
    xpad1_ref[:, Hp + 1:Hp + 2, :, :] = jnp.zeros((NB, 1, Wp + 2, Cin), jnp.float32)
    xpad1_ref[:, :, 0:1, :] = jnp.zeros((NB, Hp + 2, 1, Cin), jnp.float32)
    xpad1_ref[:, :, Wp + 1:Wp + 2, :] = jnp.zeros((NB, Hp + 2, 1, Cin), jnp.float32)
    xpad2_ref[:, 0:1, :, :] = jnp.zeros((NB, 1, Wp + 2, C), jnp.float32)
    xpad2_ref[:, Hp + 1:Hp + 2, :, :] = jnp.zeros((NB, 1, Wp + 2, C), jnp.float32)
    xpad2_ref[:, :, 0:1, :] = jnp.zeros((NB, Hp + 2, 1, C), jnp.float32)
    xpad2_ref[:, :, Wp + 1:Wp + 2, :] = jnp.zeros((NB, Hp + 2, 1, C), jnp.float32)

    # ---- NCHW -> channels-last + MaxPool2d(2), per image (NB is small/static).
    # The transpose is a plain 2-D swap on the otherwise-idle XLU; all reshapes
    # keep the lane (last) dim fixed, so they are row-regroupings only.
    for b in range(NB):
        xb = jnp.transpose(x_ref[b].astype(jnp.float32))   # (4*Hp*Wp, Cin)
        xr = xb.reshape(Hp, 2, 2 * Wp, Cin)                 # H-pool: outer split
        xh = jnp.maximum(xr[:, 0], xr[:, 1])                # (Hp, 2Wp, Cin)
        xw = xh.reshape(Hp, Wp, 2, Cin)                     # W-pool: pair split
        pooled = jnp.maximum(xw[:, :, 0], xw[:, :, 1])      # (Hp, Wp, Cin)
        xpad1_ref[b, 1:Hp + 1, 1:Wp + 1, :] = pooled

    # ---- conv1 3x3 (pad 1) + ReLU: 9 taps stored straight into the patches
    # scratch (no concatenate), then ONE MXU matmul with M = NB*Hp*Wp rows.
    for ky in range(3):
        for kx in range(3):
            t = ky * 3 + kx
            p1_ref[:, t * Cin:(t + 1) * Cin] = (
                xpad1_ref[:, ky:ky + Hp, kx:kx + Wp, :].reshape(M, Cin))
    h1 = jnp.dot(p1_ref[...].astype(MATMUL_DTYPE), w1_ref[...],
                 preferred_element_type=jnp.float32)
    h1 = jnp.maximum(h1 + b1_ref[...], 0.0)                  # (M, C)
    xpad2_ref[:, 1:Hp + 1, 1:Wp + 1, :] = h1.reshape(NB, Hp, Wp, C)

    # ---- conv2 3x3 (pad 1) + ReLU
    for ky in range(3):
        for kx in range(3):
            t = ky * 3 + kx
            p2_ref[:, t * C:(t + 1) * C] = (
                xpad2_ref[:, ky:ky + Hp, kx:kx + Wp, :].reshape(M, C))
    h2 = jnp.dot(p2_ref[...].astype(MATMUL_DTYPE), w2_ref[...],
                 preferred_element_type=jnp.float32)
    h2 = jnp.maximum(h2 + b2_ref[...], 0.0)                  # (M, C)

    # ---- write NCHW directly: (C, Hp*Wp) per image, Hp*Wp on the lane axis
    # (lane-dense at production sizes; no wrapper transpose remains).
    for b in range(NB):
        hb = h2[b * Hp * Wp:(b + 1) * Hp * Wp, :]            # (Hp*Wp, C)
        o_ref[b] = jnp.transpose(hb).astype(o_ref.dtype)     # (C, Hp*Wp)


# ----------------------------- wrapper -------------------------------------- #

@jax.jit
def down_forward(x_nchw, params):
    """Down.forward: maxpool(2) -> conv1 3x3 + relu -> conv2 3x3 + relu (fused)."""
    N, Cin, H, W = x_nchw.shape
    Hp, Wp = H // 2, W // 2
    C = params["b1"].shape[0]

    # Floor odd tails like PyTorch MaxPool2d(2), then flatten H,W.  For even
    # H,W this is a pure metadata reshape (NO HBM transpose / copy); the
    # layout conversion happens inside the kernel on the XLU.
    x3 = x_nchw[:, :, :2 * Hp, :2 * Wp].reshape(N, Cin, 4 * Hp * Wp)

    # HWIO -> (9*Cin, C); row = (ky*3 + kx)*Cin + ci, matching the tap loops.
    w1 = params["w1"].reshape(9 * Cin, C).astype(MATMUL_DTYPE)
    w2 = params["w2"].reshape(9 * C, C).astype(MATMUL_DTYPE)
    b1 = params["b1"].reshape(1, C).astype(jnp.float32)
    b2 = params["b2"].reshape(1, C).astype(jnp.float32)

    # Pack images per grid step so the matmul M dim (NB*Hp*Wp) fills the MXU
    # (<=256 rows); keeps NB a small static unroll count.
    nb = 1
    while (nb < N and nb < 8 and N % (2 * nb) == 0
           and 2 * nb * Hp * Wp <= 256):
        nb *= 2
    steps = N // nb
    m_rows = nb * Hp * Wp

    # VMEM budget from the actual blocks (double-buffered in/out) + scratch,
    # capped at 48 MiB so the tiling is safe on v7x's 64 MiB VMEM (v5e/v6e
    # have 128 MiB and could go larger once H-tiling is added).
    need = 4 * (2 * nb * Cin * 4 * Hp * Wp
                + w1.size + w2.size + b1.size + b2.size
                + nb * (Hp + 2) * (Wp + 2) * (Cin + C)
                + m_rows * 9 * (Cin + C)
                + 2 * nb * C * Hp * Wp)
    vmem_limit = int(min(max(2 * need, 32 * 1024 * 1024), 48 * 1024 * 1024))

    out_flat = pl.pallas_call(
        _down_fused_kernel,
        out_shape=jax.ShapeDtypeStruct((N, C, Hp * Wp), x_nchw.dtype),
        grid=(steps,),
        in_specs=[
            pl.BlockSpec((nb, Cin, 4 * Hp * Wp), lambda n: (n, 0, 0)),
            pl.BlockSpec((9 * Cin, C), lambda n: (0, 0)),
            pl.BlockSpec((1, C), lambda n: (0, 0)),
            pl.BlockSpec((9 * C, C), lambda n: (0, 0)),
            pl.BlockSpec((1, C), lambda n: (0, 0)),
        ],
        out_specs=pl.BlockSpec((nb, C, Hp * Wp), lambda n: (n, 0, 0)),
        scratch_shapes=[
            pltpu.VMEM((nb, Hp + 2, Wp + 2, Cin), jnp.float32),
            pltpu.VMEM((nb, Hp + 2, Wp + 2, C), jnp.float32),
            pltpu.VMEM((m_rows, 9 * Cin), jnp.float32),
            pltpu.VMEM((m_rows, 9 * C), jnp.float32),
        ],
        compiler_params=pltpu.CompilerParams(
            dimension_semantics=("parallel",),
            vmem_limit_bytes=vmem_limit,
        ),
    )(x3, w1, b1, w2, b2)

    # Already NCHW; splitting Hp*Wp -> (Hp, Wp) is free metadata.
    return out_flat.reshape(N, C, Hp, Wp)


# ----------------------------- reference (plain JAX) ----------------------- #

def down_reference(x_nchw, params):
    x = jnp.transpose(x_nchw, (0, 2, 3, 1))
    x = lax.reduce_window(x, -jnp.inf, lax.max,
                          window_dimensions=(1, 2, 2, 1),
                          window_strides=(1, 2, 2, 1), padding="VALID")
    dn = ("NHWC", "HWIO", "NHWC")
    x = lax.conv_general_dilated(x, params["w1"], (1, 1), "SAME",
                                 dimension_numbers=dn)
    x = jax.nn.relu(x + params["b1"][None, None, None, :])
    x = lax.conv_general_dilated(x, params["w2"], (1, 1), "SAME",
                                 dimension_numbers=dn)
    x = jax.nn.relu(x + params["b2"][None, None, None, :])
    return jnp.transpose(x, (0, 3, 1, 2))


# ----------------------------- main ----------------------------------------- #

if __name__ == "__main__":
    key = jax.random.PRNGKey(0)
    k_x, k_w1, k_b1, k_w2, k_b2 = jax.random.split(key, 5)

    # Down(in_channels=4, out_channels=8), input x: (N=2, C=4, H=16, W=16)
    N, Cin, Cout, H, W = 2, 4, 8, 16, 16

    x = jax.random.normal(k_x, (N, Cin, H, W), jnp.float32)

    # Deterministic param init (PyTorch Conv2d-style bounds, stored as HWIO).
    def init_conv(kw, kb, cin, cout):
        bound = 1.0 / jnp.sqrt(cin * 3 * 3)
        w = jax.random.uniform(kw, (3, 3, cin, cout), jnp.float32, -bound, bound)
        b = jax.random.uniform(kb, (cout,), jnp.float32, -bound, bound)
        return w, b

    w1, b1 = init_conv(k_w1, k_b1, Cin, Cout)
    w2, b2 = init_conv(k_w2, k_b2, Cout, Cout)
    params = {"w1": w1, "b1": b1, "w2": w2, "b2": b2}

    out = jax.block_until_ready(down_forward(x, params))
    ref = down_reference(x, params)

    assert out.shape == (N, Cout, H // 2, W // 2), out.shape
    assert jnp.allclose(out, ref, atol=1e-5, rtol=1e-5), "mismatch vs reference"

    print("KERNEL_OK")
</pallas_src>

<mosaic_0001>
module attributes {stable_mosaic.version = 11 : i64} {
  func.func @_down_fused_kernel(%arg0: i32, %arg1: memref<2x4x256xf32, #tpu.memory_space<vmem>>, %arg2: memref<36x8xf32, #tpu.memory_space<vmem>>, %arg3: memref<1x8xf32, #tpu.memory_space<vmem>>, %arg4: memref<72x8xf32, #tpu.memory_space<vmem>>, %arg5: memref<1x8xf32, #tpu.memory_space<vmem>>, %arg6: memref<2x8x64xf32, #tpu.memory_space<vmem>>, %arg7: memref<2x10x10x4xf32, #tpu.memory_space<vmem>>, %arg8: memref<2x10x10x8xf32, #tpu.memory_space<vmem>>, %arg9: memref<128x36xf32, #tpu.memory_space<vmem>>, %arg10: memref<128x72xf32, #tpu.memory_space<vmem>>) attributes {dimension_semantics = [#tpu.dimension_semantics<parallel>], iteration_bounds = array<i64: 1>, scalar_prefetch = 0 : i64, scratch_operands = 4 : i64, tpu.core_type = #tpu.core_type<tc>, window_params = [{transform_indices = @transform_0, window_bounds = array<i64: 2, 4, 256>}, {pipeline_mode = #tpu.pipeline_mode<synchronous>, transform_indices = @transform_1, window_bounds = array<i64: 36, 8>}, {pipeline_mode = #tpu.pipeline_mode<synchronous>, transform_indices = @transform_2, window_bounds = array<i64: 1, 8>}, {pipeline_mode = #tpu.pipeline_mode<synchronous>, transform_indices = @transform_3, window_bounds = array<i64: 72, 8>}, {pipeline_mode = #tpu.pipeline_mode<synchronous>, transform_indices = @transform_4, window_bounds = array<i64: 1, 8>}, {transform_indices = @transform_5, window_bounds = array<i64: 2, 8, 64>}]} {
    %cst = arith.constant 0.000000e+00 : f32
    %0 = vector.broadcast %cst : f32 to vector<2x1x10x4xf32>
    %c0 = arith.constant 0 : index
    %c0_0 = arith.constant 0 : index
    %c0_1 = arith.constant 0 : index
    %c0_2 = arith.constant 0 : index
    %1 = vector.load %arg7[%c0, %c0_0, %c0_1, %c0_2] : memref<2x10x10x4xf32, #tpu.memory_space<vmem>>, vector<2x1x10x4xf32>
    tpu.vector_store %arg7[%c0, %c0_0, %c0_1, %c0_2], %0 {strides = array<i32>} : memref<2x10x10x4xf32, #tpu.memory_space<vmem>>, vector<2x1x10x4xf32>,
    %cst_3 = arith.constant 0.000000e+00 : f32
    %2 = vector.broadcast %cst_3 : f32 to vector<2x1x10x4xf32>
    %c0_4 = arith.constant 0 : index
    %c9 = arith.constant 9 : index
    %c0_5 = arith.constant 0 : index
    %c0_6 = arith.constant 0 : index
    %3 = vector.load %arg7[%c0_4, %c9, %c0_5, %c0_6] : memref<2x10x10x4xf32, #tpu.memory_space<vmem>>, vector<2x1x10x4xf32>
    tpu.vector_store %arg7[%c0_4, %c9, %c0_5, %c0_6], %2 {strides = array<i32>} : memref<2x10x10x4xf32, #tpu.memory_space<vmem>>, vector<2x1x10x4xf32>,
    %cst_7 = arith.constant 0.000000e+00 : f32
    %4 = vector.broadcast %cst_7 : f32 to vector<2x10x1x4xf32>
    %c0_8 = arith.constant 0 : index
    %c0_9 = arith.constant 0 : index
    %c0_10 = arith.constant 0 : index
    %c0_11 = arith.constant 0 : index
    %5 = vector.load %arg7[%c0_8, %c0_9, %c0_10, %c0_11] : memref<2x10x10x4xf32, #tpu.memory_space<vmem>>, vector<2x10x1x4xf32>
    tpu.vector_store %arg7[%c0_8, %c0_9, %c0_10, %c0_11], %4 {strides = array<i32>} : memref<2x10x10x4xf32, #tpu.memory_space<vmem>>, vector<2x10x1x4xf32>,
    %cst_12 = arith.constant 0.000000e+00 : f32
    %6 = vector.broadcast %cst_12 : f32 to vector<2x10x1x4xf32>
    %c0_13 = arith.constant 0 : index
    %c0_14 = arith.constant 0 : index
    %c9_15 = arith.constant 9 : index
    %c0_16 = arith.constant 0 : index
    %7 = vector.load %arg7[%c0_13, %c0_14, %c9_15, %c0_16] : memref<2x10x10x4xf32, #tpu.memory_space<vmem>>, vector<2x10x1x4xf32>
    tpu.vector_store %arg7[%c0_13, %c0_14, %c9_15, %c0_16], %6 {strides = array<i32>} : memref<2x10x10x4xf32, #tpu.memory_space<vmem>>, vector<2x10x1x4xf32>,
    %cst_17 = arith.constant 0.000000e+00 : f32
    %8 = vector.broadcast %cst_17 : f32 to vector<2x1x10x8xf32>
    %c0_18 = arith.constant 0 : index
    %c0_19 = arith.constant 0 : index
    %c0_20 = arith.constant 0 : index
    %c0_21 = arith.constant 0 : index
    %9 = vector.load %arg8[%c0_18, %c0_19, %c0_20, %c0_21] : memref<2x10x10x8xf32, #tpu.memory_space<vmem>>, vector<2x1x10x8xf32>
    tpu.vector_store %arg8[%c0_18, %c0_19, %c0_20, %c0_21], %8 {strides = array<i32>} : memref<2x10x10x8xf32, #tpu.memory_space<vmem>>, vector<2x1x10x8xf32>,
    %cst_22 = arith.constant 0.000000e+00 : f32
    %10 = vector.broadcast %cst_22 : f32 to vector<2x1x10x8xf32>
    %c0_23 = arith.constant 0 : index
    %c9_24 = arith.constant 9 : index
    %c0_25 = arith.constant 0 : index
    %c0_26 = arith.constant 0 : index
    %11 = vector.load %arg8[%c0_23, %c9_24, %c0_25, %c0_26] : memref<2x10x10x8xf32, #tpu.memory_space<vmem>>, vector<2x1x10x8xf32>
    tpu.vector_store %arg8[%c0_23, %c9_24, %c0_25, %c0_26], %10 {strides = array<i32>} : memref<2x10x10x8xf32, #tpu.memory_space<vmem>>, vector<2x1x10x8xf32>,
    %cst_27 = arith.constant 0.000000e+00 : f32
    %12 = vector.broadcast %cst_27 : f32 to vector<2x10x1x8xf32>
    %c0_28 = arith.constant 0 : index
    %c0_29 = arith.constant 0 : index
    %c0_30 = arith.constant 0 : index
    %c0_31 = arith.constant 0 : index
    %13 = vector.load %arg8[%c0_28, %c0_29, %c0_30, %c0_31] : memref<2x10x10x8xf32, #tpu.memory_space<vmem>>, vector<2x10x1x8xf32>
    tpu.vector_store %arg8[%c0_28, %c0_29, %c0_30, %c0_31], %12 {strides = array<i32>} : memref<2x10x10x8xf32, #tpu.memory_space<vmem>>, vector<2x10x1x8xf32>,
    %cst_32 = arith.constant 0.000000e+00 : f32
    %14 = vector.broadcast %cst_32 : f32 to vector<2x10x1x8xf32>
    %c0_33 = arith.constant 0 : index
    %c0_34 = arith.constant 0 : index
    %c9_35 = arith.constant 9 : index
    %c0_36 = arith.constant 0 : index
    %15 = vector.load %arg8[%c0_33, %c0_34, %c9_35, %c0_36] : memref<2x10x10x8xf32, #tpu.memory_space<vmem>>, vector<2x10x1x8xf32>
    tpu.vector_store %arg8[%c0_33, %c0_34, %c9_35, %c0_36], %14 {strides = array<i32>} : memref<2x10x10x8xf32, #tpu.memory_space<vmem>>, vector<2x10x1x8xf32>,
    %c0_37 = arith.constant 0 : index
    %c0_38 = arith.constant 0 : index
    %c0_39 = arith.constant 0 : index
    %16 = vector.load %arg1[%c0_37, %c0_38, %c0_39] : memref<2x4x256xf32, #tpu.memory_space<vmem>>, vector<1x4x256xf32>
    %17 = vector.shape_cast %16 : vector<1x4x256xf32> to vector<4x256xf32>
    %18 = tpu.transpose %17, [1, 0] : vector<4x256xf32> -> vector<256x4xf32>
    %19 = vector.shape_cast %18 : vector<256x4xf32> to vector<8x2x16x4xf32>
    %20 = vector.extract_strided_slice %19 {offsets = [0, 0, 0, 0], sizes = [8, 1, 16, 4], strides = [1, 1, 1, 1]} : vector<8x2x16x4xf32> to vector<8x1x16x4xf32>
    %21 = vector.shape_cast %20 : vector<8x1x16x4xf32> to vector<8x16x4xf32>
    %22 = vector.extract_strided_slice %19 {offsets = [0, 1, 0, 0], sizes = [8, 1, 16, 4], strides = [1, 1, 1, 1]} : vector<8x2x16x4xf32> to vector<8x1x16x4xf32>
    %23 = vector.shape_cast %22 : vector<8x1x16x4xf32> to vector<8x16x4xf32>
    %24 = arith.maximumf %21, %23 : vector<8x16x4xf32>
    %25 = vector.shape_cast %24 : vector<8x16x4xf32> to vector<8x8x2x4xf32>
    %26 = vector.extract_strided_slice %25 {offsets = [0, 0, 0, 0], sizes = [8, 8, 1, 4], strides = [1, 1, 1, 1]} : vector<8x8x2x4xf32> to vector<8x8x1x4xf32>
    %27 = vector.shape_cast %26 : vector<8x8x1x4xf32> to vector<8x8x4xf32>
    %28 = vector.extract_strided_slice %25 {offsets = [0, 0, 1, 0], sizes = [8, 8, 1, 4], strides = [1, 1, 1, 1]} : vector<8x8x2x4xf32> to vector<8x8x1x4xf32>
    %29 = vector.shape_cast %28 : vector<8x8x1x4xf32> to vector<8x8x4xf32>
    %30 = arith.maximumf %27, %29 : vector<8x8x4xf32>
    %c0_40 = arith.constant 0 : index
    %c1 = arith.constant 1 : index
    %c1_41 = arith.constant 1 : index
    %c0_42 = arith.constant 0 : index
    %31 = vector.load %arg7[%c0_40, %c1, %c1_41, %c0_42] : memref<2x10x10x4xf32, #tpu.memory_space<vmem>>, vector<1x8x8x4xf32>
    %32 = vector.shape_cast %31 : vector<1x8x8x4xf32> to vector<8x8x4xf32>
    %33 = vector.shape_cast %30 : vector<8x8x4xf32> to vector<1x8x8x4xf32>
    tpu.vector_store %arg7[%c0_40, %c1, %c1_41, %c0_42], %33 {strides = array<i32>} : memref<2x10x10x4xf32, #tpu.memory_space<vmem>>, vector<1x8x8x4xf32>,
    %c1_43 = arith.constant 1 : index
    %c0_44 = arith.constant 0 : index
    %c0_45 = arith.constant 0 : index
    %34 = vector.load %arg1[%c1_43, %c0_44, %c0_45] : memref<2x4x256xf32, #tpu.memory_space<vmem>>, vector<1x4x256xf32>
    %35 = vector.shape_cast %34 : vector<1x4x256xf32> to vector<4x256xf32>
    %36 = tpu.transpose %35, [1, 0] : vector<4x256xf32> -> vector<256x4xf32>
    %37 = vector.shape_cast %36 : vector<256x4xf32> to vector<8x2x16x4xf32>
    %38 = vector.extract_strided_slice %37 {offsets = [0, 0, 0, 0], sizes = [8, 1, 16, 4], strides = [1, 1, 1, 1]} : vector<8x2x16x4xf32> to vector<8x1x16x4xf32>
    %39 = vector.shape_cast %38 : vector<8x1x16x4xf32> to vector<8x16x4xf32>
    %40 = vector.extract_strided_slice %37 {offsets = [0, 1, 0, 0], sizes = [8, 1, 16, 4], strides = [1, 1, 1, 1]} : vector<8x2x16x4xf32> to vector<8x1x16x4xf32>
    %41 = vector.shape_cast %40 : vector<8x1x16x4xf32> to vector<8x16x4xf32>
    %42 = arith.maximumf %39, %41 : vector<8x16x4xf32>
    %43 = vector.shape_cast %42 : vector<8x16x4xf32> to vector<8x8x2x4xf32>
    %44 = vector.extract_strided_slice %43 {offsets = [0, 0, 0, 0], sizes = [8, 8, 1, 4], strides = [1, 1, 1, 1]} : vector<8x8x2x4xf32> to vector<8x8x1x4xf32>
    %45 = vector.shape_cast %44 : vector<8x8x1x4xf32> to vector<8x8x4xf32>
    %46 = vector.extract_strided_slice %43 {offsets = [0, 0, 1, 0], sizes = [8, 8, 1, 4], strides = [1, 1, 1, 1]} : vector<8x8x2x4xf32> to vector<8x8x1x4xf32>
    %47 = vector.shape_cast %46 : vector<8x8x1x4xf32> to vector<8x8x4xf32>
    %48 = arith.maximumf %45, %47 : vector<8x8x4xf32>
    %c1_46 = arith.constant 1 : index
    %c1_47 = arith.constant 1 : index
    %c1_48 = arith.constant 1 : index
    %c0_49 = arith.constant 0 : index
    %49 = vector.load %arg7[%c1_46, %c1_47, %c1_48, %c0_49] : memref<2x10x10x4xf32, #tpu.memory_space<vmem>>, vector<1x8x8x4xf32>
    %50 = vector.shape_cast %49 : vector<1x8x8x4xf32> to vector<8x8x4xf32>
    %51 = vector.shape_cast %48 : vector<8x8x4xf32> to vector<1x8x8x4xf32>
    tpu.vector_store %arg7[%c1_46, %c1_47, %c1_48, %c0_49], %51 {strides = array<i32>} : memref<2x10x10x4xf32, #tpu.memory_space<vmem>>, vector<1x8x8x4xf32>,
    %c0_50 = arith.constant 0 : index
    %c0_51 = arith.constant 0 : index
    %c0_52 = arith.constant 0 : index
    %c0_53 = arith.constant 0 : index
    %52 = vector.load %arg7[%c0_50, %c0_51, %c0_52, %c0_53] : memref<2x10x10x4xf32, #tpu.memory_space<vmem>>, vector<2x8x8x4xf32>
    %53 = vector.shape_cast %52 : vector<2x8x8x4xf32> to vector<128x4xf32>
    %c0_54 = arith.constant 0 : index
    %c0_55 = arith.constant 0 : index
    %54 = vector.load %arg9[%c0_54, %c0_55] : memref<128x36xf32, #tpu.memory_space<vmem>>, vector<128x4xf32>
    tpu.vector_store %arg9[%c0_54, %c0_55], %53 {strides = array<i32>} : memref<128x36xf32, #tpu.memory_space<vmem>>, vector<128x4xf32>,
    %c0_56 = arith.constant 0 : index
    %c0_57 = arith.constant 0 : index
    %c1_58 = arith.constant 1 : index
    %c0_59 = arith.constant 0 : index
    %55 = vector.load %arg7[%c0_56, %c0_57, %c1_58, %c0_59] : memref<2x10x10x4xf32, #tpu.memory_space<vmem>>, vector<2x8x8x4xf32>
    %56 = vector.shape_cast %55 : vector<2x8x8x4xf32> to vector<128x4xf32>
    %c0_60 = arith.constant 0 : index
    %c4 = arith.constant 4 : index
    %57 = vector.load %arg9[%c0_60, %c4] : memref<128x36xf32, #tpu.memory_space<vmem>>, vector<128x4xf32>
    tpu.vector_store %arg9[%c0_60, %c4], %56 {strides = array<i32>} : memref<128x36xf32, #tpu.memory_space<vmem>>, vector<128x4xf32>,
    %c0_61 = arith.constant 0 : index
    %c0_62 = arith.constant 0 : index
    %c2 = arith.constant 2 : index
    %c0_63 = arith.constant 0 : index
    %58 = vector.load %arg7[%c0_61, %c0_62, %c2, %c0_63] : memref<2x10x10x4xf32, #tpu.memory_space<vmem>>, vector<2x8x8x4xf32>
    %59 = vector.shape_cast %58 : vector<2x8x8x4xf32> to vector<128x4xf32>
    %c0_64 = arith.constant 0 : index
    %c8 = arith.constant 8 : index
    %60 = vector.load %arg9[%c0_64, %c8] : memref<128x36xf32, #tpu.memory_space<vmem>>, vector<128x4xf32>
    tpu.vector_store %arg9[%c0_64, %c8], %59 {strides = array<i32>} : memref<128x36xf32, #tpu.memory_space<vmem>>, vector<128x4xf32>,
    %c0_65 = arith.constant 0 : index
    %c1_66 = arith.constant 1 : index
    %c0_67 = arith.constant 0 : index
    %c0_68 = arith.constant 0 : index
    %61 = vector.load %arg7[%c0_65, %c1_66, %c0_67, %c0_68] : memref<2x10x10x4xf32, #tpu.memory_space<vmem>>, vector<2x8x8x4xf32>
    %62 = vector.shape_cast %61 : vector<2x8x8x4xf32> to vector<128x4xf32>
    %c0_69 = arith.constant 0 : index
    %c12 = arith.constant 12 : index
    %63 = vector.load %arg9[%c0_69, %c12] : memref<128x36xf32, #tpu.memory_space<vmem>>, vector<128x4xf32>
    tpu.vector_store %arg9[%c0_69, %c12], %62 {strides = array<i32>} : memref<128x36xf32, #tpu.memory_space<vmem>>, vector<128x4xf32>,
    %c0_70 = arith.constant 0 : index
    %c1_71 = arith.constant 1 : index
    %c1_72 = arith.constant 1 : index
    %c0_73 = arith.constant 0 : index
    %64 = vector.load %arg7[%c0_70, %c1_71, %c1_72, %c0_73] : memref<2x10x10x4xf32, #tpu.memory_space<vmem>>, vector<2x8x8x4xf32>
    %65 = vector.shape_cast %64 : vector<2x8x8x4xf32> to vector<128x4xf32>
    %c0_74 = arith.constant 0 : index
    %c16 = arith.constant 16 : index
    %66 = vector.load %arg9[%c0_74, %c16] : memref<128x36xf32, #tpu.memory_space<vmem>>, vector<128x4xf32>
    tpu.vector_store %arg9[%c0_74, %c16], %65 {strides = array<i32>} : memref<128x36xf32, #tpu.memory_space<vmem>>, vector<128x4xf32>,
    %c0_75 = arith.constant 0 : index
    %c1_76 = arith.constant 1 : index
    %c2_77 = arith.constant 2 : index
    %c0_78 = arith.constant 0 : index
    %67 = vector.load %arg7[%c0_75, %c1_76, %c2_77, %c0_78] : memref<2x10x10x4xf32, #tpu.memory_space<vmem>>, vector<2x8x8x4xf32>
    %68 = vector.shape_cast %67 : vector<2x8x8x4xf32> to vector<128x4xf32>
    %c0_79 = arith.constant 0 : index
    %c20 = arith.constant 20 : index
    %69 = vector.load %arg9[%c0_79, %c20] : memref<128x36xf32, #tpu.memory_space<vmem>>, vector<128x4xf32>
    tpu.vector_store %arg9[%c0_79, %c20], %68 {strides = array<i32>} : memref<128x36xf32, #tpu.memory_space<vmem>>, vector<128x4xf32>,
    %c0_80 = arith.constant 0 : index
    %c2_81 = arith.constant 2 : index
    %c0_82 = arith.constant 0 : index
    %c0_83 = arith.constant 0 : index
    %70 = vector.load %arg7[%c0_80, %c2_81, %c0_82, %c0_83] : memref<2x10x10x4xf32, #tpu.memory_space<vmem>>, vector<2x8x8x4xf32>
    %71 = vector.shape_cast %70 : vector<2x8x8x4xf32> to vector<128x4xf32>
    %c0_84 = arith.constant 0 : index
    %c24 = arith.constant 24 : index
    %72 = vector.load %arg9[%c0_84, %c24] : memref<128x36xf32, #tpu.memory_space<vmem>>, vector<128x4xf32>
    tpu.vector_store %arg9[%c0_84, %c24], %71 {strides = array<i32>} : memref<128x36xf32, #tpu.memory_space<vmem>>, vector<128x4xf32>,
    %c0_85 = arith.constant 0 : index
    %c2_86 = arith.constant 2 : index
    %c1_87 = arith.constant 1 : index
    %c0_88 = arith.constant 0 : index
    %73 = vector.load %arg7[%c0_85, %c2_86, %c1_87, %c0_88] : memref<2x10x10x4xf32, #tpu.memory_space<vmem>>, vector<2x8x8x4xf32>
    %74 = vector.shape_cast %73 : vector<2x8x8x4xf32> to vector<128x4xf32>
    %c0_89 = arith.constant 0 : index
    %c28 = arith.constant 28 : index
    %75 = vector.load %arg9[%c0_89, %c28] : memref<128x36xf32, #tpu.memory_space<vmem>>, vector<128x4xf32>
    tpu.vector_store %arg9[%c0_89, %c28], %74 {strides = array<i32>} : memref<128x36xf32, #tpu.memory_space<vmem>>, vector<128x4xf32>,
    %c0_90 = arith.constant 0 : index
    %c2_91 = arith.constant 2 : index
    %c2_92 = arith.constant 2 : index
    %c0_93 = arith.constant 0 : index
    %76 = vector.load %arg7[%c0_90, %c2_91, %c2_92, %c0_93] : memref<2x10x10x4xf32, #tpu.memory_space<vmem>>, vector<2x8x8x4xf32>
    %77 = vector.shape_cast %76 : vector<2x8x8x4xf32> to vector<128x4xf32>
    %c0_94 = arith.constant 0 : index
    %c32 = arith.constant 32 : index
    %78 = vector.load %arg9[%c0_94, %c32] : memref<128x36xf32, #tpu.memory_space<vmem>>, vector<128x4xf32>
    tpu.vector_store %arg9[%c0_94, %c32], %77 {strides = array<i32>} : memref<128x36xf32, #tpu.memory_space<vmem>>, vector<128x4xf32>,
    %c0_95 = arith.constant 0 : index
    %c0_96 = arith.constant 0 : index
    %79 = vector.load %arg9[%c0_95, %c0_96] : memref<128x36xf32, #tpu.memory_space<vmem>>, vector<128x36xf32>
    %c0_97 = arith.constant 0 : index
    %c0_98 = arith.constant 0 : index
    %80 = vector.load %arg2[%c0_97, %c0_98] : memref<36x8xf32, #tpu.memory_space<vmem>>, vector<36x8xf32>
    %cst_99 = arith.constant dense<0.000000e+00> : vector<128x8xf32>
    %81 = tpu.matmul %79, %80, %cst_99 {dimension_numbers = #tpu.dot_dimension_numbers<[1], [0], [0], [1], [0, 0, 1, 1], [], []>} : vector<128x36xf32>, vector<36x8xf32>, vector<128x8xf32> -> vector<128x8xf32>
    %c0_100 = arith.constant 0 : index
    %c0_101 = arith.constant 0 : index
    %82 = vector.load %arg3[%c0_100, %c0_101] : memref<1x8xf32, #tpu.memory_space<vmem>>, vector<1x8xf32>
    %83 = vector.broadcast %82 : vector<1x8xf32> to vector<128x8xf32>
    %84 = arith.addf %81, %83 : vector<128x8xf32>
    %cst_102 = arith.constant 0.000000e+00 : f32
    %85 = vector.broadcast %cst_102 : f32 to vector<128x8xf32>
    %86 = arith.maximumf %84, %85 : vector<128x8xf32>
    %87 = vector.shape_cast %86 : vector<128x8xf32> to vector<2x8x8x8xf32>
    %c0_103 = arith.constant 0 : index
    %c1_104 = arith.constant 1 : index
    %c1_105 = arith.constant 1 : index
    %c0_106 = arith.constant 0 : index
    %88 = vector.load %arg8[%c0_103, %c1_104, %c1_105, %c0_106] : memref<2x10x10x8xf32, #tpu.memory_space<vmem>>, vector<2x8x8x8xf32>
    tpu.vector_store %arg8[%c0_103, %c1_104, %c1_105, %c0_106], %87 {strides = array<i32>} : memref<2x10x10x8xf32, #tpu.memory_space<vmem>>, vector<2x8x8x8xf32>,
    %c0_107 = arith.constant 0 : index
    %c0_108 = arith.constant 0 : index
    %c0_109 = arith.constant 0 : index
    %c0_110 = arith.constant 0 : index
    %89 = vector.load %arg8[%c0_107, %c0_108, %c0_109, %c0_110] : memref<2x10x10x8xf32, #tpu.memory_space<vmem>>, vector<2x8x8x8xf32>
    %90 = vector.shape_cast %89 : vector<2x8x8x8xf32> to vector<128x8xf32>
    %c0_111 = arith.constant 0 : index
    %c0_112 = arith.constant 0 : index
    %91 = vector.load %arg10[%c0_111, %c0_112] : memref<128x72xf32, #tpu.memory_space<vmem>>, vector<128x8xf32>
    tpu.vector_store %arg10[%c0_111, %c0_112], %90 {strides = array<i32>} : memref<128x72xf32, #tpu.memory_space<vmem>>, vector<128x8xf32>,
    %c0_113 = arith.constant 0 : index
    %c0_114 = arith.constant 0 : index
    %c1_115 = arith.constant 1 : index
    %c0_116 = arith.constant 0 : index
    %92 = vector.load %arg8[%c0_113, %c0_114, %c1_115, %c0_116] : memref<2x10x10x8xf32, #tpu.memory_space<vmem>>, vector<2x8x8x8xf32>
    %93 = vector.shape_cast %92 : vector<2x8x8x8xf32> to vector<128x8xf32>
    %c0_117 = arith.constant 0 : index
    %c8_118 = arith.constant 8 : index
    %94 = vector.load %arg10[%c0_117, %c8_118] : memref<128x72xf32, #tpu.memory_space<vmem>>, vector<128x8xf32>
    tpu.vector_store %arg10[%c0_117, %c8_118], %93 {strides = array<i32>} : memref<128x72xf32, #tpu.memory_space<vmem>>, vector<128x8xf32>,
    %c0_119 = arith.constant 0 : index
    %c0_120 = arith.constant 0 : index
    %c2_121 = arith.constant 2 : index
    %c0_122 = arith.constant 0 : index
    %95 = vector.load %arg8[%c0_119, %c0_120, %c2_121, %c0_122] : memref<2x10x10x8xf32, #tpu.memory_space<vmem>>, vector<2x8x8x8xf32>
    %96 = vector.shape_cast %95 : vector<2x8x8x8xf32> to vector<128x8xf32>
    %c0_123 = arith.constant 0 : index
    %c16_124 = arith.constant 16 : index
    %97 = vector.load %arg10[%c0_123, %c16_124] : memref<128x72xf32, #tpu.memory_space<vmem>>, vector<128x8xf32>
    tpu.vector_store %arg10[%c0_123, %c16_124], %96 {strides = array<i32>} : memref<128x72xf32, #tpu.memory_space<vmem>>, vector<128x8xf32>,
    %c0_125 = arith.constant 0 : index
    %c1_126 = arith.constant 1 : index
    %c0_127 = arith.constant 0 : index
    %c0_128 = arith.constant 0 : index
    %98 = vector.load %arg8[%c0_125, %c1_126, %c0_127, %c0_128] : memref<2x10x10x8xf32, #tpu.memory_space<vmem>>, vector<2x8x8x8xf32>
    %99 = vector.shape_cast %98 : vector<2x8x8x8xf32> to vector<128x8xf32>
    %c0_129 = arith.constant 0 : index
    %c24_130 = arith.constant 24 : index
    %100 = vector.load %arg10[%c0_129, %c24_130] : memref<128x72xf32, #tpu.memory_space<vmem>>, vector<128x8xf32>
    tpu.vector_store %arg10[%c0_129, %c24_130], %99 {strides = array<i32>} : memref<128x72xf32, #tpu.memory_space<vmem>>, vector<128x8xf32>,
    %c0_131 = arith.constant 0 : index
    %c1_132 = arith.constant 1 : index
    %c1_133 = arith.constant 1 : index
    %c0_134 = arith.constant 0 : index
    %101 = vector.load %arg8[%c0_131, %c1_132, %c1_133, %c0_134] : memref<2x10x10x8xf32, #tpu.memory_space<vmem>>, vector<2x8x8x8xf32>
    %102 = vector.shape_cast %101 : vector<2x8x8x8xf32> to vector<128x8xf32>
    %c0_135 = arith.constant 0 : index
    %c32_136 = arith.constant 32 : index
    %103 = vector.load %arg10[%c0_135, %c32_136] : memref<128x72xf32, #tpu.memory_space<vmem>>, vector<128x8xf32>
    tpu.vector_store %arg10[%c0_135, %c32_136], %102 {strides = array<i32>} : memref<128x72xf32, #tpu.memory_space<vmem>>, vector<128x8xf32>,
    %c0_137 = arith.constant 0 : index
    %c1_138 = arith.constant 1 : index
    %c2_139 = arith.constant 2 : index
    %c0_140 = arith.constant 0 : index
    %104 = vector.load %arg8[%c0_137, %c1_138, %c2_139, %c0_140] : memref<2x10x10x8xf32, #tpu.memory_space<vmem>>, vector<2x8x8x8xf32>
    %105 = vector.shape_cast %104 : vector<2x8x8x8xf32> to vector<128x8xf32>
    %c0_141 = arith.constant 0 : index
    %c40 = arith.constant 40 : index
    %106 = vector.load %arg10[%c0_141, %c40] : memref<128x72xf32, #tpu.memory_space<vmem>>, vector<128x8xf32>
    tpu.vector_store %arg10[%c0_141, %c40], %105 {strides = array<i32>} : memref<128x72xf32, #tpu.memory_space<vmem>>, vector<128x8xf32>,
    %c0_142 = arith.constant 0 : index
    %c2_143 = arith.constant 2 : index
    %c0_144 = arith.constant 0 : index
    %c0_145 = arith.constant 0 : index
    %107 = vector.load %arg8[%c0_142, %c2_143, %c0_144, %c0_145] : memref<2x10x10x8xf32, #tpu.memory_space<vmem>>, vector<2x8x8x8xf32>
    %108 = vector.shape_cast %107 : vector<2x8x8x8xf32> to vector<128x8xf32>
    %c0_146 = arith.constant 0 : index
    %c48 = arith.constant 48 : index
    %109 = vector.load %arg10[%c0_146, %c48] : memref<128x72xf32, #tpu.memory_space<vmem>>, vector<128x8xf32>
    tpu.vector_store %arg10[%c0_146, %c48], %108 {strides = array<i32>} : memref<128x72xf32, #tpu.memory_space<vmem>>, vector<128x8xf32>,
    %c0_147 = arith.constant 0 : index
    %c2_148 = arith.constant 2 : index
    %c1_149 = arith.constant 1 : index
    %c0_150 = arith.constant 0 : index
    %110 = vector.load %arg8[%c0_147, %c2_148, %c1_149, %c0_150] : memref<2x10x10x8xf32, #tpu.memory_space<vmem>>, vector<2x8x8x8xf32>
    %111 = vector.shape_cast %110 : vector<2x8x8x8xf32> to vector<128x8xf32>
    %c0_151 = arith.constant 0 : index
    %c56 = arith.constant 56 : index
    %112 = vector.load %arg10[%c0_151, %c56] : memref<128x72xf32, #tpu.memory_space<vmem>>, vector<128x8xf32>
    tpu.vector_store %arg10[%c0_151, %c56], %111 {strides = array<i32>} : memref<128x72xf32, #tpu.memory_space<vmem>>, vector<128x8xf32>,
    %c0_152 = arith.constant 0 : index
    %c2_153 = arith.constant 2 : index
    %c2_154 = arith.constant 2 : index
    %c0_155 = arith.constant 0 : index
    %113 = vector.load %arg8[%c0_152, %c2_153, %c2_154, %c0_155] : memref<2x10x10x8xf32, #tpu.memory_space<vmem>>, vector<2x8x8x8xf32>
    %114 = vector.shape_cast %113 : vector<2x8x8x8xf32> to vector<128x8xf32>
    %c0_156 = arith.constant 0 : index
    %c64 = arith.constant 64 : index
    %115 = vector.load %arg10[%c0_156, %c64] : memref<128x72xf32, #tpu.memory_space<vmem>>, vector<128x8xf32>
    tpu.vector_store %arg10[%c0_156, %c64], %114 {strides = array<i32>} : memref<128x72xf32, #tpu.memory_space<vmem>>, vector<128x8xf32>,
    %c0_157 = arith.constant 0 : index
    %c0_158 = arith.constant 0 : index
    %116 = vector.load %arg10[%c0_157, %c0_158] : memref<128x72xf32, #tpu.memory_space<vmem>>, vector<128x72xf32>
    %c0_159 = arith.constant 0 : index
    %c0_160 = arith.constant 0 : index
    %117 = vector.load %arg4[%c0_159, %c0_160] : memref<72x8xf32, #tpu.memory_space<vmem>>, vector<72x8xf32>
    %cst_161 = arith.constant dense<0.000000e+00> : vector<128x8xf32>
    %118 = tpu.matmul %116, %117, %cst_161 {dimension_numbers = #tpu.dot_dimension_numbers<[1], [0], [0], [1], [0, 0, 1, 1], [], []>} : vector<128x72xf32>, vector<72x8xf32>, vector<128x8xf32> -> vector<128x8xf32>
    %c0_162 = arith.constant 0 : index
    %c0_163 = arith.constant 0 : index
    %119 = vector.load %arg5[%c0_162, %c0_163] : memref<1x8xf32, #tpu.memory_space<vmem>>, vector<1x8xf32>
    %120 = vector.broadcast %119 : vector<1x8xf32> to vector<128x8xf32>
    %121 = arith.addf %118, %120 : vector<128x8xf32>
    %cst_164 = arith.constant 0.000000e+00 : f32
    %122 = vector.broadcast %cst_164 : f32 to vector<128x8xf32>
    %123 = arith.maximumf %121, %122 : vector<128x8xf32>
    %124 = vector.extract_strided_slice %123 {offsets = [0, 0], sizes = [64, 8], strides = [1, 1]} : vector<128x8xf32> to vector<64x8xf32>
    %125 = tpu.transpose %124, [1, 0] : vector<64x8xf32> -> vector<8x64xf32>
    %c0_165 = arith.constant 0 : index
    %c0_166 = arith.constant 0 : index
    %c0_167 = arith.constant 0 : index
    %126 = vector.load %arg6[%c0_165, %c0_166, %c0_167] : memref<2x8x64xf32, #tpu.memory_space<vmem>>, vector<1x8x64xf32>
    %127 = vector.shape_cast %126 : vector<1x8x64xf32> to vector<8x64xf32>
    %128 = vector.shape_cast %125 : vector<8x64xf32> to vector<1x8x64xf32>
    tpu.vector_store %arg6[%c0_165, %c0_166, %c0_167], %128 {strides = array<i32>} : memref<2x8x64xf32, #tpu.memory_space<vmem>>, vector<1x8x64xf32>,
    %129 = vector.extract_strided_slice %123 {offsets = [64, 0], sizes = [64, 8], strides = [1, 1]} : vector<128x8xf32> to vector<64x8xf32>
    %130 = tpu.transpose %129, [1, 0] : vector<64x8xf32> -> vector<8x64xf32>
    %c1_168 = arith.constant 1 : index
    %c0_169 = arith.constant 0 : index
    %c0_170 = arith.constant 0 : index
    %131 = vector.load %arg6[%c1_168, %c0_169, %c0_170] : memref<2x8x64xf32, #tpu.memory_space<vmem>>, vector<1x8x64xf32>
    %132 = vector.shape_cast %131 : vector<1x8x64xf32> to vector<8x64xf32>
    %133 = vector.shape_cast %130 : vector<8x64xf32> to vector<1x8x64xf32>
    tpu.vector_store %arg6[%c1_168, %c0_169, %c0_170], %133 {strides = array<i32>} : memref<2x8x64xf32, #tpu.memory_space<vmem>>, vector<1x8x64xf32>,
    return
  }
  func.func @transform_0(%arg0: i32) -> (i32, i32, i32) {
    %c0_i32 = arith.constant 0 : i32
    %c0_i32_0 = arith.constant 0 : i32
    %c0_i32_1 = arith.constant 0 : i32
    return %arg0, %c0_i32, %c0_i32_0 : i32, i32, i32
  }
  func.func @transform_1(%arg0: i32) -> (i32, i32) {
    %c0_i32 = arith.constant 0 : i32
    %c0_i32_0 = arith.constant 0 : i32
    %c0_i32_1 = arith.constant 0 : i32
    return %c0_i32, %c0_i32_0 : i32, i32
  }
  func.func @transform_2(%arg0: i32) -> (i32, i32) {
    %c0_i32 = arith.constant 0 : i32
    %c0_i32_0 = arith.constant 0 : i32
    %c0_i32_1 = arith.constant 0 : i32
    return %c0_i32, %c0_i32_0 : i32, i32
  }
  func.func @transform_3(%arg0: i32) -> (i32, i32) {
    %c0_i32 = arith.constant 0 : i32
    %c0_i32_0 = arith.constant 0 : i32
    %c0_i32_1 = arith.constant 0 : i32
    return %c0_i32, %c0_i32_0 : i32, i32
  }
  func.func @transform_4(%arg0: i32) -> (i32, i32) {
    %c0_i32 = arith.constant 0 : i32
    %c0_i32_0 = arith.constant 0 : i32
    %c0_i32_1 = arith.constant 0 : i32
    return %c0_i32, %c0_i32_0 : i32, i32
  }
  func.func @transform_5(%arg0: i32) -> (i32, i32, i32) {
    %c0_i32 = arith.constant 0 : i32
    %c0_i32_0 = arith.constant 0 : i32
    %c0_i32_1 = arith.constant 0 : i32
    return %arg0, %c0_i32, %c0_i32_0 : i32, i32, i32
  }
}

</mosaic_0001>

<llo_original>
// kernel: down_forward.1
$region0: #{down_forward.1}
  #allocation0 [shape = 'u32[]', space=smem, size = 0x4, offset = 0x4, fixed_abs, tag = 'smem constant byte address 0x4 - core index']
  #allocation1 [shape = 'u32[144,128]{1,0:T(1,128)}', space=vmem, size = 0x12000, scoped, tag = 'internal scratch']
  #allocation2 [shape = 'f32[2,10,10,4]{3,2,1,0:T(8,128)}', space=vmem, size = 0x28000, scoped, tag = 'scratch operand']
  #allocation3 [shape = 'f32[2,10,10,8]{3,2,1,0:T(8,128)}', space=vmem, size = 0x28000, scoped, tag = 'scratch operand']
  #allocation4 [shape = 'f32[128,36]{1,0:T(8,128)}', space=vmem, size = 0x10000, scoped, tag = 'scratch operand']
  #allocation5 [shape = 'f32[128,72]{1,0:T(8,128)}', space=vmem, size = 0x10000, scoped, tag = 'scratch operand']
  %s0 = inlined_call_operand.vmem [shape: f32[2,4,256], index: 0, kind: input, shape index: {}]
  %s1 = inlined_call_operand.vmem [shape: f32[36,8], index: 1, kind: input, shape index: {}]
  %s2 = inlined_call_operand.vmem [shape: f32[1,8], index: 2, kind: input, shape index: {}]
  %s3 = inlined_call_operand.vmem [shape: f32[72,8], index: 3, kind: input, shape index: {}]
  %s4 = inlined_call_operand.vmem [shape: f32[1,8], index: 4, kind: input, shape index: {}]
  %s5 = inlined_call_operand.vmem [shape: f32[2,8,64], index: 5, kind: output, shape index: {}]
  %s6 = sld [smem:[#allocation0]]
  $region30: #{down_forward.1} parent=0
    _
  %s8 = ssub.s32 1, %s6
  %s9 = scalar_select 0, %s8, %s6
  // Predicated region
  $region2: #{down_forward.1} parent=0 // pred_check
    _
  $region3: #{down_forward.1} parent=0 // pred_check_branch
    %11 = sbr.rel (0) target = $region5
  $region4: #{down_forward.1} parent=0 // pred_region
    _
  $region5: #{down_forward.1} parent=0 // pred_fallthru
    _
  // Predicated region
  $region6: #{down_forward.1} parent=0 // pred_check
    _
  $region7: #{down_forward.1} parent=0 // pred_check_branch
    %13 = sbr.rel (0) target = $region9
  $region8: #{down_forward.1} parent=0 // pred_region
    _
  $region9: #{down_forward.1} parent=0 // pred_fallthru
    _
  // Predicated region
  $region10: #{down_forward.1} parent=0 // pred_check
    _
  $region11: #{down_forward.1} parent=0 // pred_check_branch
    %15 = sbr.rel (0) target = $region13
  $region12: #{down_forward.1} parent=0 // pred_region
    _
  $region13: #{down_forward.1} parent=0 // pred_fallthru
    _
  // Predicated region
  $region14: #{down_forward.1} parent=0 // pred_check
    _
  $region15: #{down_forward.1} parent=0 // pred_check_branch
    %17 = sbr.rel (0) target = $region17
  $region16: #{down_forward.1} parent=0 // pred_region
    _
  $region17: #{down_forward.1} parent=0 // pred_fallthru
    _
  // Predicated region
  $region18: #{down_forward.1} parent=0 // pred_check
    _
  $region19: #{down_forward.1} parent=0 // pred_check_branch
    %19 = sbr.rel (0) target = $region21
  $region20: #{down_forward.1} parent=0 // pred_region
    _
  $region21: #{down_forward.1} parent=0 // pred_fallthru
    _
  %vm20 = vcmask 31744
  %21 = vst.msk [vmem:[#allocation2] sm:$0xff] %vm20, 0.0
  %vm22 = vcmask 25600
  %23 = vst.msk [vmem:[#allocation2 + $0x8] sm:$0x3] %vm22, 0.0
  %24 = vst.msk [vmem:[#allocation2 + $0xa0] sm:$0xff] %vm20, 0.0
  %25 = vst.msk [vmem:[#allocation2 + $0xa8] sm:$0x3] %vm22, 0.0
  %s26 = scalar_lea.vmem [#allocation2], 144
  %27 = vst.msk [vmem:[%s26] sm:$0xff] %vm20, 0.0
  %28 = vst.msk [vmem:[%s26 + $0x8] sm:$0x3] %vm22, 0.0
  %29 = vst.msk [vmem:[%s26 + $0xa0] sm:$0xff] %vm20, 0.0
  %30 = vst.msk [vmem:[%s26 + $0xa8] sm:$0x3] %vm22, 0.0
  %vm31 = vcmask 24576
  %32 = vst.msk [vmem:[#allocation2] sm:$0x1] %vm31, 0.0
  %33 = vst.msk [vmem:[#allocation2 + $0x10] sm:$0x1] %vm31, 0.0
  %34 = vst.msk [vmem:[#allocation2 + $0x20] sm:$0x1] %vm31, 0.0
  %35 = vst.msk [vmem:[#allocation2 + $0x30] sm:$0x1] %vm31, 0.0
  %36 = vst.msk [vmem:[#allocation2 + $0x40] sm:$0x1] %vm31, 0.0
  %37 = vst.msk [vmem:[#allocation2 + $0x50] sm:$0x1] %vm31, 0.0
  %38 = vst.msk [vmem:[#allocation2 + $0x60] sm:$0x1] %vm31, 0.0
  %39 = vst.msk [vmem:[#allocation2 + $0x70] sm:$0x1] %vm31, 0.0
  %40 = vst.msk [vmem:[#allocation2 + $0x80] sm:$0x1] %vm31, 0.0
  %41 = vst.msk [vmem:[#allocation2 + $0x90] sm:$0x1] %vm31, 0.0
  %42 = vst.msk [vmem:[#allocation2 + $0xa0] sm:$0x1] %vm31, 0.0
  %43 = vst.msk [vmem:[#allocation2 + $0xb0] sm:$0x1] %vm31, 0.0
  %44 = vst.msk [vmem:[#allocation2 + $0xc0] sm:$0x1] %vm31, 0.0
  %45 = vst.msk [vmem:[#allocation2 + $0xd0] sm:$0x1] %vm31, 0.0
  %46 = vst.msk [vmem:[#allocation2 + $0xe0] sm:$0x1] %vm31, 0.0
  %47 = vst.msk [vmem:[#allocation2 + $0xf0] sm:$0x1] %vm31, 0.0
  %48 = vst.msk [vmem:[#allocation2 + $0x100] sm:$0x1] %vm31, 0.0
  %49 = vst.msk [vmem:[#allocation2 + $0x110] sm:$0x1] %vm31, 0.0
  %50 = vst.msk [vmem:[#allocation2 + $0x120] sm:$0x1] %vm31, 0.0
  %51 = vst.msk [vmem:[#allocation2 + $0x130] sm:$0x1] %vm31, 0.0
  %52 = vst.msk [vmem:[#allocation2 + $0x9] sm:$0x1] %vm31, 0.0
  %53 = vst.msk [vmem:[#allocation2 + $0x19] sm:$0x1] %vm31, 0.0
  %54 = vst.msk [vmem:[#allocation2 + $0x29] sm:$0x1] %vm31, 0.0
  %55 = vst.msk [vmem:[#allocation2 + $0x39] sm:$0x1] %vm31, 0.0
  %56 = vst.msk [vmem:[#allocation2 + $0x49] sm:$0x1] %vm31, 0.0
  %57 = vst.msk [vmem:[#allocation2 + $0x59] sm:$0x1] %vm31, 0.0
  %58 = vst.msk [vmem:[#allocation2 + $0x69] sm:$0x1] %vm31, 0.0
  %59 = vst.msk [vmem:[#allocation2 + $0x79] sm:$0x1] %vm31, 0.0
  %60 = vst.msk [vmem:[#allocation2 + $0x89] sm:$0x1] %vm31, 0.0
  %61 = vst.msk [vmem:[#allocation2 + $0x99] sm:$0x1] %vm31, 0.0
  %62 = vst.msk [vmem:[#allocation2 + $0xa9] sm:$0x1] %vm31, 0.0
  %63 = vst.msk [vmem:[#allocation2 + $0xb9] sm:$0x1] %vm31, 0.0
  %64 = vst.msk [vmem:[#allocation2 + $0xc9] sm:$0x1] %vm31, 0.0
  %65 = vst.msk [vmem:[#allocation2 + $0xd9] sm:$0x1] %vm31, 0.0
  %66 = vst.msk [vmem:[#allocation2 + $0xe9] sm:$0x1] %vm31, 0.0
  %67 = vst.msk [vmem:[#allocation2 + $0xf9] sm:$0x1] %vm31, 0.0
  %68 = vst.msk [vmem:[#allocation2 + $0x109] sm:$0x1] %vm31, 0.0
  %69 = vst.msk [vmem:[#allocation2 + $0x119] sm:$0x1] %vm31, 0.0
  %70 = vst.msk [vmem:[#allocation2 + $0x129] sm:$0x1] %vm31, 0.0
  %71 = vst.msk [vmem:[#allocation2 + $0x139] sm:$0x1] %vm31, 0.0
  %vm72 = vcmask 64512
  %73 = vst.msk [vmem:[#allocation3] sm:$0xff] %vm72, 0.0
  %vm74 = vcmask 58368
  %75 = vst.msk [vmem:[#allocation3 + $0x8] sm:$0x3] %vm74, 0.0
  %76 = vst.msk [vmem:[#allocation3 + $0xa0] sm:$0xff] %vm72, 0.0
  %77 = vst.msk [vmem:[#allocation3 + $0xa8] sm:$0x3] %vm74, 0.0
  %s78 = scalar_lea.vmem [#allocation3], 144
  %79 = vst.msk [vmem:[%s78] sm:$0xff] %vm72, 0.0
  %80 = vst.msk [vmem:[%s78 + $0x8] sm:$0x3] %vm74, 0.0
  %81 = vst.msk [vmem:[%s78 + $0xa0] sm:$0xff] %vm72, 0.0
  %82 = vst.msk [vmem:[%s78 + $0xa8] sm:$0x3] %vm74, 0.0
  %vm83 = vcmask 57344
  %84 = vst.msk [vmem:[#allocation3] sm:$0x1] %vm83, 0.0
  %85 = vst.msk [vmem:[#allocation3 + $0x10] sm:$0x1] %vm83, 0.0
  %86 = vst.msk [vmem:[#allocation3 + $0x20] sm:$0x1] %vm83, 0.0
  %87 = vst.msk [vmem:[#allocation3 + $0x30] sm:$0x1] %vm83, 0.0
  %88 = vst.msk [vmem:[#allocation3 + $0x40] sm:$0x1] %vm83, 0.0
  %89 = vst.msk [vmem:[#allocation3 + $0x50] sm:$0x1] %vm83, 0.0
  %90 = vst.msk [vmem:[#allocation3 + $0x60] sm:$0x1] %vm83, 0.0
  %91 = vst.msk [vmem:[#allocation3 + $0x70] sm:$0x1] %vm83, 0.0
  %92 = vst.msk [vmem:[#allocation3 + $0x80] sm:$0x1] %vm83, 0.0
  %93 = vst.msk [vmem:[#allocation3 + $0x90] sm:$0x1] %vm83, 0.0
  %94 = vst.msk [vmem:[#allocation3 + $0xa0] sm:$0x1] %vm83, 0.0
  %95 = vst.msk [vmem:[#allocation3 + $0xb0] sm:$0x1] %vm83, 0.0
  %96 = vst.msk [vmem:[#allocation3 + $0xc0] sm:$0x1] %vm83, 0.0
  %97 = vst.msk [vmem:[#allocation3 + $0xd0] sm:$0x1] %vm83, 0.0
  %98 = vst.msk [vmem:[#allocation3 + $0xe0] sm:$0x1] %vm83, 0.0
  %99 = vst.msk [vmem:[#allocation3 + $0xf0] sm:$0x1] %vm83, 0.0
  %100 = vst.msk [vmem:[#allocation3 + $0x100] sm:$0x1] %vm83, 0.0
  %101 = vst.msk [vmem:[#allocation3 + $0x110] sm:$0x1] %vm83, 0.0
  %102 = vst.msk [vmem:[#allocation3 + $0x120] sm:$0x1] %vm83, 0.0
  %103 = vst.msk [vmem:[#allocation3 + $0x130] sm:$0x1] %vm83, 0.0
  %104 = vst.msk [vmem:[#allocation3 + $0x9] sm:$0x1] %vm83, 0.0
  %105 = vst.msk [vmem:[#allocation3 + $0x19] sm:$0x1] %vm83, 0.0
  %106 = vst.msk [vmem:[#allocation3 + $0x29] sm:$0x1] %vm83, 0.0
  %107 = vst.msk [vmem:[#allocation3 + $0x39] sm:$0x1] %vm83, 0.0
  %108 = vst.msk [vmem:[#allocation3 + $0x49] sm:$0x1] %vm83, 0.0
  %109 = vst.msk [vmem:[#allocation3 + $0x59] sm:$0x1] %vm83, 0.0
  %110 = vst.msk [vmem:[#allocation3 + $0x69] sm:$0x1] %vm83, 0.0
  %111 = vst.msk [vmem:[#allocation3 + $0x79] sm:$0x1] %vm83, 0.0
  %112 = vst.msk [vmem:[#allocation3 + $0x89] sm:$0x1] %vm83, 0.0
  %113 = vst.msk [vmem:[#allocation3 + $0x99] sm:$0x1] %vm83, 0.0
  %114 = vst.msk [vmem:[#allocation3 + $0xa9] sm:$0x1] %vm83, 0.0
  %115 = vst.msk [vmem:[#allocation3 + $0xb9] sm:$0x1] %vm83, 0.0
  %116 = vst.msk [vmem:[#allocation3 + $0xc9] sm:$0x1] %vm83, 0.0
  %117 = vst.msk [vmem:[#allocation3 + $0xd9] sm:$0x1] %vm83, 0.0
  %118 = vst.msk [vmem:[#allocation3 + $0xe9] sm:$0x1] %vm83, 0.0
  %119 = vst.msk [vmem:[#allocation3 + $0xf9] sm:$0x1] %vm83, 0.0
  %120 = vst.msk [vmem:[#allocation3 + $0x109] sm:$0x1] %vm83, 0.0
  %121 = vst.msk [vmem:[#allocation3 + $0x119] sm:$0x1] %vm83, 0.0
  %122 = vst.msk [vmem:[#allocation3 + $0x129] sm:$0x1] %vm83, 0.0
  %123 = vst.msk [vmem:[#allocation3 + $0x139] sm:$0x1] %vm83, 0.0
  %v124 = vld [vmem:[%s0] sm:$0xff]
  %v126 = vcombine.high %v124, %v124
  %128 = vxpose.xlu0.b32.start [1/16] %v124, 128
  %129 = vxpose.xlu0.b32.cont [2/16] 0.0, 128
  %130 = vxpose.xlu0.b32.cont [3/16] 0.0, 128
  %131 = vxpose.xlu0.b32.cont [4/16] 0.0, 128
  %132 = vxpose.xlu0.b32.cont [5/16] 0.0, 128
  %133 = vxpose.xlu0.b32.cont [6/16] 0.0, 128
  %134 = vxpose.xlu0.b32.cont [7/16] 0.0, 128
  %135 = vxpose.xlu0.b32.cont [8/16] 0.0, 128
  %136 = vxpose.xlu0.b32.cont [9/16] 0.0, 128
  %137 = vxpose.xlu0.b32.cont [10/16] 0.0, 128
  %138 = vxpose.xlu0.b32.cont [11/16] 0.0, 128
  %139 = vxpose.xlu0.b32.cont [12/16] 0.0, 128
  %140 = vxpose.xlu0.b32.cont [13/16] 0.0, 128
  %141 = vxpose.xlu0.b32.cont [14/16] 0.0, 128
  %142 = vxpose.xlu0.b32.cont [15/16] 0.0, 128
  %143 = vxpose.xlu0.b32.end [16/16] 0.0, 128
  %v144 = vpop.trf.xlu0
  %v145 = vpop.trf.xlu0
  %v146 = vpop.trf.xlu0
  %v147 = vpop.trf.xlu0
  %v148 = vpop.trf.xlu0
  %v149 = vpop.trf.xlu0
  %v150 = vpop.trf.xlu0
  %v151 = vpop.trf.xlu0
  %v152 = vpop.trf.xlu0
  %v153 = vpop.trf.xlu0
  %v154 = vpop.trf.xlu0
  %v155 = vpop.trf.xlu0
  %v156 = vpop.trf.xlu0
  %v157 = vpop.trf.xlu0
  %v158 = vpop.trf.xlu0
  %v159 = vpop.trf.xlu0
  %160 = vxpose.xlu0.b32.start [1/16] %v126, 128
  %161 = vxpose.xlu0.b32.cont [2/16] 0.0, 128
  %162 = vxpose.xlu0.b32.cont [3/16] 0.0, 128
  %163 = vxpose.xlu0.b32.cont [4/16] 0.0, 128
  %164 = vxpose.xlu0.b32.cont [5/16] 0.0, 128
  %165 = vxpose.xlu0.b32.cont [6/16] 0.0, 128
  %166 = vxpose.xlu0.b32.cont [7/16] 0.0, 128
  %167 = vxpose.xlu0.b32.cont [8/16] 0.0, 128
  %168 = vxpose.xlu0.b32.cont [9/16] 0.0, 128
  %169 = vxpose.xlu0.b32.cont [10/16] 0.0, 128
  %170 = vxpose.xlu0.b32.cont [11/16] 0.0, 128
  %171 = vxpose.xlu0.b32.cont [12/16] 0.0, 128
  %172 = vxpose.xlu0.b32.cont [13/16] 0.0, 128
  %173 = vxpose.xlu0.b32.cont [14/16] 0.0, 128
  %174 = vxpose.xlu0.b32.cont [15/16] 0.0, 128
  %175 = vxpose.xlu0.b32.end [16/16] 0.0, 128
  %v176 = vpop.trf.xlu0
  %v177 = vpop.trf.xlu0
  %v178 = vpop.trf.xlu0
  %v179 = vpop.trf.xlu0
  %v180 = vpop.trf.xlu0
  %v181 = vpop.trf.xlu0
  %v182 = vpop.trf.xlu0
  %v183 = vpop.trf.xlu0
  %v184 = vpop.trf.xlu0
  %v185 = vpop.trf.xlu0
  %v186 = vpop.trf.xlu0
  %v187 = vpop.trf.xlu0
  %v188 = vpop.trf.xlu0
  %v189 = vpop.trf.xlu0
  %v190 = vpop.trf.xlu0
  %v191 = vpop.trf.xlu0
  %v192 = vmax.f32 %v144, %v146
  %v193 = vmax.f32 %v145, %v147
  %v194 = vmax.f32 %v148, %v150
  %v195 = vmax.f32 %v149, %v151
  %v196 = vmax.f32 %v152, %v154
  %v197 = vmax.f32 %v153, %v155
  %v198 = vmax.f32 %v156, %v158
  %v199 = vmax.f32 %v157, %v159
  %v200 = vmax.f32 %v176, %v178
  %v201 = vmax.f32 %v177, %v179
  %v202 = vmax.f32 %v180, %v182
  %v203 = vmax.f32 %v181, %v183
  %v204 = vmax.f32 %v184, %v186
  %v205 = vmax.f32 %v185, %v187
  %v206 = vmax.f32 %v188, %v190
  %v207 = vmax.f32 %v189, %v191
  %v224 = vcombine.high %v192, %v192
  %v226 = vunpack.c.l.s4 1983009808
  %v227 = vunpack.c.0.s8 %v226
  %v228 = vlaneseq
  %v229 = vshrl.u32 %v228, 7
  %v230 = vsub.s32 %v227, %v229
  %v231 = vrot.slane %v192, %v230
  %v233 = vunpack.c.l.s4 1983009808
  %v234 = vunpack.c.0.s8 %v233
  %v235 = vlaneseq
  %v236 = vshrl.u32 %v235, 7
  %v237 = vsub.s32 %v234, %v236
  %v238 = vrot.slane %v224, %v237
  %v239 = vcombine.high %v231, %v231
  %v240 = vcombine.high %v238, %v238
  %v241 = vcombine.high %v193, %v193
  %v243 = vunpack.c.l.s4 1983009808
  %v244 = vunpack.c.0.s8 %v243
  %v245 = vlaneseq
  %v246 = vshrl.u32 %v245, 7
  %v247 = vsub.s32 %v244, %v246
  %v248 = vrot.slane %v193, %v247
  %v250 = vunpack.c.l.s4 1983009808
  %v251 = vunpack.c.0.s8 %v250
  %v252 = vlaneseq
  %v253 = vshrl.u32 %v252, 7
  %v254 = vsub.s32 %v251, %v253
  %v255 = vrot.slane %v241, %v254
  %v256 = vcombine.high %v248, %v248
  %v257 = vcombine.high %v255, %v255
  %v258 = vcombine.high %v194, %v194
  %v260 = vunpack.c.l.s4 1983009808
  %v261 = vunpack.c.0.s8 %v260
  %v262 = vlaneseq
  %v263 = vshrl.u32 %v262, 7
  %v264 = vsub.s32 %v261, %v263
  %v265 = vrot.slane %v194, %v264
  %v267 = vunpack.c.l.s4 1983009808
  %v268 = vunpack.c.0.s8 %v267
  %v269 = vlaneseq
  %v270 = vshrl.u32 %v269, 7
  %v271 = vsub.s32 %v268, %v270
  %v272 = vrot.slane %v258, %v271
  %v273 = vcombine.high %v265, %v265
  %v274 = vcombine.high %v272, %v272
  %v275 = vcombine.high %v195, %v195
  %v277 = vunpack.c.l.s4 1983009808
  %v278 = vunpack.c.0.s8 %v277
  %v279 = vlaneseq
  %v280 = vshrl.u32 %v279, 7
  %v281 = vsub.s32 %v278, %v280
  %v282 = vrot.slane %v195, %v281
  %v284 = vunpack.c.l.s4 1983009808
  %v285 = vunpack.c.0.s8 %v284
  %v286 = vlaneseq
  %v287 = vshrl.u32 %v286, 7
  %v288 = vsub.s32 %v285, %v287
  %v289 = vrot.slane %v275, %v288
  %v290 = vcombine.high %v282, %v282
  %v291 = vcombine.high %v289, %v289
  %v292 = vcombine.high %v196, %v196
  %v294 = vunpack.c.l.s4 1983009808
  %v295 = vunpack.c.0.s8 %v294
  %v296 = vlaneseq
  %v297 = vshrl.u32 %v296, 7
  %v298 = vsub.s32 %v295, %v297
  %v299 = vrot.slane %v196, %v298
  %v301 = vunpack.c.l.s4 1983009808
  %v302 = vunpack.c.0.s8 %v301
  %v303 = vlaneseq
  %v304 = vshrl.u32 %v303, 7
  %v305 = vsub.s32 %v302, %v304
  %v306 = vrot.slane %v292, %v305
  %v307 = vcombine.high %v299, %v299
  %v308 = vcombine.high %v306, %v306
  %v309 = vcombine.high %v197, %v197
  %v311 = vunpack.c.l.s4 1983009808
  %v312 = vunpack.c.0.s8 %v311
  %v313 = vlaneseq
  %v314 = vshrl.u32 %v313, 7
  %v315 = vsub.s32 %v312, %v314
  %v316 = vrot.slane %v197, %v315
  %v318 = vunpack.c.l.s4 1983009808
  %v319 = vunpack.c.0.s8 %v318
  %v320 = vlaneseq
  %v321 = vshrl.u32 %v320, 7
  %v322 = vsub.s32 %v319, %v321
  %v323 = vrot.slane %v309, %v322
  %v324 = vcombine.high %v316, %v316
  %v325 = vcombine.high %v323, %v323
  %v326 = vcombine.high %v198, %v198
  %v328 = vunpack.c.l.s4 1983009808
  %v329 = vunpack.c.0.s8 %v328
  %v330 = vlaneseq
  %v331 = vshrl.u32 %v330, 7
  %v332 = vsub.s32 %v329, %v331
  %v333 = vrot.slane %v198, %v332
  %v335 = vunpack.c.l.s4 1983009808
  %v336 = vunpack.c.0.s8 %v335
  %v337 = vlaneseq
  %v338 = vshrl.u32 %v337, 7
  %v339 = vsub.s32 %v336, %v338
  %v340 = vrot.slane %v326, %v339
  %v341 = vcombine.high %v333, %v333
  %v342 = vcombine.high %v340, %v340
  %v343 = vcombine.high %v199, %v199
  %v345 = vunpack.c.l.s4 1983009808
  %v346 = vunpack.c.0.s8 %v345
  %v347 = vlaneseq
  %v348 = vshrl.u32 %v347, 7
  %v349 = vsub.s32 %v346, %v348
  %v350 = vrot.slane %v199, %v349
  %v352 = vunpack.c.l.s4 1983009808
  %v353 = vunpack.c.0.s8 %v352
  %v354 = vlaneseq
  %v355 = vshrl.u32 %v354, 7
  %v356 = vsub.s32 %v353, %v355
  %v357 = vrot.slane %v343, %v356
  %v358 = vcombine.high %v350, %v350
  %v359 = vcombine.high %v357, %v357
  %v360 = vcombine.high %v200, %v200
  %v362 = vunpack.c.l.s4 1983009808
  %v363 = vunpack.c.0.s8 %v362
  %v364 = vlaneseq
  %v365 = vshrl.u32 %v364, 7
  %v366 = vsub.s32 %v363, %v365
  %v367 = vrot.slane %v200, %v366
  %v369 = vunpack.c.l.s4 1983009808
  %v370 = vunpack.c.0.s8 %v369
  %v371 = vlaneseq
  %v372 = vshrl.u32 %v371, 7
  %v373 = vsub.s32 %v370, %v372
  %v374 = vrot.slane %v360, %v373
  %v375 = vcombine.high %v367, %v367
  %v376 = vcombine.high %v374, %v374
  %v377 = vcombine.high %v201, %v201
  %v379 = vunpack.c.l.s4 1983009808
  %v380 = vunpack.c.0.s8 %v379
  %v381 = vlaneseq
  %v382 = vshrl.u32 %v381, 7
  %v383 = vsub.s32 %v380, %v382
  %v384 = vrot.slane %v201, %v383
  %v386 = vunpack.c.l.s4 1983009808
  %v387 = vunpack.c.0.s8 %v386
  %v388 = vlaneseq
  %v389 = vshrl.u32 %v388, 7
  %v390 = vsub.s32 %v387, %v389
  %v391 = vrot.slane %v377, %v390
  %v392 = vcombine.high %v384, %v384
  %v393 = vcombine.high %v391, %v391
  %v394 = vcombine.high %v202, %v202
  %v396 = vunpack.c.l.s4 1983009808
  %v397 = vunpack.c.0.s8 %v396
  %v398 = vlaneseq
  %v399 = vshrl.u32 %v398, 7
  %v400 = vsub.s32 %v397, %v399
  %v401 = vrot.slane %v202, %v400
  %v403 = vunpack.c.l.s4 1983009808
  %v404 = vunpack.c.0.s8 %v403
  %v405 = vlaneseq
  %v406 = vshrl.u32 %v405, 7
  %v407 = vsub.s32 %v404, %v406
  %v408 = vrot.slane %v394, %v407
  %v409 = vcombine.high %v401, %v401
  %v410 = vcombine.high %v408, %v408
  %v411 = vcombine.high %v203, %v203
  %v413 = vunpack.c.l.s4 1983009808
  %v414 = vunpack.c.0.s8 %v413
  %v415 = vlaneseq
  %v416 = vshrl.u32 %v415, 7
  %v417 = vsub.s32 %v414, %v416
  %v418 = vrot.slane %v203, %v417
  %v420 = vunpack.c.l.s4 1983009808
  %v421 = vunpack.c.0.s8 %v420
  %v422 = vlaneseq
  %v423 = vshrl.u32 %v422, 7
  %v424 = vsub.s32 %v421, %v423
  %v425 = vrot.slane %v411, %v424
  %v426 = vcombine.high %v418, %v418
  %v427 = vcombine.high %v425, %v425
  %v428 = vcombine.high %v204, %v204
  %v430 = vunpack.c.l.s4 1983009808
  %v431 = vunpack.c.0.s8 %v430
  %v432 = vlaneseq
  %v433 = vshrl.u32 %v432, 7
  %v434 = vsub.s32 %v431, %v433
  %v435 = vrot.slane %v204, %v434
  %v437 = vunpack.c.l.s4 1983009808
  %v438 = vunpack.c.0.s8 %v437
  %v439 = vlaneseq
  %v440 = vshrl.u32 %v439, 7
  %v441 = vsub.s32 %v438, %v440
  %v442 = vrot.slane %v428, %v441
  %v443 = vcombine.high %v435, %v435
  %v444 = vcombine.high %v442, %v442
  %v445 = vcombine.high %v205, %v205
  %v447 = vunpack.c.l.s4 1983009808
  %v448 = vunpack.c.0.s8 %v447
  %v449 = vlaneseq
  %v450 = vshrl.u32 %v449, 7
  %v451 = vsub.s32 %v448, %v450
  %v452 = vrot.slane %v205, %v451
  %v454 = vunpack.c.l.s4 1983009808
  %v455 = vunpack.c.0.s8 %v454
  %v456 = vlaneseq
  %v457 = vshrl.u32 %v456, 7
  %v458 = vsub.s32 %v455, %v457
  %v459 = vrot.slane %v445, %v458
  %v460 = vcombine.high %v452, %v452
  %v461 = vcombine.high %v459, %v459
  %v462 = vcombine.high %v206, %v206
  %v464 = vunpack.c.l.s4 1983009808
  %v465 = vunpack.c.0.s8 %v464
  %v466 = vlaneseq
  %v467 = vshrl.u32 %v466, 7
  %v468 = vsub.s32 %v465, %v467
  %v469 = vrot.slane %v206, %v468
  %v471 = vunpack.c.l.s4 1983009808
  %v472 = vunpack.c.0.s8 %v471
  %v473 = vlaneseq
  %v474 = vshrl.u32 %v473, 7
  %v475 = vsub.s32 %v472, %v474
  %v476 = vrot.slane %v462, %v475
  %v477 = vcombine.high %v469, %v469
  %v478 = vcombine.high %v476, %v476
  %v479 = vcombine.high %v207, %v207
  %v481 = vunpack.c.l.s4 1983009808
  %v482 = vunpack.c.0.s8 %v481
  %v483 = vlaneseq
  %v484 = vshrl.u32 %v483, 7
  %v485 = vsub.s32 %v482, %v484
  %v486 = vrot.slane %v207, %v485
  %v488 = vunpack.c.l.s4 1983009808
  %v489 = vunpack.c.0.s8 %v488
  %v490 = vlaneseq
  %v491 = vshrl.u32 %v490, 7
  %v492 = vsub.s32 %v489, %v491
  %v493 = vrot.slane %v479, %v492
  %v494 = vcombine.high %v486, %v486
  %v495 = vcombine.high %v493, %v493
  %v560 = vrot.slane %v231, 7
  %v561 = vrot.slane %v560, 2
  %v562 = vrot.slane %v239, 7
  %v563 = vrot.slane %v562, 2
  %v564 = vrot.slane %v238, 7
  %v565 = vrot.slane %v564, 2
  %v566 = vrot.slane %v240, 7
  %v567 = vrot.slane %v566, 2
  %v568 = vrot.slane %v248, 7
  %v569 = vrot.slane %v568, 2
  %v570 = vrot.slane %v256, 7
  %v571 = vrot.slane %v570, 2
  %v572 = vrot.slane %v255, 7
  %v573 = vrot.slane %v572, 2
  %v574 = vrot.slane %v257, 7
  %v575 = vrot.slane %v574, 2
  %v576 = vrot.slane %v265, 7
  %v577 = vrot.slane %v576, 2
  %v578 = vrot.slane %v273, 7
  %v579 = vrot.slane %v578, 2
  %v580 = vrot.slane %v272, 7
  %v581 = vrot.slane %v580, 2
  %v582 = vrot.slane %v274, 7
  %v583 = vrot.slane %v582, 2
  %v584 = vrot.slane %v282, 7
  %v585 = vrot.slane %v584, 2
  %v586 = vrot.slane %v290, 7
  %v587 = vrot.slane %v586, 2
  %v588 = vrot.slane %v289, 7
  %v589 = vrot.slane %v588, 2
  %v590 = vrot.slane %v291, 7
  %v591 = vrot.slane %v590, 2
  %v592 = vrot.slane %v299, 7
  %v593 = vrot.slane %v592, 2
  %v594 = vrot.slane %v307, 7
  %v595 = vrot.slane %v594, 2
  %v596 = vrot.slane %v306, 7
  %v597 = vrot.slane %v596, 2
  %v598 = vrot.slane %v308, 7
  %v599 = vrot.slane %v598, 2
  %v600 = vrot.slane %v316, 7
  %v601 = vrot.slane %v600, 2
  %v602 = vrot.slane %v324, 7
  %v603 = vrot.slane %v602, 2
  %v604 = vrot.slane %v323, 7
  %v605 = vrot.slane %v604, 2
  %v606 = vrot.slane %v325, 7
  %v607 = vrot.slane %v606, 2
  %v608 = vrot.slane %v333, 7
  %v609 = vrot.slane %v608, 2
  %v610 = vrot.slane %v341, 7
  %v611 = vrot.slane %v610, 2
  %v612 = vrot.slane %v340, 7
  %v613 = vrot.slane %v612, 2
  %v614 = vrot.slane %v342, 7
  %v615 = vrot.slane %v614, 2
  %v616 = vrot.slane %v350, 7
  %v617 = vrot.slane %v616, 2
  %v618 = vrot.slane %v358, 7
  %v619 = vrot.slane %v618, 2
  %v620 = vrot.slane %v357, 7
  %v621 = vrot.slane %v620, 2
  %v622 = vrot.slane %v359, 7
  %v623 = vrot.slane %v622, 2
  %v624 = vrot.slane %v367, 7
  %v625 = vrot.slane %v624, 2
  %v626 = vrot.slane %v375, 7
  %v627 = vrot.slane %v626, 2
  %v628 = vrot.slane %v374, 7
  %v629 = vrot.slane %v628, 2
  %v630 = vrot.slane %v376, 7
  %v631 = vrot.slane %v630, 2
  %v632 = vrot.slane %v384, 7
  %v633 = vrot.slane %v632, 2
  %v634 = vrot.slane %v392, 7
  %v635 = vrot.slane %v634, 2
  %v636 = vrot.slane %v391, 7
  %v637 = vrot.slane %v636, 2
  %v638 = vrot.slane %v393, 7
  %v639 = vrot.slane %v638, 2
  %v640 = vrot.slane %v401, 7
  %v641 = vrot.slane %v640, 2
  %v642 = vrot.slane %v409, 7
  %v643 = vrot.slane %v642, 2
  %v644 = vrot.slane %v408, 7
  %v645 = vrot.slane %v644, 2
  %v646 = vrot.slane %v410, 7
  %v647 = vrot.slane %v646, 2
  %v648 = vrot.slane %v418, 7
  %v649 = vrot.slane %v648, 2
  %v650 = vrot.slane %v426, 7
  %v651 = vrot.slane %v650, 2
  %v652 = vrot.slane %v425, 7
  %v653 = vrot.slane %v652, 2
  %v654 = vrot.slane %v427, 7
  %v655 = vrot.slane %v654, 2
  %v656 = vrot.slane %v435, 7
  %v657 = vrot.slane %v656, 2
  %v658 = vrot.slane %v443, 7
  %v659 = vrot.slane %v658, 2
  %v660 = vrot.slane %v442, 7
  %v661 = vrot.slane %v660, 2
  %v662 = vrot.slane %v444, 7
  %v663 = vrot.slane %v662, 2
  %v664 = vrot.slane %v452, 7
  %v665 = vrot.slane %v664, 2
  %v666 = vrot.slane %v460, 7
  %v667 = vrot.slane %v666, 2
  %v668 = vrot.slane %v459, 7
  %v669 = vrot.slane %v668, 2
  %v670 = vrot.slane %v461, 7
  %v671 = vrot.slane %v670, 2
  %v672 = vrot.slane %v469, 7
  %v673 = vrot.slane %v672, 2
  %v674 = vrot.slane %v477, 7
  %v675 = vrot.slane %v674, 2
  %v676 = vrot.slane %v476, 7
  %v677 = vrot.slane %v676, 2
  %v678 = vrot.slane %v478, 7
  %v679 = vrot.slane %v678, 2
  %v680 = vrot.slane %v486, 7
  %v681 = vrot.slane %v680, 2
  %v682 = vrot.slane %v494, 7
  %v683 = vrot.slane %v682, 2
  %v684 = vrot.slane %v493, 7
  %v685 = vrot.slane %v684, 2
  %v686 = vrot.slane %v495, 7
  %v687 = vrot.slane %v686, 2
  %v752 = vmax.f32 %v231, %v561
  %v753 = vmax.f32 %v239, %v563
  %v754 = vmax.f32 %v238, %v565
  %v755 = vmax.f32 %v240, %v567
  %v756 = vmax.f32 %v248, %v569
  %v757 = vmax.f32 %v256, %v571
  %v758 = vmax.f32 %v255, %v573
  %v759 = vmax.f32 %v257, %v575
  %v760 = vmax.f32 %v265, %v577
  %v761 = vmax.f32 %v273, %v579
  %v762 = vmax.f32 %v272, %v581
  %v763 = vmax.f32 %v274, %v583
  %v764 = vmax.f32 %v282, %v585
  %v765 = vmax.f32 %v290, %v587
  %v766 = vmax.f32 %v289, %v589
  %v767 = vmax.f32 %v291, %v591
  %v768 = vmax.f32 %v299, %v593
  %v769 = vmax.f32 %v307, %v595
  %v770 = vmax.f32 %v306, %v597
  %v771 = vmax.f32 %v308, %v599
  %v772 = vmax.f32 %v316, %v601
  %v773 = vmax.f32 %v324, %v603
  %v774 = vmax.f32 %v323, %v605
  %v775 = vmax.f32 %v325, %v607
  %v776 = vmax.f32 %v333, %v609
  %v777 = vmax.f32 %v341, %v611
  %v778 = vmax.f32 %v340, %v613
  %v779 = vmax.f32 %v342, %v615
  %v780 = vmax.f32 %v350, %v617
  %v781 = vmax.f32 %v358, %v619
  %v782 = vmax.f32 %v357, %v621
  %v783 = vmax.f32 %v359, %v623
  %v784 = vmax.f32 %v367, %v625
  %v785 = vmax.f32 %v375, %v627
  %v786 = vmax.f32 %v374, %v629
  %v787 = vmax.f32 %v376, %v631
  %v788 = vmax.f32 %v384, %v633
  %v789 = vmax.f32 %v392, %v635
  %v790 = vmax.f32 %v391, %v637
  %v791 = vmax.f32 %v393, %v639
  %v792 = vmax.f32 %v401, %v641
  %v793 = vmax.f32 %v409, %v643
  %v794 = vmax.f32 %v408, %v645
  %v795 = vmax.f32 %v410, %v647
  %v796 = vmax.f32 %v418, %v649
  %v797 = vmax.f32 %v426, %v651
  %v798 = vmax.f32 %v425, %v653
  %v799 = vmax.f32 %v427, %v655
  %v800 = vmax.f32 %v435, %v657
  %v801 = vmax.f32 %v443, %v659
  %v802 = vmax.f32 %v442, %v661
  %v803 = vmax.f32 %v444, %v663
  %v804 = vmax.f32 %v452, %v665
  %v805 = vmax.f32 %v460, %v667
  %v806 = vmax.f32 %v459, %v669
  %v807 = vmax.f32 %v461, %v671
  %v808 = vmax.f32 %v469, %v673
  %v809 = vmax.f32 %v477, %v675
  %v810 = vmax.f32 %v476, %v677
  %v811 = vmax.f32 %v478, %v679
  %v812 = vmax.f32 %v486, %v681
  %v813 = vmax.f32 %v494, %v683
  %v814 = vmax.f32 %v493, %v685
  %v815 = vmax.f32 %v495, %v687
  %v880 = vlaneseq
  %v881 = vshrl.u32 %v880, 7
  %v882 = vsub.s32 0, %v881
  %v883 = vrot.slane %v752, %v882
  %v884 = vlaneseq
  %v885 = vshrl.u32 %v884, 7
  %v886 = vsub.s32 0, %v885
  %v887 = vrot.slane %v753, %v886
  %v888 = vlaneseq
  %v889 = vshrl.u32 %v888, 7
  %v890 = vsub.s32 0, %v889
  %v891 = vrot.slane %v754, %v890
  %v892 = vlaneseq
  %v893 = vshrl.u32 %v892, 7
  %v894 = vsub.s32 0, %v893
  %v895 = vrot.slane %v755, %v894
  %v896 = vlaneseq
  %v897 = vshrl.u32 %v896, 7
  %v898 = vsub.s32 0, %v897
  %v899 = vrot.slane %v756, %v898
  %v900 = vlaneseq
  %v901 = vshrl.u32 %v900, 7
  %v902 = vsub.s32 0, %v901
  %v903 = vrot.slane %v757, %v902
  %v904 = vlaneseq
  %v905 = vshrl.u32 %v904, 7
  %v906 = vsub.s32 0, %v905
  %v907 = vrot.slane %v758, %v906
  %v908 = vlaneseq
  %v909 = vshrl.u32 %v908, 7
  %v910 = vsub.s32 0, %v909
  %v911 = vrot.slane %v759, %v910
  %v912 = vlaneseq
  %v913 = vshrl.u32 %v912, 7
  %v914 = vsub.s32 0, %v913
  %v915 = vrot.slane %v760, %v914
  %v916 = vlaneseq
  %v917 = vshrl.u32 %v916, 7
  %v918 = vsub.s32 0, %v917
  %v919 = vrot.slane %v761, %v918
  %v920 = vlaneseq
  %v921 = vshrl.u32 %v920, 7
  %v922 = vsub.s32 0, %v921
  %v923 = vrot.slane %v762, %v922
  %v924 = vlaneseq
  %v925 = vshrl.u32 %v924, 7
  %v926 = vsub.s32 0, %v925
  %v927 = vrot.slane %v763, %v926
  %v928 = vlaneseq
  %v929 = vshrl.u32 %v928, 7
  %v930 = vsub.s32 0, %v929
  %v931 = vrot.slane %v764, %v930
  %v932 = vlaneseq
  %v933 = vshrl.u32 %v932, 7
  %v934 = vsub.s32 0, %v933
  %v935 = vrot.slane %v765, %v934
  %v936 = vlaneseq
  %v937 = vshrl.u32 %v936, 7
  %v938 = vsub.s32 0, %v937
  %v939 = vrot.slane %v766, %v938
  %v940 = vlaneseq
  %v941 = vshrl.u32 %v940, 7
  %v942 = vsub.s32 0, %v941
  %v943 = vrot.slane %v767, %v942
  %v944 = vlaneseq
  %v945 = vshrl.u32 %v944, 7
  %v946 = vsub.s32 0, %v945
  %v947 = vrot.slane %v768, %v946
  %v948 = vlaneseq
  %v949 = vshrl.u32 %v948, 7
  %v950 = vsub.s32 0, %v949
  %v951 = vrot.slane %v769, %v950
  %v952 = vlaneseq
  %v953 = vshrl.u32 %v952, 7
  %v954 = vsub.s32 0, %v953
  %v955 = vrot.slane %v770, %v954
  %v956 = vlaneseq
  %v957 = vshrl.u32 %v956, 7
  %v958 = vsub.s32 0, %v957
  %v959 = vrot.slane %v771, %v958
  %v960 = vlaneseq
  %v961 = vshrl.u32 %v960, 7
  %v962 = vsub.s32 0, %v961
  %v963 = vrot.slane %v772, %v962
  %v964 = vlaneseq
  %v965 = vshrl.u32 %v964, 7
  %v966 = vsub.s32 0, %v965
  %v967 = vrot.slane %v773, %v966
  %v968 = vlaneseq
  %v969 = vshrl.u32 %v968, 7
  %v970 = vsub.s32 0, %v969
  %v971 = vrot.slane %v774, %v970
  %v972 = vlaneseq
  %v973 = vshrl.u32 %v972, 7
  %v974 = vsub.s32 0, %v973
  %v975 = vrot.slane %v775, %v974
  %v976 = vlaneseq
  %v977 = vshrl.u32 %v976, 7
  %v978 = vsub.s32 0, %v977
  %v979 = vrot.slane %v776, %v978
  %v980 = vlaneseq
  %v981 = vshrl.u32 %v980, 7
  %v982 = vsub.s32 0, %v981
  %v983 = vrot.slane %v777, %v982
  %v984 = vlaneseq
  %v985 = vshrl.u32 %v984, 7
  %v986 = vsub.s32 0, %v985
  %v987 = vrot.slane %v778, %v986
  %v988 = vlaneseq
  %v989 = vshrl.u32 %v988, 7
  %v990 = vsub.s32 0, %v989
  %v991 = vrot.slane %v779, %v990
  %v992 = vlaneseq
  %v993 = vshrl.u32 %v992, 7
  %v994 = vsub.s32 0, %v993
  %v995 = vrot.slane %v780, %v994
  %v996 = vlaneseq
  %v997 = vshrl.u32 %v996, 7
  %v998 = vsub.s32 0, %v997
  %v999 = vrot.slane %v781, %v998
  %v1000 = vlaneseq
  %v1001 = vshrl.u32 %v1000, 7
  %v1002 = vsub.s32 0, %v1001
  %v1003 = vrot.slane %v782, %v1002
  %v1004 = vlaneseq
  %v1005 = vshrl.u32 %v1004, 7
  %v1006 = vsub.s32 0, %v1005
  %v1007 = vrot.slane %v783, %v1006
  %v1008 = vlaneseq
  %v1009 = vshrl.u32 %v1008, 7
  %v1010 = vsub.s32 0, %v1009
  %v1011 = vrot.slane %v784, %v1010
  %v1012 = vlaneseq
  %v1013 = vshrl.u32 %v1012, 7
  %v1014 = vsub.s32 0, %v1013
  %v1015 = vrot.slane %v785, %v1014
  %v1016 = vlaneseq
  %v1017 = vshrl.u32 %v1016, 7
  %v1018 = vsub.s32 0, %v1017
  %v1019 = vrot.slane %v786, %v1018
  %v1020 = vlaneseq
  %v1021 = vshrl.u32 %v1020, 7
  %v1022 = vsub.s32 0, %v1021
  %v1023 = vrot.slane %v787, %v1022
  %v1024 = vlaneseq
  %v1025 = vshrl.u32 %v1024, 7
  %v1026 = vsub.s32 0, %v1025
  %v1027 = vrot.slane %v788, %v1026
  %v1028 = vlaneseq
  %v1029 = vshrl.u32 %v1028, 7
  %v1030 = vsub.s32 0, %v1029
  %v1031 = vrot.slane %v789, %v1030
  %v1032 = vlaneseq
  %v1033 = vshrl.u32 %v1032, 7
  %v1034 = vsub.s32 0, %v1033
  %v1035 = vrot.slane %v790, %v1034
  %v1036 = vlaneseq
  %v1037 = vshrl.u32 %v1036, 7
  %v1038 = vsub.s32 0, %v1037
  %v1039 = vrot.slane %v791, %v1038
  %v1040 = vlaneseq
  %v1041 = vshrl.u32 %v1040, 7
  %v1042 = vsub.s32 0, %v1041
  %v1043 = vrot.slane %v792, %v1042
  %v1044 = vlaneseq
  %v1045 = vshrl.u32 %v1044, 7
  %v1046 = vsub.s32 0, %v1045
  %v1047 = vrot.slane %v793, %v1046
  %v1048 = vlaneseq
  %v1049 = vshrl.u32 %v1048, 7
  %v1050 = vsub.s32 0, %v1049
  %v1051 = vrot.slane %v794, %v1050
  %v1052 = vlaneseq
  %v1053 = vshrl.u32 %v1052, 7
  %v1054 = vsub.s32 0, %v1053
  %v1055 = vrot.slane %v795, %v1054
  %v1056 = vlaneseq
  %v1057 = vshrl.u32 %v1056, 7
  %v1058 = vsub.s32 0, %v1057
  %v1059 = vrot.slane %v796, %v1058
  %v1060 = vlaneseq
  %v1061 = vshrl.u32 %v1060, 7
  %v1062 = vsub.s32 0, %v1061
  %v1063 = vrot.slane %v797, %v1062
  %v1064 = vlaneseq
  %v1065 = vshrl.u32 %v1064, 7
  %v1066 = vsub.s32 0, %v1065
  %v1067 = vrot.slane %v798, %v1066
  %v1068 = vlaneseq
  %v1069 = vshrl.u32 %v1068, 7
  %v1070 = vsub.s32 0, %v1069
  %v1071 = vrot.slane %v799, %v1070
  %v1072 = vlaneseq
  %v1073 = vshrl.u32 %v1072, 7
  %v1074 = vsub.s32 0, %v1073
  %v1075 = vrot.slane %v800, %v1074
  %v1076 = vlaneseq
  %v1077 = vshrl.u32 %v1076, 7
  %v1078 = vsub.s32 0, %v1077
  %v1079 = vrot.slane %v801, %v1078
  %v1080 = vlaneseq
  %v1081 = vshrl.u32 %v1080, 7
  %v1082 = vsub.s32 0, %v1081
  %v1083 = vrot.slane %v802, %v1082
  %v1084 = vlaneseq
  %v1085 = vshrl.u32 %v1084, 7
  %v1086 = vsub.s32 0, %v1085
  %v1087 = vrot.slane %v803, %v1086
  %v1088 = vlaneseq
  %v1089 = vshrl.u32 %v1088, 7
  %v1090 = vsub.s32 0, %v1089
  %v1091 = vrot.slane %v804, %v1090
  %v1092 = vlaneseq
  %v1093 = vshrl.u32 %v1092, 7
  %v1094 = vsub.s32 0, %v1093
  %v1095 = vrot.slane %v805, %v1094
  %v1096 = vlaneseq
  %v1097 = vshrl.u32 %v1096, 7
  %v1098 = vsub.s32 0, %v1097
  %v1099 = vrot.slane %v806, %v1098
  %v1100 = vlaneseq
  %v1101 = vshrl.u32 %v1100, 7
  %v1102 = vsub.s32 0, %v1101
  %v1103 = vrot.slane %v807, %v1102
  %v1104 = vlaneseq
  %v1105 = vshrl.u32 %v1104, 7
  %v1106 = vsub.s32 0, %v1105
  %v1107 = vrot.slane %v808, %v1106
  %v1108 = vlaneseq
  %v1109 = vshrl.u32 %v1108, 7
  %v1110 = vsub.s32 0, %v1109
  %v1111 = vrot.slane %v809, %v1110
  %v1112 = vlaneseq
  %v1113 = vshrl.u32 %v1112, 7
  %v1114 = vsub.s32 0, %v1113
  %v1115 = vrot.slane %v810, %v1114
  %v1116 = vlaneseq
  %v1117 = vshrl.u32 %v1116, 7
  %v1118 = vsub.s32 0, %v1117
  %v1119 = vrot.slane %v811, %v1118
  %v1120 = vlaneseq
  %v1121 = vshrl.u32 %v1120, 7
  %v1122 = vsub.s32 0, %v1121
  %v1123 = vrot.slane %v812, %v1122
  %v1124 = vlaneseq
  %v1125 = vshrl.u32 %v1124, 7
  %v1126 = vsub.s32 0, %v1125
  %v1127 = vrot.slane %v813, %v1126
  %v1128 = vlaneseq
  %v1129 = vshrl.u32 %v1128, 7
  %v1130 = vsub.s32 0, %v1129
  %v1131 = vrot.slane %v814, %v1130
  %v1132 = vlaneseq
  %v1133 = vshrl.u32 %v1132, 7
  %v1134 = vsub.s32 0, %v1133
  %v1135 = vrot.slane %v815, %v1134
  %vm1136 = vcmask 1041409
  %v1137 = vsel %vm1136, %v887, %v883
  %vm1138 = vcmask 1042434
  %v1139 = vsel %vm1138, %v891, %v1137
  %vm1140 = vcmask 1043459
  %v1141 = vsel %vm1140, %v895, %v1139
  %vm1142 = vcmask 1044484
  %v1143 = vsel %vm1142, %v899, %v1141
  %vm1144 = vcmask 1045509
  %v1145 = vsel %vm1144, %v903, %v1143
  %vm1146 = vcmask 1046534
  %v1147 = vsel %vm1146, %v907, %v1145
  %vm1148 = vcmask 1047559
  %v1149 = vsel %vm1148, %v911, %v1147
  %v1150 = vsel %vm1136, %v919, %v915
  %v1151 = vsel %vm1138, %v923, %v1150
  %v1152 = vsel %vm1140, %v927, %v1151
  %v1153 = vsel %vm1142, %v931, %v1152
  %v1154 = vsel %vm1144, %v935, %v1153
  %v1155 = vsel %vm1146, %v939, %v1154
  %v1156 = vsel %vm1148, %v943, %v1155
  %v1157 = vsel %vm1136, %v951, %v947
  %v1158 = vsel %vm1138, %v955, %v1157
  %v1159 = vsel %vm1140, %v959, %v1158
  %v1160 = vsel %vm1142, %v963, %v1159
  %v1161 = vsel %vm1144, %v967, %v1160
  %v1162 = vsel %vm1146, %v971, %v1161
  %v1163 = vsel %vm1148, %v975, %v1162
  %v1164 = vsel %vm1136, %v983, %v979
  %v1165 = vsel %vm1138, %v987, %v1164
  %v1166 = vsel %vm1140, %v991, %v1165
  %v1167 = vsel %vm1142, %v995, %v1166
  %v1168 = vsel %vm1144, %v999, %v1167
  %v1169 = vsel %vm1146, %v1003, %v1168
  %v1170 = vsel %vm1148, %v1007, %v1169
  %v1171 = vsel %vm1136, %v1015, %v1011
  %v1172 = vsel %vm1138, %v1019, %v1171
  %v1173 = vsel %vm1140, %v1023, %v1172
  %v1174 = vsel %vm1142, %v1027, %v1173
  %v1175 = vsel %vm1144, %v1031, %v1174
  %v1176 = vsel %vm1146, %v1035, %v1175
  %v1177 = vsel %vm1148, %v1039, %v1176
  %v1178 = vsel %vm1136, %v1047, %v1043
  %v1179 = vsel %vm1138, %v1051, %v1178
  %v1180 = vsel %vm1140, %v1055, %v1179
  %v1181 = vsel %vm1142, %v1059, %v1180
  %v1182 = vsel %vm1144, %v1063, %v1181
  %v1183 = vsel %vm1146, %v1067, %v1182
  %v1184 = vsel %vm1148, %v1071, %v1183
  %v1185 = vsel %vm1136, %v1079, %v1075
  %v1186 = vsel %vm1138, %v1083, %v1185
  %v1187 = vsel %vm1140, %v1087, %v1186
  %v1188 = vsel %vm1142, %v1091, %v1187
  %v1189 = vsel %vm1144, %v1095, %v1188
  %v1190 = vsel %vm1146, %v1099, %v1189
  %v1191 = vsel %vm1148, %v1103, %v1190
  %v1192 = vsel %vm1136, %v1111, %v1107
  %v1193 = vsel %vm1138, %v1115, %v1192
  %v1194 = vsel %vm1140, %v1119, %v1193
  %v1195 = vsel %vm1142, %v1123, %v1194
  %v1196 = vsel %vm1144, %v1127, %v1195
  %v1197 = vsel %vm1146, %v1131, %v1196
  %v1198 = vsel %vm1148, %v1135, %v1197
  %s1207 = scalar_lea.vmem [#allocation2], 16
  %1208 = vst.msk [vmem:[%s1207 + $0x1] sm:$0xff] %vm20, %v1149
  %1209 = vst.msk [vmem:[%s1207 + $0x11] sm:$0xff] %vm20, %v1156
  %1210 = vst.msk [vmem:[%s1207 + $0x21] sm:$0xff] %vm20, %v1163
  %1211 = vst.msk [vmem:[%s1207 + $0x31] sm:$0xff] %vm20, %v1170
  %1212 = vst.msk [vmem:[%s1207 + $0x41] sm:$0xff] %vm20, %v1177
  %1213 = vst.msk [vmem:[%s1207 + $0x51] sm:$0xff] %vm20, %v1184
  %1214 = vst.msk [vmem:[%s1207 + $0x61] sm:$0xff] %vm20, %v1191
  %1215 = vst.msk [vmem:[%s1207 + $0x71] sm:$0xff] %vm20, %v1198
  %s1216 = scalar_lea.vmem %s0, 8
  %v1217 = vld [vmem:[%s1216] sm:$0xff]
  %v1219 = vcombine.high %v1217, %v1217
  %1221 = vxpose.xlu0.b32.start [1/16] %v1217, 128
  %1222 = vxpose.xlu0.b32.cont [2/16] 0.0, 128
  %1223 = vxpose.xlu0.b32.cont [3/16] 0.0, 128
  %1224 = vxpose.xlu0.b32.cont [4/16] 0.0, 128
  %1225 = vxpose.xlu0.b32.cont [5/16] 0.0, 128
  %1226 = vxpose.xlu0.b32.cont [6/16] 0.0, 128
  %1227 = vxpose.xlu0.b32.cont [7/16] 0.0, 128
  %1228 = vxpose.xlu0.b32.cont [8/16] 0.0, 128
  %1229 = vxpose.xlu0.b32.cont [9/16] 0.0, 128
  %1230 = vxpose.xlu0.b32.cont [10/16] 0.0, 128
  %1231 = vxpose.xlu0.b32.cont [11/16] 0.0, 128
  %1232 = vxpose.xlu0.b32.cont [12/16] 0.0, 128
  %1233 = vxpose.xlu0.b32.cont [13/16] 0.0, 128
  %1234 = vxpose.xlu0.b32.cont [14/16] 0.0, 128
  %1235 = vxpose.xlu0.b32.cont [15/16] 0.0, 128
  %1236 = vxpose.xlu0.b32.end [16/16] 0.0, 128
  %v1237 = vpop.trf.xlu0
  %v1238 = vpop.trf.xlu0
  %v1239 = vpop.trf.xlu0
  %v1240 = vpop.trf.xlu0
  %v1241 = vpop.trf.xlu0
  %v1242 = vpop.trf.xlu0
  %v1243 = vpop.trf.xlu0
  %v1244 = vpop.trf.xlu0
  %v1245 = vpop.trf.xlu0
  %v1246 = vpop.trf.xlu0
  %v1247 = vpop.trf.xlu0
  %v1248 = vpop.trf.xlu0
  %v1249 = vpop.trf.xlu0
  %v1250 = vpop.trf.xlu0
  %v1251 = vpop.trf.xlu0
  %v1252 = vpop.trf.xlu0
  %1253 = vxpose.xlu0.b32.start [1/16] %v1219, 128
  %1254 = vxpose.xlu0.b32.cont [2/16] 0.0, 128
  %1255 = vxpose.xlu0.b32.cont [3/16] 0.0, 128
  %1256 = vxpose.xlu0.b32.cont [4/16] 0.0, 128
  %1257 = vxpose.xlu0.b32.cont [5/16] 0.0, 128
  %1258 = vxpose.xlu0.b32.cont [6/16] 0.0, 128
  %1259 = vxpose.xlu0.b32.cont [7/16] 0.0, 128
  %1260 = vxpose.xlu0.b32.cont [8/16] 0.0, 128
  %1261 = vxpose.xlu0.b32.cont [9/16] 0.0, 128
  %1262 = vxpose.xlu0.b32.cont [10/16] 0.0, 128
  %1263 = vxpose.xlu0.b32.cont [11/16] 0.0, 128
  %1264 = vxpose.xlu0.b32.cont [12/16] 0.0, 128
  %1265 = vxpose.xlu0.b32.cont [13/16] 0.0, 128
  %1266 = vxpose.xlu0.b32.cont [14/16] 0.0, 128
  %1267 = vxpose.xlu0.b32.cont [15/16] 0.0, 128
  %1268 = vxpose.xlu0.b32.end [16/16] 0.0, 128
  %v1269 = vpop.trf.xlu0
  %v1270 = vpop.trf.xlu0
  %v1271 = vpop.trf.xlu0
  %v1272 = vpop.trf.xlu0
  %v1273 = vpop.trf.xlu0
  %v1274 = vpop.trf.xlu0
  %v1275 = vpop.trf.xlu0
  %v1276 = vpop.trf.xlu0
  %v1277 = vpop.trf.xlu0
  %v1278 = vpop.trf.xlu0
  %v1279 = vpop.trf.xlu0
  %v1280 = vpop.trf.xlu0
  %v1281 = vpop.trf.xlu0
  %v1282 = vpop.trf.xlu0
  %v1283 = vpop.trf.xlu0
  %v1284 = vpop.trf.xlu0
  %v1285 = vmax.f32 %v1237, %v1239
  %v1286 = vmax.f32 %v1238, %v1240
  %v1287 = vmax.f32 %v1241, %v1243
  %v1288 = vmax.f32 %v1242, %v1244
  %v1289 = vmax.f32 %v1245, %v1247
  %v1290 = vmax.f32 %v1246, %v1248
  %v1291 = vmax.f32 %v1249, %v1251
  %v1292 = vmax.f32 %v1250, %v1252
  %v1293 = vmax.f32 %v1269, %v1271
  %v1294 = vmax.f32 %v1270, %v1272
  %v1295 = vmax.f32 %v1273, %v1275
  %v1296 = vmax.f32 %v1274, %v1276
  %v1297 = vmax.f32 %v1277, %v1279
  %v1298 = vmax.f32 %v1278, %v1280
  %v1299 = vmax.f32 %v1281, %v1283
  %v1300 = vmax.f32 %v1282, %v1284
  %v1317 = vcombine.high %v1285, %v1285
  %v1319 = vunpack.c.l.s4 1983009808
  %v1320 = vunpack.c.0.s8 %v1319
  %v1321 = vlaneseq
  %v1322 = vshrl.u32 %v1321, 7
  %v1323 = vsub.s32 %v1320, %v1322
  %v1324 = vrot.slane %v1285, %v1323
  %v1326 = vunpack.c.l.s4 1983009808
  %v1327 = vunpack.c.0.s8 %v1326
  %v1328 = vlaneseq
  %v1329 = vshrl.u32 %v1328, 7
  %v1330 = vsub.s32 %v1327, %v1329
  %v1331 = vrot.slane %v1317, %v1330
  %v1332 = vcombine.high %v1324, %v1324
  %v1333 = vcombine.high %v1331, %v1331
  %v1334 = vcombine.high %v1286, %v1286
  %v1336 = vunpack.c.l.s4 1983009808
  %v1337 = vunpack.c.0.s8 %v1336
  %v1338 = vlaneseq
  %v1339 = vshrl.u32 %v1338, 7
  %v1340 = vsub.s32 %v1337, %v1339
  %v1341 = vrot.slane %v1286, %v1340
  %v1343 = vunpack.c.l.s4 1983009808
  %v1344 = vunpack.c.0.s8 %v1343
  %v1345 = vlaneseq
  %v1346 = vshrl.u32 %v1345, 7
  %v1347 = vsub.s32 %v1344, %v1346
  %v1348 = vrot.slane %v1334, %v1347
  %v1349 = vcombine.high %v1341, %v1341
  %v1350 = vcombine.high %v1348, %v1348
  %v1351 = vcombine.high %v1287, %v1287
  %v1353 = vunpack.c.l.s4 1983009808
  %v1354 = vunpack.c.0.s8 %v1353
  %v1355 = vlaneseq
  %v1356 = vshrl.u32 %v1355, 7
  %v1357 = vsub.s32 %v1354, %v1356
  %v1358 = vrot.slane %v1287, %v1357
  %v1360 = vunpack.c.l.s4 1983009808
  %v1361 = vunpack.c.0.s8 %v1360
  %v1362 = vlaneseq
  %v1363 = vshrl.u32 %v1362, 7
  %v1364 = vsub.s32 %v1361, %v1363
  %v1365 = vrot.slane %v1351, %v1364
  %v1366 = vcombine.high %v1358, %v1358
  %v1367 = vcombine.high %v1365, %v1365
  %v1368 = vcombine.high %v1288, %v1288
  %v1370 = vunpack.c.l.s4 1983009808
  %v1371 = vunpack.c.0.s8 %v1370
  %v1372 = vlaneseq
  %v1373 = vshrl.u32 %v1372, 7
  %v1374 = vsub.s32 %v1371, %v1373
  %v1375 = vrot.slane %v1288, %v1374
  %v1377 = vunpack.c.l.s4 1983009808
  %v1378 = vunpack.c.0.s8 %v1377
  %v1379 = vlaneseq
  %v1380 = vshrl.u32 %v1379, 7
  %v1381 = vsub.s32 %v1378, %v1380
  %v1382 = vrot.slane %v1368, %v1381
  %v1383 = vcombine.high %v1375, %v1375
  %v1384 = vcombine.high %v1382, %v1382
  %v1385 = vcombine.high %v1289, %v1289
  %v1387 = vunpack.c.l.s4 1983009808
  %v1388 = vunpack.c.0.s8 %v1387
  %v1389 = vlaneseq
  %v1390 = vshrl.u32 %v1389, 7
  %v1391 = vsub.s32 %v1388, %v1390
  %v1392 = vrot.slane %v1289, %v1391
  %v1394 = vunpack.c.l.s4 1983009808
  %v1395 = vunpack.c.0.s8 %v1394
  %v1396 = vlaneseq
  %v1397 = vshrl.u32 %v1396, 7
  %v1398 = vsub.s32 %v1395, %v1397
  %v1399 = vrot.slane %v1385, %v1398
  %v1400 = vcombine.high %v1392, %v1392
  %v1401 = vcombine.high %v1399, %v1399
  %v1402 = vcombine.high %v1290, %v1290
  %v1404 = vunpack.c.l.s4 1983009808
  %v1405 = vunpack.c.0.s8 %v1404
  %v1406 = vlaneseq
  %v1407 = vshrl.u32 %v1406, 7
  %v1408 = vsub.s32 %v1405, %v1407
  %v1409 = vrot.slane %v1290, %v1408
  %v1411 = vunpack.c.l.s4 1983009808
  %v1412 = vunpack.c.0.s8 %v1411
  %v1413 = vlaneseq
  %v1414 = vshrl.u32 %v1413, 7
  %v1415 = vsub.s32 %v1412, %v1414
  %v1416 = vrot.slane %v1402, %v1415
  %v1417 = vcombine.high %v1409, %v1409
  %v1418 = vcombine.high %v1416, %v1416
  %v1419 = vcombine.high %v1291, %v1291
  %v1421 = vunpack.c.l.s4 1983009808
  %v1422 = vunpack.c.0.s8 %v1421
  %v1423 = vlaneseq
  %v1424 = vshrl.u32 %v1423, 7
  %v1425 = vsub.s32 %v1422, %v1424
  %v1426 = vrot.slane %v1291, %v1425
  %v1428 = vunpack.c.l.s4 1983009808
  %v1429 = vunpack.c.0.s8 %v1428
  %v1430 = vlaneseq
  %v1431 = vshrl.u32 %v1430, 7
  %v1432 = vsub.s32 %v1429, %v1431
  %v1433 = vrot.slane %v1419, %v1432
  %v1434 = vcombine.high %v1426, %v1426
  %v1435 = vcombine.high %v1433, %v1433
  %v1436 = vcombine.high %v1292, %v1292
  %v1438 = vunpack.c.l.s4 1983009808
  %v1439 = vunpack.c.0.s8 %v1438
  %v1440 = vlaneseq
  %v1441 = vshrl.u32 %v1440, 7
  %v1442 = vsub.s32 %v1439, %v1441
  %v1443 = vrot.slane %v1292, %v1442
  %v1445 = vunpack.c.l.s4 1983009808
  %v1446 = vunpack.c.0.s8 %v1445
  %v1447 = vlaneseq
  %v1448 = vshrl.u32 %v1447, 7
  %v1449 = vsub.s32 %v1446, %v1448
  %v1450 = vrot.slane %v1436, %v1449
  %v1451 = vcombine.high %v1443, %v1443
  %v1452 = vcombine.high %v1450, %v1450
  %v1453 = vcombine.high %v1293, %v1293
  %v1455 = vunpack.c.l.s4 1983009808
  %v1456 = vunpack.c.0.s8 %v1455
  %v1457 = vlaneseq
  %v1458 = vshrl.u32 %v1457, 7
  %v1459 = vsub.s32 %v1456, %v1458
  %v1460 = vrot.slane %v1293, %v1459
  %v1462 = vunpack.c.l.s4 1983009808
  %v1463 = vunpack.c.0.s8 %v1462
  %v1464 = vlaneseq
  %v1465 = vshrl.u32 %v1464, 7
  %v1466 = vsub.s32 %v1463, %v1465
  %v1467 = vrot.slane %v1453, %v1466
  %v1468 = vcombine.high %v1460, %v1460
  %v1469 = vcombine.high %v1467, %v1467
  %v1470 = vcombine.high %v1294, %v1294
  %v1472 = vunpack.c.l.s4 1983009808
  %v1473 = vunpack.c.0.s8 %v1472
  %v1474 = vlaneseq
  %v1475 = vshrl.u32 %v1474, 7
  %v1476 = vsub.s32 %v1473, %v1475
  %v1477 = vrot.slane %v1294, %v1476
  %v1479 = vunpack.c.l.s4 1983009808
  %v1480 = vunpack.c.0.s8 %v1479
  %v1481 = vlaneseq
  %v1482 = vshrl.u32 %v1481, 7
  %v1483 = vsub.s32 %v1480, %v1482
  %v1484 = vrot.slane %v1470, %v1483
  %v1485 = vcombine.high %v1477, %v1477
  %v1486 = vcombine.high %v1484, %v1484
  %v1487 = vcombine.high %v1295, %v1295
  %v1489 = vunpack.c.l.s4 1983009808
  %v1490 = vunpack.c.0.s8 %v1489
  %v1491 = vlaneseq
  %v1492 = vshrl.u32 %v1491, 7
  %v1493 = vsub.s32 %v1490, %v1492
  %v1494 = vrot.slane %v1295, %v1493
  %v1496 = vunpack.c.l.s4 1983009808
  %v1497 = vunpack.c.0.s8 %v1496
  %v1498 = vlaneseq
  %v1499 = vshrl.u32 %v1498, 7
  %v1500 = vsub.s32 %v1497, %v1499
  %v1501 = vrot.slane %v1487, %v1500
  %v1502 = vcombine.high %v1494, %v1494
  %v1503 = vcombine.high %v1501, %v1501
  %v1504 = vcombine.high %v1296, %v1296
  %v1506 = vunpack.c.l.s4 1983009808
  %v1507 = vunpack.c.0.s8 %v1506
  %v1508 = vlaneseq
  %v1509 = vshrl.u32 %v1508, 7
  %v1510 = vsub.s32 %v1507, %v1509
  %v1511 = vrot.slane %v1296, %v1510
  %v1513 = vunpack.c.l.s4 1983009808
  %v1514 = vunpack.c.0.s8 %v1513
  %v1515 = vlaneseq
  %v1516 = vshrl.u32 %v1515, 7
  %v1517 = vsub.s32 %v1514, %v1516
  %v1518 = vrot.slane %v1504, %v1517
  %v1519 = vcombine.high %v1511, %v1511
  %v1520 = vcombine.high %v1518, %v1518
  %v1521 = vcombine.high %v1297, %v1297
  %v1523 = vunpack.c.l.s4 1983009808
  %v1524 = vunpack.c.0.s8 %v1523
  %v1525 = vlaneseq
  %v1526 = vshrl.u32 %v1525, 7
  %v1527 = vsub.s32 %v1524, %v1526
  %v1528 = vrot.slane %v1297, %v1527
  %v1530 = vunpack.c.l.s4 1983009808
  %v1531 = vunpack.c.0.s8 %v1530
  %v1532 = vlaneseq
  %v1533 = vshrl.u32 %v1532, 7
  %v1534 = vsub.s32 %v1531, %v1533
  %v1535 = vrot.slane %v1521, %v1534
  %v1536 = vcombine.high %v1528, %v1528
  %v1537 = vcombine.high %v1535, %v1535
  %v1538 = vcombine.high %v1298, %v1298
  %v1540 = vunpack.c.l.s4 1983009808
  %v1541 = vunpack.c.0.s8 %v1540
  %v1542 = vlaneseq
  %v1543 = vshrl.u32 %v1542, 7
  %v1544 = vsub.s32 %v1541, %v1543
  %v1545 = vrot.slane %v1298, %v1544
  %v1547 = vunpack.c.l.s4 1983009808
  %v1548 = vunpack.c.0.s8 %v1547
  %v1549 = vlaneseq
  %v1550 = vshrl.u32 %v1549, 7
  %v1551 = vsub.s32 %v1548, %v1550
  %v1552 = vrot.slane %v1538, %v1551
  %v1553 = vcombine.high %v1545, %v1545
  %v1554 = vcombine.high %v1552, %v1552
  %v1555 = vcombine.high %v1299, %v1299
  %v1557 = vunpack.c.l.s4 1983009808
  %v1558 = vunpack.c.0.s8 %v1557
  %v1559 = vlaneseq
  %v1560 = vshrl.u32 %v1559, 7
  %v1561 = vsub.s32 %v1558, %v1560
  %v1562 = vrot.slane %v1299, %v1561
  %v1564 = vunpack.c.l.s4 1983009808
  %v1565 = vunpack.c.0.s8 %v1564
  %v1566 = vlaneseq
  %v1567 = vshrl.u32 %v1566, 7
  %v1568 = vsub.s32 %v1565, %v1567
  %v1569 = vrot.slane %v1555, %v1568
  %v1570 = vcombine.high %v1562, %v1562
  %v1571 = vcombine.high %v1569, %v1569
  %v1572 = vcombine.high %v1300, %v1300
  %v1574 = vunpack.c.l.s4 1983009808
  %v1575 = vunpack.c.0.s8 %v1574
  %v1576 = vlaneseq
  %v1577 = vshrl.u32 %v1576, 7
  %v1578 = vsub.s32 %v1575, %v1577
  %v1579 = vrot.slane %v1300, %v1578
  %v1581 = vunpack.c.l.s4 1983009808
  %v1582 = vunpack.c.0.s8 %v1581
  %v1583 = vlaneseq
  %v1584 = vshrl.u32 %v1583, 7
  %v1585 = vsub.s32 %v1582, %v1584
  %v1586 = vrot.slane %v1572, %v1585
  %v1587 = vcombine.high %v1579, %v1579
  %v1588 = vcombine.high %v1586, %v1586
  %v1653 = vrot.slane %v1324, 7
  %v1654 = vrot.slane %v1653, 2
  %v1655 = vrot.slane %v1332, 7
  %v1656 = vrot.slane %v1655, 2
  %v1657 = vrot.slane %v1331, 7
  %v1658 = vrot.slane %v1657, 2
  %v1659 = vrot.slane %v1333, 7
  %v1660 = vrot.slane %v1659, 2
  %v1661 = vrot.slane %v1341, 7
  %v1662 = vrot.slane %v1661, 2
  %v1663 = vrot.slane %v1349, 7
  %v1664 = vrot.slane %v1663, 2
  %v1665 = vrot.slane %v1348, 7
  %v1666 = vrot.slane %v1665, 2
  %v1667 = vrot.slane %v1350, 7
  %v1668 = vrot.slane %v1667, 2
  %v1669 = vrot.slane %v1358, 7
  %v1670 = vrot.slane %v1669, 2
  %v1671 = vrot.slane %v1366, 7
  %v1672 = vrot.slane %v1671, 2
  %v1673 = vrot.slane %v1365, 7
  %v1674 = vrot.slane %v1673, 2
  %v1675 = vrot.slane %v1367, 7
  %v1676 = vrot.slane %v1675, 2
  %v1677 = vrot.slane %v1375, 7
  %v1678 = vrot.slane %v1677, 2
  %v1679 = vrot.slane %v1383, 7
  %v1680 = vrot.slane %v1679, 2
  %v1681 = vrot.slane %v1382, 7
  %v1682 = vrot.slane %v1681, 2
  %v1683 = vrot.slane %v1384, 7
  %v1684 = vrot.slane %v1683, 2
  %v1685 = vrot.slane %v1392, 7
  %v1686 = vrot.slane %v1685, 2
  %v1687 = vrot.slane %v1400, 7
  %v1688 = vrot.slane %v1687, 2
  %v1689 = vrot.slane %v1399, 7
  %v1690 = vrot.slane %v1689, 2
  %v1691 = vrot.slane %v1401, 7
  %v1692 = vrot.slane %v1691, 2
  %v1693 = vrot.slane %v1409, 7
  %v1694 = vrot.slane %v1693, 2
  %v1695 = vrot.slane %v1417, 7
  %v1696 = vrot.slane %v1695, 2
  %v1697 = vrot.slane %v1416, 7
  %v1698 = vrot.slane %v1697, 2
  %v1699 = vrot.slane %v1418, 7
  %v1700 = vrot.slane %v1699, 2
  %v1701 = vrot.slane %v1426, 7
  %v1702 = vrot.slane %v1701, 2
  %v1703 = vrot.slane %v1434, 7
  %v1704 = vrot.slane %v1703, 2
  %v1705 = vrot.slane %v1433, 7
  %v1706 = vrot.slane %v1705, 2
  %v1707 = vrot.slane %v1435, 7
  %v1708 = vrot.slane %v1707, 2
  %v1709 = vrot.slane %v1443, 7
  %v1710 = vrot.slane %v1709, 2
  %v1711 = vrot.slane %v1451, 7
  %v1712 = vrot.slane %v1711, 2
  %v1713 = vrot.slane %v1450, 7
  %v1714 = vrot.slane %v1713, 2
  %v1715 = vrot.slane %v1452, 7
  %v1716 = vrot.slane %v1715, 2
  %v1717 = vrot.slane %v1460, 7
  %v1718 = vrot.slane %v1717, 2
  %v1719 = vrot.slane %v1468, 7
  %v1720 = vrot.slane %v1719, 2
  %v1721 = vrot.slane %v1467, 7
  %v1722 = vrot.slane %v1721, 2
  %v1723 = vrot.slane %v1469, 7
  %v1724 = vrot.slane %v1723, 2
  %v1725 = vrot.slane %v1477, 7
  %v1726 = vrot.slane %v1725, 2
  %v1727 = vrot.slane %v1485, 7
  %v1728 = vrot.slane %v1727, 2
  %v1729 = vrot.slane %v1484, 7
  %v1730 = vrot.slane %v1729, 2
  %v1731 = vrot.slane %v1486, 7
  %v1732 = vrot.slane %v1731, 2
  %v1733 = vrot.slane %v1494, 7
  %v1734 = vrot.slane %v1733, 2
  %v1735 = vrot.slane %v1502, 7
  %v1736 = vrot.slane %v1735, 2
  %v1737 = vrot.slane %v1501, 7
  %v1738 = vrot.slane %v1737, 2
  %v1739 = vrot.slane %v1503, 7
  %v1740 = vrot.slane %v1739, 2
  %v1741 = vrot.slane %v1511, 7
  %v1742 = vrot.slane %v1741, 2
  %v1743 = vrot.slane %v1519, 7
  %v1744 = vrot.slane %v1743, 2
  %v1745 = vrot.slane %v1518, 7
  %v1746 = vrot.slane %v1745, 2
  %v1747 = vrot.slane %v1520, 7
  %v1748 = vrot.slane %v1747, 2
  %v1749 = vrot.slane %v1528, 7
  %v1750 = vrot.slane %v1749, 2
  %v1751 = vrot.slane %v1536, 7
  %v1752 = vrot.slane %v1751, 2
  %v1753 = vrot.slane %v1535, 7
  %v1754 = vrot.slane %v1753, 2
  %v1755 = vrot.slane %v1537, 7
  %v1756 = vrot.slane %v1755, 2
  %v1757 = vrot.slane %v1545, 7
  %v1758 = vrot.slane %v1757, 2
  %v1759 = vrot.slane %v1553, 7
  %v1760 = vrot.slane %v1759, 2
  %v1761 = vrot.slane %v1552, 7
  %v1762 = vrot.slane %v1761, 2
  %v1763 = vrot.slane %v1554, 7
  %v1764 = vrot.slane %v1763, 2
  %v1765 = vrot.slane %v1562, 7
  %v1766 = vrot.slane %v1765, 2
  %v1767 = vrot.slane %v1570, 7
  %v1768 = vrot.slane %v1767, 2
  %v1769 = vrot.slane %v1569, 7
  %v1770 = vrot.slane %v1769, 2
  %v1771 = vrot.slane %v1571, 7
  %v1772 = vrot.slane %v1771, 2
  %v1773 = vrot.slane %v1579, 7
  %v1774 = vrot.slane %v1773, 2
  %v1775 = vrot.slane %v1587, 7
  %v1776 = vrot.slane %v1775, 2
  %v1777 = vrot.slane %v1586, 7
  %v1778 = vrot.slane %v1777, 2
  %v1779 = vrot.slane %v1588, 7
  %v1780 = vrot.slane %v1779, 2
  %v1845 = vmax.f32 %v1324, %v1654
  %v1846 = vmax.f32 %v1332, %v1656
  %v1847 = vmax.f32 %v1331, %v1658
  %v1848 = vmax.f32 %v1333, %v1660
  %v1849 = vmax.f32 %v1341, %v1662
  %v1850 = vmax.f32 %v1349, %v1664
  %v1851 = vmax.f32 %v1348, %v1666
  %v1852 = vmax.f32 %v1350, %v1668
  %v1853 = vmax.f32 %v1358, %v1670
  %v1854 = vmax.f32 %v1366, %v1672
  %v1855 = vmax.f32 %v1365, %v1674
  %v1856 = vmax.f32 %v1367, %v1676
  %v1857 = vmax.f32 %v1375, %v1678
  %v1858 = vmax.f32 %v1383, %v1680
  %v1859 = vmax.f32 %v1382, %v1682
  %v1860 = vmax.f32 %v1384, %v1684
  %v1861 = vmax.f32 %v1392, %v1686
  %v1862 = vmax.f32 %v1400, %v1688
  %v1863 = vmax.f32 %v1399, %v1690
  %v1864 = vmax.f32 %v1401, %v1692
  %v1865 = vmax.f32 %v1409, %v1694
  %v1866 = vmax.f32 %v1417, %v1696
  %v1867 = vmax.f32 %v1416, %v1698
  %v1868 = vmax.f32 %v1418, %v1700
  %v1869 = vmax.f32 %v1426, %v1702
  %v1870 = vmax.f32 %v1434, %v1704
  %v1871 = vmax.f32 %v1433, %v1706
  %v1872 = vmax.f32 %v1435, %v1708
  %v1873 = vmax.f32 %v1443, %v1710
  %v1874 = vmax.f32 %v1451, %v1712
  %v1875 = vmax.f32 %v1450, %v1714
  %v1876 = vmax.f32 %v1452, %v1716
  %v1877 = vmax.f32 %v1460, %v1718
  %v1878 = vmax.f32 %v1468, %v1720
  %v1879 = vmax.f32 %v1467, %v1722
  %v1880 = vmax.f32 %v1469, %v1724
  %v1881 = vmax.f32 %v1477, %v1726
  %v1882 = vmax.f32 %v1485, %v1728
  %v1883 = vmax.f32 %v1484, %v1730
  %v1884 = vmax.f32 %v1486, %v1732
  %v1885 = vmax.f32 %v1494, %v1734
  %v1886 = vmax.f32 %v1502, %v1736
  %v1887 = vmax.f32 %v1501, %v1738
  %v1888 = vmax.f32 %v1503, %v1740
  %v1889 = vmax.f32 %v1511, %v1742
  %v1890 = vmax.f32 %v1519, %v1744
  %v1891 = vmax.f32 %v1518, %v1746
  %v1892 = vmax.f32 %v1520, %v1748
  %v1893 = vmax.f32 %v1528, %v1750
  %v1894 = vmax.f32 %v1536, %v1752
  %v1895 = vmax.f32 %v1535, %v1754
  %v1896 = vmax.f32 %v1537, %v1756
  %v1897 = vmax.f32 %v1545, %v1758
  %v1898 = vmax.f32 %v1553, %v1760
  %v1899 = vmax.f32 %v1552, %v1762
  %v1900 = vmax.f32 %v1554, %v1764
  %v1901 = vmax.f32 %v1562, %v1766
  %v1902 = vmax.f32 %v1570, %v1768
  %v1903 = vmax.f32 %v1569, %v1770
  %v1904 = vmax.f32 %v1571, %v1772
  %v1905 = vmax.f32 %v1579, %v1774
  %v1906 = vmax.f32 %v1587, %v1776
  %v1907 = vmax.f32 %v1586, %v1778
  %v1908 = vmax.f32 %v1588, %v1780
  %v1973 = vlaneseq
  %v1974 = vshrl.u32 %v1973, 7
  %v1975 = vsub.s32 0, %v1974
  %v1976 = vrot.slane %v1845, %v1975
  %v1977 = vlaneseq
  %v1978 = vshrl.u32 %v1977, 7
  %v1979 = vsub.s32 0, %v1978
  %v1980 = vrot.slane %v1846, %v1979
  %v1981 = vlaneseq
  %v1982 = vshrl.u32 %v1981, 7
  %v1983 = vsub.s32 0, %v1982
  %v1984 = vrot.slane %v1847, %v1983
  %v1985 = vlaneseq
  %v1986 = vshrl.u32 %v1985, 7
  %v1987 = vsub.s32 0, %v1986
  %v1988 = vrot.slane %v1848, %v1987
  %v1989 = vlaneseq
  %v1990 = vshrl.u32 %v1989, 7
  %v1991 = vsub.s32 0, %v1990
  %v1992 = vrot.slane %v1849, %v1991
  %v1993 = vlaneseq
  %v1994 = vshrl.u32 %v1993, 7
  %v1995 = vsub.s32 0, %v1994
  %v1996 = vrot.slane %v1850, %v1995
  %v1997 = vlaneseq
  %v1998 = vshrl.u32 %v1997, 7
  %v1999 = vsub.s32 0, %v1998
  %v2000 = vrot.slane %v1851, %v1999
  %v2001 = vlaneseq
  %v2002 = vshrl.u32 %v2001, 7
  %v2003 = vsub.s32 0, %v2002
  %v2004 = vrot.slane %v1852, %v2003
  %v2005 = vlaneseq
  %v2006 = vshrl.u32 %v2005, 7
  %v2007 = vsub.s32 0, %v2006
  %v2008 = vrot.slane %v1853, %v2007
  %v2009 = vlaneseq
  %v2010 = vshrl.u32 %v2009, 7
  %v2011 = vsub.s32 0, %v2010
  %v2012 = vrot.slane %v1854, %v2011
  %v2013 = vlaneseq
  %v2014 = vshrl.u32 %v2013, 7
  %v2015 = vsub.s32 0, %v2014
  %v2016 = vrot.slane %v1855, %v2015
  %v2017 = vlaneseq
  %v2018 = vshrl.u32 %v2017, 7
  %v2019 = vsub.s32 0, %v2018
  %v2020 = vrot.slane %v1856, %v2019
  %v2021 = vlaneseq
  %v2022 = vshrl.u32 %v2021, 7
  %v2023 = vsub.s32 0, %v2022
  %v2024 = vrot.slane %v1857, %v2023
  %v2025 = vlaneseq
  %v2026 = vshrl.u32 %v2025, 7
  %v2027 = vsub.s32 0, %v2026
  %v2028 = vrot.slane %v1858, %v2027
  %v2029 = vlaneseq
  %v2030 = vshrl.u32 %v2029, 7
  %v2031 = vsub.s32 0, %v2030
  %v2032 = vrot.slane %v1859, %v2031
  %v2033 = vlaneseq
  %v2034 = vshrl.u32 %v2033, 7
  %v2035 = vsub.s32 0, %v2034
  %v2036 = vrot.slane %v1860, %v2035
  %v2037 = vlaneseq
  %v2038 = vshrl.u32 %v2037, 7
  %v2039 = vsub.s32 0, %v2038
  %v2040 = vrot.slane %v1861, %v2039
  %v2041 = vlaneseq
  %v2042 = vshrl.u32 %v2041, 7
  %v2043 = vsub.s32 0, %v2042
  %v2044 = vrot.slane %v1862, %v2043
  %v2045 = vlaneseq
  %v2046 = vshrl.u32 %v2045, 7
  %v2047 = vsub.s32 0, %v2046
  %v2048 = vrot.slane %v1863, %v2047
  %v2049 = vlaneseq
  %v2050 = vshrl.u32 %v2049, 7
  %v2051 = vsub.s32 0, %v2050
  %v2052 = vrot.slane %v1864, %v2051
  %v2053 = vlaneseq
  %v2054 = vshrl.u32 %v2053, 7
  %v2055 = vsub.s32 0, %v2054
  %v2056 = vrot.slane %v1865, %v2055
  %v2057 = vlaneseq
  %v2058 = vshrl.u32 %v2057, 7
  %v2059 = vsub.s32 0, %v2058
  %v2060 = vrot.slane %v1866, %v2059
  %v2061 = vlaneseq
  %v2062 = vshrl.u32 %v2061, 7
  %v2063 = vsub.s32 0, %v2062
  %v2064 = vrot.slane %v1867, %v2063
  %v2065 = vlaneseq
  %v2066 = vshrl.u32 %v2065, 7
  %v2067 = vsub.s32 0, %v2066
  %v2068 = vrot.slane %v1868, %v2067
  %v2069 = vlaneseq
  %v2070 = vshrl.u32 %v2069, 7
  %v2071 = vsub.s32 0, %v2070
  %v2072 = vrot.slane %v1869, %v2071
  %v2073 = vlaneseq
  %v2074 = vshrl.u32 %v2073, 7
  %v2075 = vsub.s32 0, %v2074
  %v2076 = vrot.slane %v1870, %v2075
  %v2077 = vlaneseq
  %v2078 = vshrl.u32 %v2077, 7
  %v2079 = vsub.s32 0, %v2078
  %v2080 = vrot.slane %v1871, %v2079
  %v2081 = vlaneseq
  %v2082 = vshrl.u32 %v2081, 7
  %v2083 = vsub.s32 0, %v2082
  %v2084 = vrot.slane %v1872, %v2083
  %v2085 = vlaneseq
  %v2086 = vshrl.u32 %v2085, 7
  %v2087 = vsub.s32 0, %v2086
  %v2088 = vrot.slane %v1873, %v2087
  %v2089 = vlaneseq
  %v2090 = vshrl.u32 %v2089, 7
  %v2091 = vsub.s32 0, %v2090
  %v2092 = vrot.slane %v1874, %v2091
  %v2093 = vlaneseq
  %v2094 = vshrl.u32 %v2093, 7
  %v2095 = vsub.s32 0, %v2094
  %v2096 = vrot.slane %v1875, %v2095
  %v2097 = vlaneseq
  %v2098 = vshrl.u32 %v2097, 7
  %v2099 = vsub.s32 0, %v2098
  %v2100 = vrot.slane %v1876, %v2099
  %v2101 = vlaneseq
  %v2102 = vshrl.u32 %v2101, 7
  %v2103 = vsub.s32 0, %v2102
  %v2104 = vrot.slane %v1877, %v2103
  %v2105 = vlaneseq
  %v2106 = vshrl.u32 %v2105, 7
  %v2107 = vsub.s32 0, %v2106
  %v2108 = vrot.slane %v1878, %v2107
  %v2109 = vlaneseq
  %v2110 = vshrl.u32 %v2109, 7
  %v2111 = vsub.s32 0, %v2110
  %v2112 = vrot.slane %v1879, %v2111
  %v2113 = vlaneseq
  %v2114 = vshrl.u32 %v2113, 7
  %v2115 = vsub.s32 0, %v2114
  %v2116 = vrot.slane %v1880, %v2115
  %v2117 = vlaneseq
  %v2118 = vshrl.u32 %v2117, 7
  %v2119 = vsub.s32 0, %v2118
  %v2120 = vrot.slane %v1881, %v2119
  %v2121 = vlaneseq
  %v2122 = vshrl.u32 %v2121, 7
  %v2123 = vsub.s32 0, %v2122
  %v2124 = vrot.slane %v1882, %v2123
  %v2125 = vlaneseq
  %v2126 = vshrl.u32 %v2125, 7
  %v2127 = vsub.s32 0, %v2126
  %v2128 = vrot.slane %v1883, %v2127
  %v2129 = vlaneseq
  %v2130 = vshrl.u32 %v2129, 7
  %v2131 = vsub.s32 0, %v2130
  %v2132 = vrot.slane %v1884, %v2131
  %v2133 = vlaneseq
  %v2134 = vshrl.u32 %v2133, 7
  %v2135 = vsub.s32 0, %v2134
  %v2136 = vrot.slane %v1885, %v2135
  %v2137 = vlaneseq
  %v2138 = vshrl.u32 %v2137, 7
  %v2139 = vsub.s32 0, %v2138
  %v2140 = vrot.slane %v1886, %v2139
  %v2141 = vlaneseq
  %v2142 = vshrl.u32 %v2141, 7
  %v2143 = vsub.s32 0, %v2142
  %v2144 = vrot.slane %v1887, %v2143
  %v2145 = vlaneseq
  %v2146 = vshrl.u32 %v2145, 7
  %v2147 = vsub.s32 0, %v2146
  %v2148 = vrot.slane %v1888, %v2147
  %v2149 = vlaneseq
  %v2150 = vshrl.u32 %v2149, 7
  %v2151 = vsub.s32 0, %v2150
  %v2152 = vrot.slane %v1889, %v2151
  %v2153 = vlaneseq
  %v2154 = vshrl.u32 %v2153, 7
  %v2155 = vsub.s32 0, %v2154
  %v2156 = vrot.slane %v1890, %v2155
  %v2157 = vlaneseq
  %v2158 = vshrl.u32 %v2157, 7
  %v2159 = vsub.s32 0, %v2158
  %v2160 = vrot.slane %v1891, %v2159
  %v2161 = vlaneseq
  %v2162 = vshrl.u32 %v2161, 7
  %v2163 = vsub.s32 0, %v2162
  %v2164 = vrot.slane %v1892, %v2163
  %v2165 = vlaneseq
  %v2166 = vshrl.u32 %v2165, 7
  %v2167 = vsub.s32 0, %v2166
  %v2168 = vrot.slane %v1893, %v2167
  %v2169 = vlaneseq
  %v2170 = vshrl.u32 %v2169, 7
  %v2171 = vsub.s32 0, %v2170
  %v2172 = vrot.slane %v1894, %v2171
  %v2173 = vlaneseq
  %v2174 = vshrl.u32 %v2173, 7
  %v2175 = vsub.s32 0, %v2174
  %v2176 = vrot.slane %v1895, %v2175
  %v2177 = vlaneseq
  %v2178 = vshrl.u32 %v2177, 7
  %v2179 = vsub.s32 0, %v2178
  %v2180 = vrot.slane %v1896, %v2179
  %v2181 = vlaneseq
  %v2182 = vshrl.u32 %v2181, 7
  %v2183 = vsub.s32 0, %v2182
  %v2184 = vrot.slane %v1897, %v2183
  %v2185 = vlaneseq
  %v2186 = vshrl.u32 %v2185, 7
  %v2187 = vsub.s32 0, %v2186
  %v2188 = vrot.slane %v1898, %v2187
  %v2189 = vlaneseq
  %v2190 = vshrl.u32 %v2189, 7
  %v2191 = vsub.s32 0, %v2190
  %v2192 = vrot.slane %v1899, %v2191
  %v2193 = vlaneseq
  %v2194 = vshrl.u32 %v2193, 7
  %v2195 = vsub.s32 0, %v2194
  %v2196 = vrot.slane %v1900, %v2195
  %v2197 = vlaneseq
  %v2198 = vshrl.u32 %v2197, 7
  %v2199 = vsub.s32 0, %v2198
  %v2200 = vrot.slane %v1901, %v2199
  %v2201 = vlaneseq
  %v2202 = vshrl.u32 %v2201, 7
  %v2203 = vsub.s32 0, %v2202
  %v2204 = vrot.slane %v1902, %v2203
  %v2205 = vlaneseq
  %v2206 = vshrl.u32 %v2205, 7
  %v2207 = vsub.s32 0, %v2206
  %v2208 = vrot.slane %v1903, %v2207
  %v2209 = vlaneseq
  %v2210 = vshrl.u32 %v2209, 7
  %v2211 = vsub.s32 0, %v2210
  %v2212 = vrot.slane %v1904, %v2211
  %v2213 = vlaneseq
  %v2214 = vshrl.u32 %v2213, 7
  %v2215 = vsub.s32 0, %v2214
  %v2216 = vrot.slane %v1905, %v2215
  %v2217 = vlaneseq
  %v2218 = vshrl.u32 %v2217, 7
  %v2219 = vsub.s32 0, %v2218
  %v2220 = vrot.slane %v1906, %v2219
  %v2221 = vlaneseq
  %v2222 = vshrl.u32 %v2221, 7
  %v2223 = vsub.s32 0, %v2222
  %v2224 = vrot.slane %v1907, %v2223
  %v2225 = vlaneseq
  %v2226 = vshrl.u32 %v2225, 7
  %v2227 = vsub.s32 0, %v2226
  %v2228 = vrot.slane %v1908, %v2227
  %v2229 = vsel %vm1136, %v1980, %v1976
  %v2230 = vsel %vm1138, %v1984, %v2229
  %v2231 = vsel %vm1140, %v1988, %v2230
  %v2232 = vsel %vm1142, %v1992, %v2231
  %v2233 = vsel %vm1144, %v1996, %v2232
  %v2234 = vsel %vm1146, %v2000, %v2233
  %v2235 = vsel %vm1148, %v2004, %v2234
  %v2236 = vsel %vm1136, %v2012, %v2008
  %v2237 = vsel %vm1138, %v2016, %v2236
  %v2238 = vsel %vm1140, %v2020, %v2237
  %v2239 = vsel %vm1142, %v2024, %v2238
  %v2240 = vsel %vm1144, %v2028, %v2239
  %v2241 = vsel %vm1146, %v2032, %v2240
  %v2242 = vsel %vm1148, %v2036, %v2241
  %v2243 = vsel %vm1136, %v2044, %v2040
  %v2244 = vsel %vm1138, %v2048, %v2243
  %v2245 = vsel %vm1140, %v2052, %v2244
  %v2246 = vsel %vm1142, %v2056, %v2245
  %v2247 = vsel %vm1144, %v2060, %v2246
  %v2248 = vsel %vm1146, %v2064, %v2247
  %v2249 = vsel %vm1148, %v2068, %v2248
  %v2250 = vsel %vm1136, %v2076, %v2072
  %v2251 = vsel %vm1138, %v2080, %v2250
  %v2252 = vsel %vm1140, %v2084, %v2251
  %v2253 = vsel %vm1142, %v2088, %v2252
  %v2254 = vsel %vm1144, %v2092, %v2253
  %v2255 = vsel %vm1146, %v2096, %v2254
  %v2256 = vsel %vm1148, %v2100, %v2255
  %v2257 = vsel %vm1136, %v2108, %v2104
  %v2258 = vsel %vm1138, %v2112, %v2257
  %v2259 = vsel %vm1140, %v2116, %v2258
  %v2260 = vsel %vm1142, %v2120, %v2259
  %v2261 = vsel %vm1144, %v2124, %v2260
  %v2262 = vsel %vm1146, %v2128, %v2261
  %v2263 = vsel %vm1148, %v2132, %v2262
  %v2264 = vsel %vm1136, %v2140, %v2136
  %v2265 = vsel %vm1138, %v2144, %v2264
  %v2266 = vsel %vm1140, %v2148, %v2265
  %v2267 = vsel %vm1142, %v2152, %v2266
  %v2268 = vsel %vm1144, %v2156, %v2267
  %v2269 = vsel %vm1146, %v2160, %v2268
  %v2270 = vsel %vm1148, %v2164, %v2269
  %v2271 = vsel %vm1136, %v2172, %v2168
  %v2272 = vsel %vm1138, %v2176, %v2271
  %v2273 = vsel %vm1140, %v2180, %v2272
  %v2274 = vsel %vm1142, %v2184, %v2273
  %v2275 = vsel %vm1144, %v2188, %v2274
  %v2276 = vsel %vm1146, %v2192, %v2275
  %v2277 = vsel %vm1148, %v2196, %v2276
  %v2278 = vsel %vm1136, %v2204, %v2200
  %v2279 = vsel %vm1138, %v2208, %v2278
  %v2280 = vsel %vm1140, %v2212, %v2279
  %v2281 = vsel %vm1142, %v2216, %v2280
  %v2282 = vsel %vm1144, %v2220, %v2281
  %v2283 = vsel %vm1146, %v2224, %v2282
  %v2284 = vsel %vm1148, %v2228, %v2283
  %s2293 = scalar_lea.vmem [#allocation2], 176
  %2294 = vst.msk [vmem:[%s2293 + $0x1] sm:$0xff] %vm20, %v2235
  %2295 = vst.msk [vmem:[%s2293 + $0x11] sm:$0xff] %vm20, %v2242
  %2296 = vst.msk [vmem:[%s2293 + $0x21] sm:$0xff] %vm20, %v2249
  %2297 = vst.msk [vmem:[%s2293 + $0x31] sm:$0xff] %vm20, %v2256
  %2298 = vst.msk [vmem:[%s2293 + $0x41] sm:$0xff] %vm20, %v2263
  %2299 = vst.msk [vmem:[%s2293 + $0x51] sm:$0xff] %vm20, %v2270
  %2300 = vst.msk [vmem:[%s2293 + $0x61] sm:$0xff] %vm20, %v2277
  %2301 = vst.msk [vmem:[%s2293 + $0x71] sm:$0xff] %vm20, %v2284
  %v2302 = vld [vmem:[#allocation2] sm:$0xff]
  %v2303 = vld [vmem:[#allocation2 + $0x10] sm:$0xff]
  %v2304 = vld [vmem:[#allocation2 + $0x20] sm:$0xff]
  %v2305 = vld [vmem:[#allocation2 + $0x30] sm:$0xff]
  %v2306 = vld [vmem:[#allocation2 + $0x40] sm:$0xff]
  %v2307 = vld [vmem:[#allocation2 + $0x50] sm:$0xff]
  %v2308 = vld [vmem:[#allocation2 + $0x60] sm:$0xff]
  %v2309 = vld [vmem:[#allocation2 + $0x70] sm:$0xff]
  %v2310 = vld [vmem:[#allocation2 + $0xa0] sm:$0xff]
  %v2311 = vld [vmem:[#allocation2 + $0xb0] sm:$0xff]
  %v2312 = vld [vmem:[#allocation2 + $0xc0] sm:$0xff]
  %v2313 = vld [vmem:[#allocation2 + $0xd0] sm:$0xff]
  %v2314 = vld [vmem:[#allocation2 + $0xe0] sm:$0xff]
  %v2315 = vld [vmem:[#allocation2 + $0xf0] sm:$0xff]
  %v2316 = vld [vmem:[#allocation2 + $0x100] sm:$0xff]
  %v2317 = vld [vmem:[#allocation2 + $0x110] sm:$0xff]
  %2318 = vst.msk [vmem:[#allocation4] sm:$0xff] %vm20, %v2302
  %2319 = vst.msk [vmem:[#allocation4 + $0x8] sm:$0xff] %vm20, %v2303
  %2320 = vst.msk [vmem:[#allocation4 + $0x10] sm:$0xff] %vm20, %v2304
  %2321 = vst.msk [vmem:[#allocation4 + $0x18] sm:$0xff] %vm20, %v2305
  %2322 = vst.msk [vmem:[#allocation4 + $0x20] sm:$0xff] %vm20, %v2306
  %2323 = vst.msk [vmem:[#allocation4 + $0x28] sm:$0xff] %vm20, %v2307
  %2324 = vst.msk [vmem:[#allocation4 + $0x30] sm:$0xff] %vm20, %v2308
  %2325 = vst.msk [vmem:[#allocation4 + $0x38] sm:$0xff] %vm20, %v2309
  %2326 = vst.msk [vmem:[#allocation4 + $0x40] sm:$0xff] %vm20, %v2310
  %2327 = vst.msk [vmem:[#allocation4 + $0x48] sm:$0xff] %vm20, %v2311
  %2328 = vst.msk [vmem:[#allocation4 + $0x50] sm:$0xff] %vm20, %v2312
  %2329 = vst.msk [vmem:[#allocation4 + $0x58] sm:$0xff] %vm20, %v2313
  %2330 = vst.msk [vmem:[#allocation4 + $0x60] sm:$0xff] %vm20, %v2314
  %2331 = vst.msk [vmem:[#allocation4 + $0x68] sm:$0xff] %vm20, %v2315
  %2332 = vst.msk [vmem:[#allocation4 + $0x70] sm:$0xff] %vm20, %v2316
  %2333 = vst.msk [vmem:[#allocation4 + $0x78] sm:$0xff] %vm20, %v2317
  %v2334 = vld [vmem:[#allocation2 + $0x1] sm:$0xff]
  %v2335 = vld [vmem:[#allocation2 + $0x11] sm:$0xff]
  %v2336 = vld [vmem:[#allocation2 + $0x21] sm:$0xff]
  %v2337 = vld [vmem:[#allocation2 + $0x31] sm:$0xff]
  %v2338 = vld [vmem:[#allocation2 + $0x41] sm:$0xff]
  %v2339 = vld [vmem:[#allocation2 + $0x51] sm:$0xff]
  %v2340 = vld [vmem:[#allocation2 + $0x61] sm:$0xff]
  %v2341 = vld [vmem:[#allocation2 + $0x71] sm:$0xff]
  %v2342 = vld [vmem:[#allocation2 + $0xa1] sm:$0xff]
  %v2343 = vld [vmem:[#allocation2 + $0xb1] sm:$0xff]
  %v2344 = vld [vmem:[#allocation2 + $0xc1] sm:$0xff]
  %v2345 = vld [vmem:[#allocation2 + $0xd1] sm:$0xff]
  %v2346 = vld [vmem:[#allocation2 + $0xe1] sm:$0xff]
  %v2347 = vld [vmem:[#allocation2 + $0xf1] sm:$0xff]
  %v2348 = vld [vmem:[#allocation2 + $0x101] sm:$0xff]
  %v2349 = vld [vmem:[#allocation2 + $0x111] sm:$0xff]
  %2366 = vrot.lane.b32.xlu0 %v2334, 4
  %v2367 = vpop.permute.xlu0 %2366
  %2368 = vrot.lane.b32.xlu0 %v2335, 4
  %v2369 = vpop.permute.xlu0 %2368
  %2370 = vrot.lane.b32.xlu0 %v2336, 4
  %v2371 = vpop.permute.xlu0 %2370
  %2372 = vrot.lane.b32.xlu0 %v2337, 4
  %v2373 = vpop.permute.xlu0 %2372
  %2374 = vrot.lane.b32.xlu0 %v2338, 4
  %v2375 = vpop.permute.xlu0 %2374
  %2376 = vrot.lane.b32.xlu0 %v2339, 4
  %v2377 = vpop.permute.xlu0 %2376
  %2378 = vrot.lane.b32.xlu0 %v2340, 4
  %v2379 = vpop.permute.xlu0 %2378
  %2380 = vrot.lane.b32.xlu0 %v2341, 4
  %v2381 = vpop.permute.xlu0 %2380
  %2382 = vrot.lane.b32.xlu0 %v2342, 4
  %v2383 = vpop.permute.xlu0 %2382
  %2384 = vrot.lane.b32.xlu0 %v2343, 4
  %v2385 = vpop.permute.xlu0 %2384
  %2386 = vrot.lane.b32.xlu0 %v2344, 4
  %v2387 = vpop.permute.xlu0 %2386
  %2388 = vrot.lane.b32.xlu0 %v2345, 4
  %v2389 = vpop.permute.xlu0 %2388
  %2390 = vrot.lane.b32.xlu0 %v2346, 4
  %v2391 = vpop.permute.xlu0 %2390
  %2392 = vrot.lane.b32.xlu0 %v2347, 4
  %v2393 = vpop.permute.xlu0 %2392
  %2394 = vrot.lane.b32.xlu0 %v2348, 4
  %v2395 = vpop.permute.xlu0 %2394
  %2396 = vrot.lane.b32.xlu0 %v2349, 4
  %v2397 = vpop.permute.xlu0 %2396
  %vm2414 = vcmask 64544
  %2415 = vst.msk [vmem:[#allocation4] sm:$0xff] %vm2414, %v2367
  %2416 = vst.msk [vmem:[#allocation4 + $0x8] sm:$0xff] %vm2414, %v2369
  %2417 = vst.msk [vmem:[#allocation4 + $0x10] sm:$0xff] %vm2414, %v2371
  %2418 = vst.msk [vmem:[#allocation4 + $0x18] sm:$0xff] %vm2414, %v2373
  %2419 = vst.msk [vmem:[#allocation4 + $0x20] sm:$0xff] %vm2414, %v2375
  %2420 = vst.msk [vmem:[#allocation4 + $0x28] sm:$0xff] %vm2414, %v2377
  %2421 = vst.msk [vmem:[#allocation4 + $0x30] sm:$0xff] %vm2414, %v2379
  %2422 = vst.msk [vmem:[#allocation4 + $0x38] sm:$0xff] %vm2414, %v2381
  %2423 = vst.msk [vmem:[#allocation4 + $0x40] sm:$0xff] %vm2414, %v2383
  %2424 = vst.msk [vmem:[#allocation4 + $0x48] sm:$0xff] %vm2414, %v2385
  %2425 = vst.msk [vmem:[#allocation4 + $0x50] sm:$0xff] %vm2414, %v2387
  %2426 = vst.msk [vmem:[#allocation4 + $0x58] sm:$0xff] %vm2414, %v2389
  %2427 = vst.msk [vmem:[#allocation4 + $0x60] sm:$0xff] %vm2414, %v2391
  %2428 = vst.msk [vmem:[#allocation4 + $0x68] sm:$0xff] %vm2414, %v2393
  %2429 = vst.msk [vmem:[#allocation4 + $0x70] sm:$0xff] %vm2414, %v2395
  %2430 = vst.msk [vmem:[#allocation4 + $0x78] sm:$0xff] %vm2414, %v2397
  %v2431 = vld [vmem:[#allocation2 + $0x2] sm:$0xff]
  %v2432 = vld [vmem:[#allocation2 + $0x12] sm:$0xff]
  %v2433 = vld [vmem:[#allocation2 + $0x22] sm:$0xff]
  %v2434 = vld [vmem:[#allocation2 + $0x32] sm:$0xff]
  %v2435 = vld [vmem:[#allocation2 + $0x42] sm:$0xff]
  %v2436 = vld [vmem:[#allocation2 + $0x52] sm:$0xff]
  %v2437 = vld [vmem:[#allocation2 + $0x62] sm:$0xff]
  %v2438 = vld [vmem:[#allocation2 + $0x72] sm:$0xff]
  %v2439 = vld [vmem:[#allocation2 + $0xa2] sm:$0xff]
  %v2440 = vld [vmem:[#allocation2 + $0xb2] sm:$0xff]
  %v2441 = vld [vmem:[#allocation2 + $0xc2] sm:$0xff]
  %v2442 = vld [vmem:[#allocation2 + $0xd2] sm:$0xff]
  %v2443 = vld [vmem:[#allocation2 + $0xe2] sm:$0xff]
  %v2444 = vld [vmem:[#allocation2 + $0xf2] sm:$0xff]
  %v2445 = vld [vmem:[#allocation2 + $0x102] sm:$0xff]
  %v2446 = vld [vmem:[#allocation2 + $0x112] sm:$0xff]
  %2463 = vrot.lane.b32.xlu0 %v2431, 8
  %v2464 = vpop.permute.xlu0 %2463
  %2465 = vrot.lane.b32.xlu0 %v2432, 8
  %v2466 = vpop.permute.xlu0 %2465
  %2467 = vrot.lane.b32.xlu0 %v2433, 8
  %v2468 = vpop.permute.xlu0 %2467
  %2469 = vrot.lane.b32.xlu0 %v2434, 8
  %v2470 = vpop.permute.xlu0 %2469
  %2471 = vrot.lane.b32.xlu0 %v2435, 8
  %v2472 = vpop.permute.xlu0 %2471
  %2473 = vrot.lane.b32.xlu0 %v2436, 8
  %v2474 = vpop.permute.xlu0 %2473
  %2475 = vrot.lane.b32.xlu0 %v2437, 8
  %v2476 = vpop.permute.xlu0 %2475
  %2477 = vrot.lane.b32.xlu0 %v2438, 8
  %v2478 = vpop.permute.xlu0 %2477
  %2479 = vrot.lane.b32.xlu0 %v2439, 8
  %v2480 = vpop.permute.xlu0 %2479
  %2481 = vrot.lane.b32.xlu0 %v2440, 8
  %v2482 = vpop.permute.xlu0 %2481
  %2483 = vrot.lane.b32.xlu0 %v2441, 8
  %v2484 = vpop.permute.xlu0 %2483
  %2485 = vrot.lane.b32.xlu0 %v2442, 8
  %v2486 = vpop.permute.xlu0 %2485
  %2487 = vrot.lane.b32.xlu0 %v2443, 8
  %v2488 = vpop.permute.xlu0 %2487
  %2489 = vrot.lane.b32.xlu0 %v2444, 8
  %v2490 = vpop.permute.xlu0 %2489
  %2491 = vrot.lane.b32.xlu0 %v2445, 8
  %v2492 = vpop.permute.xlu0 %2491
  %2493 = vrot.lane.b32.xlu0 %v2446, 8
  %v2494 = vpop.permute.xlu0 %2493
  %vm2511 = vcmask 97344
  %2512 = vst.msk [vmem:[#allocation4] sm:$0xff] %vm2511, %v2464
  %2513 = vst.msk [vmem:[#allocation4 + $0x8] sm:$0xff] %vm2511, %v2466
  %2514 = vst.msk [vmem:[#allocation4 + $0x10] sm:$0xff] %vm2511, %v2468
  %2515 = vst.msk [vmem:[#allocation4 + $0x18] sm:$0xff] %vm2511, %v2470
  %2516 = vst.msk [vmem:[#allocation4 + $0x20] sm:$0xff] %vm2511, %v2472
  %2517 = vst.msk [vmem:[#allocation4 + $0x28] sm:$0xff] %vm2511, %v2474
  %2518 = vst.msk [vmem:[#allocation4 + $0x30] sm:$0xff] %vm2511, %v2476
  %2519 = vst.msk [vmem:[#allocation4 + $0x38] sm:$0xff] %vm2511, %v2478
  %2520 = vst.msk [vmem:[#allocation4 + $0x40] sm:$0xff] %vm2511, %v2480
  %2521 = vst.msk [vmem:[#allocation4 + $0x48] sm:$0xff] %vm2511, %v2482
  %2522 = vst.msk [vmem:[#allocation4 + $0x50] sm:$0xff] %vm2511, %v2484
  %2523 = vst.msk [vmem:[#allocation4 + $0x58] sm:$0xff] %vm2511, %v2486
  %2524 = vst.msk [vmem:[#allocation4 + $0x60] sm:$0xff] %vm2511, %v2488
  %2525 = vst.msk [vmem:[#allocation4 + $0x68] sm:$0xff] %vm2511, %v2490
  %2526 = vst.msk [vmem:[#allocation4 + $0x70] sm:$0xff] %vm2511, %v2492
  %2527 = vst.msk [vmem:[#allocation4 + $0x78] sm:$0xff] %vm2511, %v2494
  %v2528 = vld [vmem:[%s1207] sm:$0xff]
  %v2529 = vld [vmem:[%s1207 + $0x10] sm:$0xff]
  %v2530 = vld [vmem:[%s1207 + $0x20] sm:$0xff]
  %v2531 = vld [vmem:[%s1207 + $0x30] sm:$0xff]
  %v2532 = vld [vmem:[%s1207 + $0x40] sm:$0xff]
  %v2533 = vld [vmem:[%s1207 + $0x50] sm:$0xff]
  %v2534 = vld [vmem:[%s1207 + $0x60] sm:$0xff]
  %v2535 = vld [vmem:[%s1207 + $0x70] sm:$0xff]
  %v2536 = vld [vmem:[%s1207 + $0xa0] sm:$0xff]
  %v2537 = vld [vmem:[%s1207 + $0xb0] sm:$0xff]
  %v2538 = vld [vmem:[%s1207 + $0xc0] sm:$0xff]
  %v2539 = vld [vmem:[%s1207 + $0xd0] sm:$0xff]
  %v2540 = vld [vmem:[%s1207 + $0xe0] sm:$0xff]
  %v2541 = vld [vmem:[%s1207 + $0xf0] sm:$0xff]
  %v2542 = vld [vmem:[%s1207 + $0x100] sm:$0xff]
  %v2543 = vld [vmem:[%s1207 + $0x110] sm:$0xff]
  %2560 = vrot.lane.b32.xlu0 %v2528, 12
  %v2561 = vpop.permute.xlu0 %2560
  %2562 = vrot.lane.b32.xlu0 %v2529, 12
  %v2563 = vpop.permute.xlu0 %2562
  %2564 = vrot.lane.b32.xlu0 %v2530, 12
  %v2565 = vpop.permute.xlu0 %2564
  %2566 = vrot.lane.b32.xlu0 %v2531, 12
  %v2567 = vpop.permute.xlu0 %2566
  %2568 = vrot.lane.b32.xlu0 %v2532, 12
  %v2569 = vpop.permute.xlu0 %2568
  %2570 = vrot.lane.b32.xlu0 %v2533, 12
  %v2571 = vpop.permute.xlu0 %2570
  %2572 = vrot.lane.b32.xlu0 %v2534, 12
  %v2573 = vpop.permute.xlu0 %2572
  %2574 = vrot.lane.b32.xlu0 %v2535, 12
  %v2575 = vpop.permute.xlu0 %2574
  %2576 = vrot.lane.b32.xlu0 %v2536, 12
  %v2577 = vpop.permute.xlu0 %2576
  %2578 = vrot.lane.b32.xlu0 %v2537, 12
  %v2579 = vpop.permute.xlu0 %2578
  %2580 = vrot.lane.b32.xlu0 %v2538, 12
  %v2581 = vpop.permute.xlu0 %2580
  %2582 = vrot.lane.b32.xlu0 %v2539, 12
  %v2583 = vpop.permute.xlu0 %2582
  %2584 = vrot.lane.b32.xlu0 %v2540, 12
  %v2585 = vpop.permute.xlu0 %2584
  %2586 = vrot.lane.b32.xlu0 %v2541, 12
  %v2587 = vpop.permute.xlu0 %2586
  %2588 = vrot.lane.b32.xlu0 %v2542, 12
  %v2589 = vpop.permute.xlu0 %2588
  %2590 = vrot.lane.b32.xlu0 %v2543, 12
  %v2591 = vpop.permute.xlu0 %2590
  %vm2608 = vcmask 130144
  %2609 = vst.msk [vmem:[#allocation4] sm:$0xff] %vm2608, %v2561
  %2610 = vst.msk [vmem:[#allocation4 + $0x8] sm:$0xff] %vm2608, %v2563
  %2611 = vst.msk [vmem:[#allocation4 + $0x10] sm:$0xff] %vm2608, %v2565
  %2612 = vst.msk [vmem:[#allocation4 + $0x18] sm:$0xff] %vm2608, %v2567
  %2613 = vst.msk [vmem:[#allocation4 + $0x20] sm:$0xff] %vm2608, %v2569
  %2614 = vst.msk [vmem:[#allocation4 + $0x28] sm:$0xff] %vm2608, %v2571
  %2615 = vst.msk [vmem:[#allocation4 + $0x30] sm:$0xff] %vm2608, %v2573
  %2616 = vst.msk [vmem:[#allocation4 + $0x38] sm:$0xff] %vm2608, %v2575
  %2617 = vst.msk [vmem:[#allocation4 + $0x40] sm:$0xff] %vm2608, %v2577
  %2618 = vst.msk [vmem:[#allocation4 + $0x48] sm:$0xff] %vm2608, %v2579
  %2619 = vst.msk [vmem:[#allocation4 + $0x50] sm:$0xff] %vm2608, %v2581
  %2620 = vst.msk [vmem:[#allocation4 + $0x58] sm:$0xff] %vm2608, %v2583
  %2621 = vst.msk [vmem:[#allocation4 + $0x60] sm:$0xff] %vm2608, %v2585
  %2622 = vst.msk [vmem:[#allocation4 + $0x68] sm:$0xff] %vm2608, %v2587
  %2623 = vst.msk [vmem:[#allocation4 + $0x70] sm:$0xff] %vm2608, %v2589
  %2624 = vst.msk [vmem:[#allocation4 + $0x78] sm:$0xff] %vm2608, %v2591
  %v2625 = vld [vmem:[%s1207 + $0x1] sm:$0xff]
  %v2626 = vld [vmem:[%s1207 + $0x11] sm:$0xff]
  %v2627 = vld [vmem:[%s1207 + $0x21] sm:$0xff]
  %v2628 = vld [vmem:[%s1207 + $0x31] sm:$0xff]
  %v2629 = vld [vmem:[%s1207 + $0x41] sm:$0xff]
  %v2630 = vld [vmem:[%s1207 + $0x51] sm:$0xff]
  %v2631 = vld [vmem:[%s1207 + $0x61] sm:$0xff]
  %v2632 = vld [vmem:[%s1207 + $0x71] sm:$0xff]
  %v2633 = vld [vmem:[%s1207 + $0xa1] sm:$0xff]
  %v2634 = vld [vmem:[%s1207 + $0xb1] sm:$0xff]
  %v2635 = vld [vmem:[%s1207 + $0xc1] sm:$0xff]
  %v2636 = vld [vmem:[%s1207 + $0xd1] sm:$0xff]
  %v2637 = vld [vmem:[%s1207 + $0xe1] sm:$0xff]
  %v2638 = vld [vmem:[%s1207 + $0xf1] sm:$0xff]
  %v2639 = vld [vmem:[%s1207 + $0x101] sm:$0xff]
  %v2640 = vld [vmem:[%s1207 + $0x111] sm:$0xff]
  %2657 = vrot.lane.b32.xlu0 %v2625, 16
  %v2658 = vpop.permute.xlu0 %2657
  %2659 = vrot.lane.b32.xlu0 %v2626, 16
  %v2660 = vpop.permute.xlu0 %2659
  %2661 = vrot.lane.b32.xlu0 %v2627, 16
  %v2662 = vpop.permute.xlu0 %2661
  %2663 = vrot.lane.b32.xlu0 %v2628, 16
  %v2664 = vpop.permute.xlu0 %2663
  %2665 = vrot.lane.b32.xlu0 %v2629, 16
  %v2666 = vpop.permute.xlu0 %2665
  %2667 = vrot.lane.b32.xlu0 %v2630, 16
  %v2668 = vpop.permute.xlu0 %2667
  %2669 = vrot.lane.b32.xlu0 %v2631, 16
  %v2670 = vpop.permute.xlu0 %2669
  %2671 = vrot.lane.b32.xlu0 %v2632, 16
  %v2672 = vpop.permute.xlu0 %2671
  %2673 = vrot.lane.b32.xlu0 %v2633, 16
  %v2674 = vpop.permute.xlu0 %2673
  %2675 = vrot.lane.b32.xlu0 %v2634, 16
  %v2676 = vpop.permute.xlu0 %2675
  %2677 = vrot.lane.b32.xlu0 %v2635, 16
  %v2678 = vpop.permute.xlu0 %2677
  %2679 = vrot.lane.b32.xlu0 %v2636, 16
  %v2680 = vpop.permute.xlu0 %2679
  %2681 = vrot.lane.b32.xlu0 %v2637, 16
  %v2682 = vpop.permute.xlu0 %2681
  %2683 = vrot.lane.b32.xlu0 %v2638, 16
  %v2684 = vpop.permute.xlu0 %2683
  %2685 = vrot.lane.b32.xlu0 %v2639, 16
  %v2686 = vpop.permute.xlu0 %2685
  %2687 = vrot.lane.b32.xlu0 %v2640, 16
  %v2688 = vpop.permute.xlu0 %2687
  %vm2705 = vcmask 162944
  %2706 = vst.msk [vmem:[#allocation4] sm:$0xff] %vm2705, %v2658
  %2707 = vst.msk [vmem:[#allocation4 + $0x8] sm:$0xff] %vm2705, %v2660
  %2708 = vst.msk [vmem:[#allocation4 + $0x10] sm:$0xff] %vm2705, %v2662
  %2709 = vst.msk [vmem:[#allocation4 + $0x18] sm:$0xff] %vm2705, %v2664
  %2710 = vst.msk [vmem:[#allocation4 + $0x20] sm:$0xff] %vm2705, %v2666
  %2711 = vst.msk [vmem:[#allocation4 + $0x28] sm:$0xff] %vm2705, %v2668
  %2712 = vst.msk [vmem:[#allocation4 + $0x30] sm:$0xff] %vm2705, %v2670
  %2713 = vst.msk [vmem:[#allocation4 + $0x38] sm:$0xff] %vm2705, %v2672
  %2714 = vst.msk [vmem:[#allocation4 + $0x40] sm:$0xff] %vm2705, %v2674
  %2715 = vst.msk [vmem:[#allocation4 + $0x48] sm:$0xff] %vm2705, %v2676
  %2716 = vst.msk [vmem:[#allocation4 + $0x50] sm:$0xff] %vm2705, %v2678
  %2717 = vst.msk [vmem:[#allocation4 + $0x58] sm:$0xff] %vm2705, %v2680
  %2718 = vst.msk [vmem:[#allocation4 + $0x60] sm:$0xff] %vm2705, %v2682
  %2719 = vst.msk [vmem:[#allocation4 + $0x68] sm:$0xff] %vm2705, %v2684
  %2720 = vst.msk [vmem:[#allocation4 + $0x70] sm:$0xff] %vm2705, %v2686
  %2721 = vst.msk [vmem:[#allocation4 + $0x78] sm:$0xff] %vm2705, %v2688
  %v2722 = vld [vmem:[%s1207 + $0x2] sm:$0xff]
  %v2723 = vld [vmem:[%s1207 + $0x12] sm:$0xff]
  %v2724 = vld [vmem:[%s1207 + $0x22] sm:$0xff]
  %v2725 = vld [vmem:[%s1207 + $0x32] sm:$0xff]
  %v2726 = vld [vmem:[%s1207 + $0x42] sm:$0xff]
  %v2727 = vld [vmem:[%s1207 + $0x52] sm:$0xff]
  %v2728 = vld [vmem:[%s1207 + $0x62] sm:$0xff]
  %v2729 = vld [vmem:[%s1207 + $0x72] sm:$0xff]
  %v2730 = vld [vmem:[%s1207 + $0xa2] sm:$0xff]
  %v2731 = vld [vmem:[%s1207 + $0xb2] sm:$0xff]
  %v2732 = vld [vmem:[%s1207 + $0xc2] sm:$0xff]
  %v2733 = vld [vmem:[%s1207 + $0xd2] sm:$0xff]
  %v2734 = vld [vmem:[%s1207 + $0xe2] sm:$0xff]
  %v2735 = vld [vmem:[%s1207 + $0xf2] sm:$0xff]
  %v2736 = vld [vmem:[%s1207 + $0x102] sm:$0xff]
  %v2737 = vld [vmem:[%s1207 + $0x112] sm:$0xff]
  %2754 = vrot.lane.b32.xlu0 %v2722, 20
  %v2755 = vpop.permute.xlu0 %2754
  %2756 = vrot.lane.b32.xlu0 %v2723, 20
  %v2757 = vpop.permute.xlu0 %2756
  %2758 = vrot.lane.b32.xlu0 %v2724, 20
  %v2759 = vpop.permute.xlu0 %2758
  %2760 = vrot.lane.b32.xlu0 %v2725, 20
  %v2761 = vpop.permute.xlu0 %2760
  %2762 = vrot.lane.b32.xlu0 %v2726, 20
  %v2763 = vpop.permute.xlu0 %2762
  %2764 = vrot.lane.b32.xlu0 %v2727, 20
  %v2765 = vpop.permute.xlu0 %2764
  %2766 = vrot.lane.b32.xlu0 %v2728, 20
  %v2767 = vpop.permute.xlu0 %2766
  %2768 = vrot.lane.b32.xlu0 %v2729, 20
  %v2769 = vpop.permute.xlu0 %2768
  %2770 = vrot.lane.b32.xlu0 %v2730, 20
  %v2771 = vpop.permute.xlu0 %2770
  %2772 = vrot.lane.b32.xlu0 %v2731, 20
  %v2773 = vpop.permute.xlu0 %2772
  %2774 = vrot.lane.b32.xlu0 %v2732, 20
  %v2775 = vpop.permute.xlu0 %2774
  %2776 = vrot.lane.b32.xlu0 %v2733, 20
  %v2777 = vpop.permute.xlu0 %2776
  %2778 = vrot.lane.b32.xlu0 %v2734, 20
  %v2779 = vpop.permute.xlu0 %2778
  %2780 = vrot.lane.b32.xlu0 %v2735, 20
  %v2781 = vpop.permute.xlu0 %2780
  %2782 = vrot.lane.b32.xlu0 %v2736, 20
  %v2783 = vpop.permute.xlu0 %2782
  %2784 = vrot.lane.b32.xlu0 %v2737, 20
  %v2785 = vpop.permute.xlu0 %2784
  %vm2802 = vcmask 195744
  %2803 = vst.msk [vmem:[#allocation4] sm:$0xff] %vm2802, %v2755
  %2804 = vst.msk [vmem:[#allocation4 + $0x8] sm:$0xff] %vm2802, %v2757
  %2805 = vst.msk [vmem:[#allocation4 + $0x10] sm:$0xff] %vm2802, %v2759
  %2806 = vst.msk [vmem:[#allocation4 + $0x18] sm:$0xff] %vm2802, %v2761
  %2807 = vst.msk [vmem:[#allocation4 + $0x20] sm:$0xff] %vm2802, %v2763
  %2808 = vst.msk [vmem:[#allocation4 + $0x28] sm:$0xff] %vm2802, %v2765
  %2809 = vst.msk [vmem:[#allocation4 + $0x30] sm:$0xff] %vm2802, %v2767
  %2810 = vst.msk [vmem:[#allocation4 + $0x38] sm:$0xff] %vm2802, %v2769
  %2811 = vst.msk [vmem:[#allocation4 + $0x40] sm:$0xff] %vm2802, %v2771
  %2812 = vst.msk [vmem:[#allocation4 + $0x48] sm:$0xff] %vm2802, %v2773
  %2813 = vst.msk [vmem:[#allocation4 + $0x50] sm:$0xff] %vm2802, %v2775
  %2814 = vst.msk [vmem:[#allocation4 + $0x58] sm:$0xff] %vm2802, %v2777
  %2815 = vst.msk [vmem:[#allocation4 + $0x60] sm:$0xff] %vm2802, %v2779
  %2816 = vst.msk [vmem:[#allocation4 + $0x68] sm:$0xff] %vm2802, %v2781
  %2817 = vst.msk [vmem:[#allocation4 + $0x70] sm:$0xff] %vm2802, %v2783
  %2818 = vst.msk [vmem:[#allocation4 + $0x78] sm:$0xff] %vm2802, %v2785
  %s2819 = scalar_lea.vmem [#allocation2], 32
  %v2820 = vld [vmem:[%s2819] sm:$0xff]
  %v2821 = vld [vmem:[%s2819 + $0x10] sm:$0xff]
  %v2822 = vld [vmem:[%s2819 + $0x20] sm:$0xff]
  %v2823 = vld [vmem:[%s2819 + $0x30] sm:$0xff]
  %v2824 = vld [vmem:[%s2819 + $0x40] sm:$0xff]
  %v2825 = vld [vmem:[%s2819 + $0x50] sm:$0xff]
  %v2826 = vld [vmem:[%s2819 + $0x60] sm:$0xff]
  %v2827 = vld [vmem:[%s2819 + $0x70] sm:$0xff]
  %v2828 = vld [vmem:[%s2819 + $0xa0] sm:$0xff]
  %v2829 = vld [vmem:[%s2819 + $0xb0] sm:$0xff]
  %v2830 = vld [vmem:[%s2819 + $0xc0] sm:$0xff]
  %v2831 = vld [vmem:[%s2819 + $0xd0] sm:$0xff]
  %v2832 = vld [vmem:[%s2819 + $0xe0] sm:$0xff]
  %v2833 = vld [vmem:[%s2819 + $0xf0] sm:$0xff]
  %v2834 = vld [vmem:[%s2819 + $0x100] sm:$0xff]
  %v2835 = vld [vmem:[%s2819 + $0x110] sm:$0xff]
  %2852 = vrot.lane.b32.xlu0 %v2820, 24
  %v2853 = vpop.permute.xlu0 %2852
  %2854 = vrot.lane.b32.xlu0 %v2821, 24
  %v2855 = vpop.permute.xlu0 %2854
  %2856 = vrot.lane.b32.xlu0 %v2822, 24
  %v2857 = vpop.permute.xlu0 %2856
  %2858 = vrot.lane.b32.xlu0 %v2823, 24
  %v2859 = vpop.permute.xlu0 %2858
  %2860 = vrot.lane.b32.xlu0 %v2824, 24
  %v2861 = vpop.permute.xlu0 %2860
  %2862 = vrot.lane.b32.xlu0 %v2825, 24
  %v2863 = vpop.permute.xlu0 %2862
  %2864 = vrot.lane.b32.xlu0 %v2826, 24
  %v2865 = vpop.permute.xlu0 %2864
  %2866 = vrot.lane.b32.xlu0 %v2827, 24
  %v2867 = vpop.permute.xlu0 %2866
  %2868 = vrot.lane.b32.xlu0 %v2828, 24
  %v2869 = vpop.permute.xlu0 %2868
  %2870 = vrot.lane.b32.xlu0 %v2829, 24
  %v2871 = vpop.permute.xlu0 %2870
  %2872 = vrot.lane.b32.xlu0 %v2830, 24
  %v2873 = vpop.permute.xlu0 %2872
  %2874 = vrot.lane.b32.xlu0 %v2831, 24
  %v2875 = vpop.permute.xlu0 %2874
  %2876 = vrot.lane.b32.xlu0 %v2832, 24
  %v2877 = vpop.permute.xlu0 %2876
  %2878 = vrot.lane.b32.xlu0 %v2833, 24
  %v2879 = vpop.permute.xlu0 %2878
  %2880 = vrot.lane.b32.xlu0 %v2834, 24
  %v2881 = vpop.permute.xlu0 %2880
  %2882 = vrot.lane.b32.xlu0 %v2835, 24
  %v2883 = vpop.permute.xlu0 %2882
  %vm2900 = vcmask 228544
  %2901 = vst.msk [vmem:[#allocation4] sm:$0xff] %vm2900, %v2853
  %2902 = vst.msk [vmem:[#allocation4 + $0x8] sm:$0xff] %vm2900, %v2855
  %2903 = vst.msk [vmem:[#allocation4 + $0x10] sm:$0xff] %vm2900, %v2857
  %2904 = vst.msk [vmem:[#allocation4 + $0x18] sm:$0xff] %vm2900, %v2859
  %2905 = vst.msk [vmem:[#allocation4 + $0x20] sm:$0xff] %vm2900, %v2861
  %2906 = vst.msk [vmem:[#allocation4 + $0x28] sm:$0xff] %vm2900, %v2863
  %2907 = vst.msk [vmem:[#allocation4 + $0x30] sm:$0xff] %vm2900, %v2865
  %2908 = vst.msk [vmem:[#allocation4 + $0x38] sm:$0xff] %vm2900, %v2867
  %2909 = vst.msk [vmem:[#allocation4 + $0x40] sm:$0xff] %vm2900, %v2869
  %2910 = vst.msk [vmem:[#allocation4 + $0x48] sm:$0xff] %vm2900, %v2871
  %2911 = vst.msk [vmem:[#allocation4 + $0x50] sm:$0xff] %vm2900, %v2873
  %2912 = vst.msk [vmem:[#allocation4 + $0x58] sm:$0xff] %vm2900, %v2875
  %2913 = vst.msk [vmem:[#allocation4 + $0x60] sm:$0xff] %vm2900, %v2877
  %2914 = vst.msk [vmem:[#allocation4 + $0x68] sm:$0xff] %vm2900, %v2879
  %2915 = vst.msk [vmem:[#allocation4 + $0x70] sm:$0xff] %vm2900, %v2881
  %2916 = vst.msk [vmem:[#allocation4 + $0x78] sm:$0xff] %vm2900, %v2883
  %v2917 = vld [vmem:[%s2819 + $0x1] sm:$0xff]
  %v2918 = vld [vmem:[%s2819 + $0x11] sm:$0xff]
  %v2919 = vld [vmem:[%s2819 + $0x21] sm:$0xff]
  %v2920 = vld [vmem:[%s2819 + $0x31] sm:$0xff]
  %v2921 = vld [vmem:[%s2819 + $0x41] sm:$0xff]
  %v2922 = vld [vmem:[%s2819 + $0x51] sm:$0xff]
  %v2923 = vld [vmem:[%s2819 + $0x61] sm:$0xff]
  %v2924 = vld [vmem:[%s2819 + $0x71] sm:$0xff]
  %v2925 = vld [vmem:[%s2819 + $0xa1] sm:$0xff]
  %v2926 = vld [vmem:[%s2819 + $0xb1] sm:$0xff]
  %v2927 = vld [vmem:[%s2819 + $0xc1] sm:$0xff]
  %v2928 = vld [vmem:[%s2819 + $0xd1] sm:$0xff]
  %v2929 = vld [vmem:[%s2819 + $0xe1] sm:$0xff]
  %v2930 = vld [vmem:[%s2819 + $0xf1] sm:$0xff]
  %v2931 = vld [vmem:[%s2819 + $0x101] sm:$0xff]
  %v2932 = vld [vmem:[%s2819 + $0x111] sm:$0xff]
  %2949 = vrot.lane.b32.xlu0 %v2917, 28
  %v2950 = vpop.permute.xlu0 %2949
  %2951 = vrot.lane.b32.xlu0 %v2918, 28
  %v2952 = vpop.permute.xlu0 %2951
  %2953 = vrot.lane.b32.xlu0 %v2919, 28
  %v2954 = vpop.permute.xlu0 %2953
  %2955 = vrot.lane.b32.xlu0 %v2920, 28
  %v2956 = vpop.permute.xlu0 %2955
  %2957 = vrot.lane.b32.xlu0 %v2921, 28
  %v2958 = vpop.permute.xlu0 %2957
  %2959 = vrot.lane.b32.xlu0 %v2922, 28
  %v2960 = vpop.permute.xlu0 %2959
  %2961 = vrot.lane.b32.xlu0 %v2923, 28
  %v2962 = vpop.permute.xlu0 %2961
  %2963 = vrot.lane.b32.xlu0 %v2924, 28
  %v2964 = vpop.permute.xlu0 %2963
  %2965 = vrot.lane.b32.xlu0 %v2925, 28
  %v2966 = vpop.permute.xlu0 %2965
  %2967 = vrot.lane.b32.xlu0 %v2926, 28
  %v2968 = vpop.permute.xlu0 %2967
  %2969 = vrot.lane.b32.xlu0 %v2927, 28
  %v2970 = vpop.permute.xlu0 %2969
  %2971 = vrot.lane.b32.xlu0 %v2928, 28
  %v2972 = vpop.permute.xlu0 %2971
  %2973 = vrot.lane.b32.xlu0 %v2929, 28
  %v2974 = vpop.permute.xlu0 %2973
  %2975 = vrot.lane.b32.xlu0 %v2930, 28
  %v2976 = vpop.permute.xlu0 %2975
  %2977 = vrot.lane.b32.xlu0 %v2931, 28
  %v2978 = vpop.permute.xlu0 %2977
  %2979 = vrot.lane.b32.xlu0 %v2932, 28
  %v2980 = vpop.permute.xlu0 %2979
  %vm2997 = vcmask 261344
  %2998 = vst.msk [vmem:[#allocation4] sm:$0xff] %vm2997, %v2950
  %2999 = vst.msk [vmem:[#allocation4 + $0x8] sm:$0xff] %vm2997, %v2952
  %3000 = vst.msk [vmem:[#allocation4 + $0x10] sm:$0xff] %vm2997, %v2954
  %3001 = vst.msk [vmem:[#allocation4 + $0x18] sm:$0xff] %vm2997, %v2956
  %3002 = vst.msk [vmem:[#allocation4 + $0x20] sm:$0xff] %vm2997, %v2958
  %3003 = vst.msk [vmem:[#allocation4 + $0x28] sm:$0xff] %vm2997, %v2960
  %3004 = vst.msk [vmem:[#allocation4 + $0x30] sm:$0xff] %vm2997, %v2962
  %3005 = vst.msk [vmem:[#allocation4 + $0x38] sm:$0xff] %vm2997, %v2964
  %3006 = vst.msk [vmem:[#allocation4 + $0x40] sm:$0xff] %vm2997, %v2966
  %3007 = vst.msk [vmem:[#allocation4 + $0x48] sm:$0xff] %vm2997, %v2968
  %3008 = vst.msk [vmem:[#allocation4 + $0x50] sm:$0xff] %vm2997, %v2970
  %3009 = vst.msk [vmem:[#allocation4 + $0x58] sm:$0xff] %vm2997, %v2972
  %3010 = vst.msk [vmem:[#allocation4 + $0x60] sm:$0xff] %vm2997, %v2974
  %3011 = vst.msk [vmem:[#allocation4 + $0x68] sm:$0xff] %vm2997, %v2976
  %3012 = vst.msk [vmem:[#allocation4 + $0x70] sm:$0xff] %vm2997, %v2978
  %3013 = vst.msk [vmem:[#allocation4 + $0x78] sm:$0xff] %vm2997, %v2980
  %v3014 = vld [vmem:[%s2819 + $0x2] sm:$0xff]
  %v3015 = vld [vmem:[%s2819 + $0x12] sm:$0xff]
  %v3016 = vld [vmem:[%s2819 + $0x22] sm:$0xff]
  %v3017 = vld [vmem:[%s2819 + $0x32] sm:$0xff]
  %v3018 = vld [vmem:[%s2819 + $0x42] sm:$0xff]
  %v3019 = vld [vmem:[%s2819 + $0x52] sm:$0xff]
  %v3020 = vld [vmem:[%s2819 + $0x62] sm:$0xff]
  %v3021 = vld [vmem:[%s2819 + $0x72] sm:$0xff]
  %v3022 = vld [vmem:[%s2819 + $0xa2] sm:$0xff]
  %v3023 = vld [vmem:[%s2819 + $0xb2] sm:$0xff]
  %v3024 = vld [vmem:[%s2819 + $0xc2] sm:$0xff]
  %v3025 = vld [vmem:[%s2819 + $0xd2] sm:$0xff]
  %v3026 = vld [vmem:[%s2819 + $0xe2] sm:$0xff]
  %v3027 = vld [vmem:[%s2819 + $0xf2] sm:$0xff]
  %v3028 = vld [vmem:[%s2819 + $0x102] sm:$0xff]
  %v3029 = vld [vmem:[%s2819 + $0x112] sm:$0xff]
  %3046 = vrot.lane.b32.xlu0 %v3014, 32
  %v3047 = vpop.permute.xlu0 %3046
  %3048 = vrot.lane.b32.xlu0 %v3015, 32
  %v3049 = vpop.permute.xlu0 %3048
  %3050 = vrot.lane.b32.xlu0 %v3016, 32
  %v3051 = vpop.permute.xlu0 %3050
  %3052 = vrot.lane.b32.xlu0 %v3017, 32
  %v3053 = vpop.permute.xlu0 %3052
  %3054 = vrot.lane.b32.xlu0 %v3018, 32
  %v3055 = vpop.permute.xlu0 %3054
  %3056 = vrot.lane.b32.xlu0 %v3019, 32
  %v3057 = vpop.permute.xlu0 %3056
  %3058 = vrot.lane.b32.xlu0 %v3020, 32
  %v3059 = vpop.permute.xlu0 %3058
  %3060 = vrot.lane.b32.xlu0 %v3021, 32
  %v3061 = vpop.permute.xlu0 %3060
  %3062 = vrot.lane.b32.xlu0 %v3022, 32
  %v3063 = vpop.permute.xlu0 %3062
  %3064 = vrot.lane.b32.xlu0 %v3023, 32
  %v3065 = vpop.permute.xlu0 %3064
  %3066 = vrot.lane.b32.xlu0 %v3024, 32
  %v3067 = vpop.permute.xlu0 %3066
  %3068 = vrot.lane.b32.xlu0 %v3025, 32
  %v3069 = vpop.permute.xlu0 %3068
  %3070 = vrot.lane.b32.xlu0 %v3026, 32
  %v3071 = vpop.permute.xlu0 %3070
  %3072 = vrot.lane.b32.xlu0 %v3027, 32
  %v3073 = vpop.permute.xlu0 %3072
  %3074 = vrot.lane.b32.xlu0 %v3028, 32
  %v3075 = vpop.permute.xlu0 %3074
  %3076 = vrot.lane.b32.xlu0 %v3029, 32
  %v3077 = vpop.permute.xlu0 %3076
  %vm3094 = vcmask 294144
  %3095 = vst.msk [vmem:[#allocation4] sm:$0xff] %vm3094, %v3047
  %3096 = vst.msk [vmem:[#allocation4 + $0x8] sm:$0xff] %vm3094, %v3049
  %3097 = vst.msk [vmem:[#allocation4 + $0x10] sm:$0xff] %vm3094, %v3051
  %3098 = vst.msk [vmem:[#allocation4 + $0x18] sm:$0xff] %vm3094, %v3053
  %3099 = vst.msk [vmem:[#allocation4 + $0x20] sm:$0xff] %vm3094, %v3055
  %3100 = vst.msk [vmem:[#allocation4 + $0x28] sm:$0xff] %vm3094, %v3057
  %3101 = vst.msk [vmem:[#allocation4 + $0x30] sm:$0xff] %vm3094, %v3059
  %3102 = vst.msk [vmem:[#allocation4 + $0x38] sm:$0xff] %vm3094, %v3061
  %3103 = vst.msk [vmem:[#allocation4 + $0x40] sm:$0xff] %vm3094, %v3063
  %3104 = vst.msk [vmem:[#allocation4 + $0x48] sm:$0xff] %vm3094, %v3065
  %3105 = vst.msk [vmem:[#allocation4 + $0x50] sm:$0xff] %vm3094, %v3067
  %3106 = vst.msk [vmem:[#allocation4 + $0x58] sm:$0xff] %vm3094, %v3069
  %3107 = vst.msk [vmem:[#allocation4 + $0x60] sm:$0xff] %vm3094, %v3071
  %3108 = vst.msk [vmem:[#allocation4 + $0x68] sm:$0xff] %vm3094, %v3073
  %3109 = vst.msk [vmem:[#allocation4 + $0x70] sm:$0xff] %vm3094, %v3075
  %3110 = vst.msk [vmem:[#allocation4 + $0x78] sm:$0xff] %vm3094, %v3077
  %v3111 = vld [vmem:[#allocation4] sm:$0xff]
  %v3112 = vld [vmem:[#allocation4 + $0x8] sm:$0xff]
  %v3113 = vld [vmem:[#allocation4 + $0x10] sm:$0xff]
  %v3114 = vld [vmem:[#allocation4 + $0x18] sm:$0xff]
  %v3115 = vld [vmem:[#allocation4 + $0x20] sm:$0xff]
  %v3116 = vld [vmem:[#allocation4 + $0x28] sm:$0xff]
  %v3117 = vld [vmem:[#allocation4 + $0x30] sm:$0xff]
  %v3118 = vld [vmem:[#allocation4 + $0x38] sm:$0xff]
  %v3119 = vld [vmem:[#allocation4 + $0x40] sm:$0xff]
  %v3120 = vld [vmem:[#allocation4 + $0x48] sm:$0xff]
  %v3121 = vld [vmem:[#allocation4 + $0x50] sm:$0xff]
  %v3122 = vld [vmem:[#allocation4 + $0x58] sm:$0xff]
  %v3123 = vld [vmem:[#allocation4 + $0x60] sm:$0xff]
  %v3124 = vld [vmem:[#allocation4 + $0x68] sm:$0xff]
  %v3125 = vld [vmem:[#allocation4 + $0x70] sm:$0xff]
  %v3126 = vld [vmem:[#allocation4 + $0x78] sm:$0xff]
  %v3127 = vld [vmem:[%s1] sm:$0xff]
  %v3128 = vld [vmem:[%s1 + $0x8] sm:$0xff]
  %v3129 = vld [vmem:[%s1 + $0x10] sm:$0xff]
  %v3130 = vld [vmem:[%s1 + $0x18] sm:$0xff]
  %v3131 = vld [vmem:[%s1 + $0x20] sm:$0xf]
  %v3132 = vld [vmem:[%s2] sm:$0x1]
  %v3134 = vlaneseq
  %v3135 = vshrl.u32 %v3134, 7
  %v3136 = vsub.s32 0, %v3135
  %v3137 = vrot.slane %v3132, %v3136
  %vm3139 = vcmask 293888
  %v3141 = vsel %vm3139, %v3111, 0
  %v3144 = vsel %vm3139, %v3112, 0
  %v3147 = vsel %vm3139, %v3113, 0
  %v3150 = vsel %vm3139, %v3114, 0
  %v3153 = vsel %vm3139, %v3115, 0
  %v3156 = vsel %vm3139, %v3116, 0
  %v3159 = vsel %vm3139, %v3117, 0
  %v3162 = vsel %vm3139, %v3118, 0
  %v3165 = vsel %vm3139, %v3119, 0
  %v3168 = vsel %vm3139, %v3120, 0
  %v3171 = vsel %vm3139, %v3121, 0
  %v3174 = vsel %vm3139, %v3122, 0
  %v3177 = vsel %vm3139, %v3123, 0
  %v3180 = vsel %vm3139, %v3124, 0
  %v3183 = vsel %vm3139, %v3125, 0
  %v3186 = vsel %vm3139, %v3126, 0
  %vm3188 = vcmask 1043456
  %v3190 = vsel %vm3188, %v3131, 0
  %3192 = vmatprep.subr.mxu0 0.0
  %3193 = vmatpush1.msra.mxu0 %v3127
  %3194 = vmatprep.subr.mxu0 0.0
  %3195 = vmatpush1.msra.mxu0 %v3128
  %3196 = vmatprep.subr.mxu0 0.0
  %3197 = vmatpush1.msra.mxu0 %v3129
  %3198 = vmatprep.subr.mxu0 0.0
  %3199 = vmatpush1.msra.mxu0 %v3130
  %3200 = vmatprep.subr.mxu0 0.0
  %3201 = vmatpush1.msra.mxu0 %v3190
  %3202 = vmatprep.subr.mxu0 0.0
  %3203 = vmatpush1.msra.mxu0 0.0
  %3204 = vmatprep.subr.mxu0 0.0
  %3205 = vmatpush1.msra.mxu0 0.0
  %3206 = vmatprep.subr.mxu0 0.0
  %3207 = vmatpush1.msra.mxu0 0.0
  %3208 = vmatprep.subr.mxu0 0.0
  %3209 = vmatpush1.msra.mxu0 0.0
  %3210 = vmatprep.subr.mxu0 0.0
  %3211 = vmatpush1.msra.mxu0 0.0
  %3212 = vmatprep.subr.mxu0 0.0
  %3213 = vmatpush1.msra.mxu0 0.0
  %3214 = vmatprep.subr.mxu0 0.0
  %3215 = vmatpush1.msra.mxu0 0.0
  %3216 = vmatprep.subr.mxu0 0.0
  %3217 = vmatpush1.msra.mxu0 0.0
  %3218 = vmatprep.subr.mxu0 0.0
  %3219 = vmatpush1.msra.mxu0 0.0
  %3220 = vmatprep.subr.mxu0 0.0
  %3221 = vmatpush1.msra.mxu0 0.0
  %3222 = vmatprep.subr.mxu0 0.0
  %3223 = vmatpush1.msra.mxu0 0.0
  %3224 = vmatprep.subr.mxu0 0.0
  %3225 = vmatpush1.msra.mxu0 0.0
  %3226 = vmatprep.subr.mxu0 0.0
  %3227 = vmatpush1.msra.mxu0 0.0
  %3228 = vmatprep.subr.mxu0 0.0
  %3229 = vmatpush1.msra.mxu0 0.0
  %3230 = vmatprep.subr.mxu0 0.0
  %3231 = vmatpush1.msra.mxu0 0.0
  %3232 = vmatprep.subr.mxu0 0.0
  %3233 = vmatpush1.msra.mxu0 0.0
  %3234 = vmatprep.subr.mxu0 0.0
  %3235 = vmatpush1.msra.mxu0 0.0
  %3236 = vmatprep.subr.mxu0 0.0
  %3237 = vmatpush1.msra.mxu0 0.0
  %3238 = vmatprep.subr.mxu0 0.0
  %3239 = vmatpush1.msra.mxu0 0.0
  %3240 = vmatprep.subr.mxu0 0.0
  %3241 = vmatpush1.msra.mxu0 0.0
  %3242 = vmatprep.subr.mxu0 0.0
  %3243 = vmatpush1.msra.mxu0 0.0
  %3244 = vmatprep.subr.mxu0 0.0
  %3245 = vmatpush1.msra.mxu0 0.0
  %3246 = vmatprep.subr.mxu0 0.0
  %3247 = vmatpush1.msra.mxu0 0.0
  %3248 = vmatprep.subr.mxu0 0.0
  %3249 = vmatpush1.msra.mxu0 0.0
  %3250 = vmatprep.subr.mxu0 0.0
  %3251 = vmatpush1.msra.mxu0 0.0
  %3252 = vmatprep.subr.mxu0 0.0
  %3253 = vmatpush1.msra.mxu0 0.0
  %3254 = vmatprep.subr.mxu0 0.0
  %3255 = vmatpush1.msra.mxu0 0.0
  %3256 = vmatprep.mubr.f32.mxu0 0.0
  %3257 = vmatmul.mubr.f32.gmra.mrb[0].mxu0 %v3141
  %v3258 = vpop.f32.mrb[0].mxu0
  %v3259 = vadd.f32 %v3137, %v3258
  %v3260 = vpop.f32.mrb[0].mxu0
  %3261 = vmatprep.mubr.f32.mxu0 0.0
  %3262 = vmatmul.mubr.f32.gmra.mrb[0].mxu0 %v3144
  %v3263 = vpop.f32.mrb[0].mxu0
  %v3264 = vadd.f32 %v3137, %v3263
  %v3265 = vpop.f32.mrb[0].mxu0
  %3266 = vmatprep.mubr.f32.mxu0 0.0
  %3267 = vmatmul.mubr.f32.gmra.mrb[0].mxu0 %v3147
  %v3268 = vpop.f32.mrb[0].mxu0
  %v3269 = vadd.f32 %v3137, %v3268
  %v3270 = vpop.f32.mrb[0].mxu0
  %3271 = vmatprep.mubr.f32.mxu0 0.0
  %3272 = vmatmul.mubr.f32.gmra.mrb[0].mxu0 %v3150
  %v3273 = vpop.f32.mrb[0].mxu0
  %v3274 = vadd.f32 %v3137, %v3273
  %v3275 = vpop.f32.mrb[0].mxu0
  %3276 = vmatprep.mubr.f32.mxu0 0.0
  %3277 = vmatmul.mubr.f32.gmra.mrb[0].mxu0 %v3153
  %v3278 = vpop.f32.mrb[0].mxu0
  %v3279 = vadd.f32 %v3137, %v3278
  %v3280 = vpop.f32.mrb[0].mxu0
  %3281 = vmatprep.mubr.f32.mxu0 0.0
  %3282 = vmatmul.mubr.f32.gmra.mrb[0].mxu0 %v3156
  %v3283 = vpop.f32.mrb[0].mxu0
  %v3284 = vadd.f32 %v3137, %v3283
  %v3285 = vpop.f32.mrb[0].mxu0
  %3286 = vmatprep.mubr.f32.mxu0 0.0
  %3287 = vmatmul.mubr.f32.gmra.mrb[0].mxu0 %v3159
  %v3288 = vpop.f32.mrb[0].mxu0
  %v3289 = vadd.f32 %v3137, %v3288
  %v3290 = vpop.f32.mrb[0].mxu0
  %3291 = vmatprep.mubr.f32.mxu0 0.0
  %3292 = vmatmul.mubr.f32.gmra.mrb[0].mxu0 %v3162
  %v3293 = vpop.f32.mrb[0].mxu0
  %v3294 = vadd.f32 %v3137, %v3293
  %v3295 = vpop.f32.mrb[0].mxu0
  %3296 = vmatprep.mubr.f32.mxu0 0.0
  %3297 = vmatmul.mubr.f32.gmra.mrb[0].mxu0 %v3165
  %v3298 = vpop.f32.mrb[0].mxu0
  %v3299 = vadd.f32 %v3137, %v3298
  %v3300 = vpop.f32.mrb[0].mxu0
  %3301 = vmatprep.mubr.f32.mxu0 0.0
  %3302 = vmatmul.mubr.f32.gmra.mrb[0].mxu0 %v3168
  %v3303 = vpop.f32.mrb[0].mxu0
  %v3304 = vadd.f32 %v3137, %v3303
  %v3305 = vpop.f32.mrb[0].mxu0
  %3306 = vmatprep.mubr.f32.mxu0 0.0
  %3307 = vmatmul.mubr.f32.gmra.mrb[0].mxu0 %v3171
  %v3308 = vpop.f32.mrb[0].mxu0
  %v3309 = vadd.f32 %v3137, %v3308
  %v3310 = vpop.f32.mrb[0].mxu0
  %3311 = vmatprep.mubr.f32.mxu0 0.0
  %3312 = vmatmul.mubr.f32.gmra.mrb[0].mxu0 %v3174
  %v3313 = vpop.f32.mrb[0].mxu0
  %v3314 = vadd.f32 %v3137, %v3313
  %v3315 = vpop.f32.mrb[0].mxu0
  %3316 = vmatprep.mubr.f32.mxu0 0.0
  %3317 = vmatmul.mubr.f32.gmra.mrb[0].mxu0 %v3177
  %v3318 = vpop.f32.mrb[0].mxu0
  %v3319 = vadd.f32 %v3137, %v3318
  %v3320 = vpop.f32.mrb[0].mxu0
  %3321 = vmatprep.mubr.f32.mxu0 0.0
  %3322 = vmatmul.mubr.f32.gmra.mrb[0].mxu0 %v3180
  %v3323 = vpop.f32.mrb[0].mxu0
  %v3324 = vadd.f32 %v3137, %v3323
  %v3325 = vpop.f32.mrb[0].mxu0
  %3326 = vmatprep.mubr.f32.mxu0 0.0
  %3327 = vmatmul.mubr.f32.gmra.mrb[0].mxu0 %v3183
  %v3328 = vpop.f32.mrb[0].mxu0
  %v3329 = vadd.f32 %v3137, %v3328
  %v3330 = vpop.f32.mrb[0].mxu0
  %3331 = vmatprep.mubr.f32.mxu0 0.0
  %3332 = vmatmul.mubr.f32.gmra.mrb[0].mxu0 %v3186
  %v3333 = vpop.f32.mrb[0].mxu0
  %v3334 = vadd.f32 %v3137, %v3333
  %v3335 = vpop.f32.mrb[0].mxu0
  %3336 = vdwg.mxu0
  %v3337 = vmax.f32 %v3259, 0.0
  %v3338 = vmax.f32 %v3264, 0.0
  %v3339 = vmax.f32 %v3269, 0.0
  %v3340 = vmax.f32 %v3274, 0.0
  %v3341 = vmax.f32 %v3279, 0.0
  %v3342 = vmax.f32 %v3284, 0.0
  %v3343 = vmax.f32 %v3289, 0.0
  %v3344 = vmax.f32 %v3294, 0.0
  %v3345 = vmax.f32 %v3299, 0.0
  %v3346 = vmax.f32 %v3304, 0.0
  %v3347 = vmax.f32 %v3309, 0.0
  %v3348 = vmax.f32 %v3314, 0.0
  %v3349 = vmax.f32 %v3319, 0.0
  %v3350 = vmax.f32 %v3324, 0.0
  %v3351 = vmax.f32 %v3329, 0.0
  %v3352 = vmax.f32 %v3334, 0.0
  %s3353 = scalar_lea.vmem [#allocation3], 16
  %3354 = vst.msk [vmem:[%s3353 + $0x1] sm:$0xff] %vm72, %v3337
  %3355 = vst.msk [vmem:[%s3353 + $0x11] sm:$0xff] %vm72, %v3338
  %3356 = vst.msk [vmem:[%s3353 + $0x21] sm:$0xff] %vm72, %v3339
  %3357 = vst.msk [vmem:[%s3353 + $0x31] sm:$0xff] %vm72, %v3340
  %3358 = vst.msk [vmem:[%s3353 + $0x41] sm:$0xff] %vm72, %v3341
  %3359 = vst.msk [vmem:[%s3353 + $0x51] sm:$0xff] %vm72, %v3342
  %3360 = vst.msk [vmem:[%s3353 + $0x61] sm:$0xff] %vm72, %v3343
  %3361 = vst.msk [vmem:[%s3353 + $0x71] sm:$0xff] %vm72, %v3344
  %3362 = vst.msk [vmem:[%s3353 + $0xa1] sm:$0xff] %vm72, %v3345
  %3363 = vst.msk [vmem:[%s3353 + $0xb1] sm:$0xff] %vm72, %v3346
  %3364 = vst.msk [vmem:[%s3353 + $0xc1] sm:$0xff] %vm72, %v3347
  %3365 = vst.msk [vmem:[%s3353 + $0xd1] sm:$0xff] %vm72, %v3348
  %3366 = vst.msk [vmem:[%s3353 + $0xe1] sm:$0xff] %vm72, %v3349
  %3367 = vst.msk [vmem:[%s3353 + $0xf1] sm:$0xff] %vm72, %v3350
  %3368 = vst.msk [vmem:[%s3353 + $0x101] sm:$0xff] %vm72, %v3351
  %3369 = vst.msk [vmem:[%s3353 + $0x111] sm:$0xff] %vm72, %v3352
  %v3370 = vld [vmem:[#allocation3] sm:$0xff]
  %v3371 = vld [vmem:[#allocation3 + $0x10] sm:$0xff]
  %v3372 = vld [vmem:[#allocation3 + $0x20] sm:$0xff]
  %v3373 = vld [vmem:[#allocation3 + $0x30] sm:$0xff]
  %v3374 = vld [vmem:[#allocation3 + $0x40] sm:$0xff]
  %v3375 = vld [vmem:[#allocation3 + $0x50] sm:$0xff]
  %v3376 = vld [vmem:[#allocation3 + $0x60] sm:$0xff]
  %v3377 = vld [vmem:[#allocation3 + $0x70] sm:$0xff]
  %v3378 = vld [vmem:[#allocation3 + $0xa0] sm:$0xff]
  %v3379 = vld [vmem:[#allocation3 + $0xb0] sm:$0xff]
  %v3380 = vld [vmem:[#allocation3 + $0xc0] sm:$0xff]
  %v3381 = vld [vmem:[#allocation3 + $0xd0] sm:$0xff]
  %v3382 = vld [vmem:[#allocation3 + $0xe0] sm:$0xff]
  %v3383 = vld [vmem:[#allocation3 + $0xf0] sm:$0xff]
  %v3384 = vld [vmem:[#allocation3 + $0x100] sm:$0xff]
  %v3385 = vld [vmem:[#allocation3 + $0x110] sm:$0xff]
  %3386 = vst.msk [vmem:[#allocation5] sm:$0xff] %vm72, %v3370
  %3387 = vst.msk [vmem:[#allocation5 + $0x8] sm:$0xff] %vm72, %v3371
  %3388 = vst.msk [vmem:[#allocation5 + $0x10] sm:$0xff] %vm72, %v3372
  %3389 = vst.msk [vmem:[#allocation5 + $0x18] sm:$0xff] %vm72, %v3373
  %3390 = vst.msk [vmem:[#allocation5 + $0x20] sm:$0xff] %vm72, %v3374
  %3391 = vst.msk [vmem:[#allocation5 + $0x28] sm:$0xff] %vm72, %v3375
  %3392 = vst.msk [vmem:[#allocation5 + $0x30] sm:$0xff] %vm72, %v3376
  %3393 = vst.msk [vmem:[#allocation5 + $0x38] sm:$0xff] %vm72, %v3377
  %3394 = vst.msk [vmem:[#allocation5 + $0x40] sm:$0xff] %vm72, %v3378
  %3395 = vst.msk [vmem:[#allocation5 + $0x48] sm:$0xff] %vm72, %v3379
  %3396 = vst.msk [vmem:[#allocation5 + $0x50] sm:$0xff] %vm72, %v3380
  %3397 = vst.msk [vmem:[#allocation5 + $0x58] sm:$0xff] %vm72, %v3381
  %3398 = vst.msk [vmem:[#allocation5 + $0x60] sm:$0xff] %vm72, %v3382
  %3399 = vst.msk [vmem:[#allocation5 + $0x68] sm:$0xff] %vm72, %v3383
  %3400 = vst.msk [vmem:[#allocation5 + $0x70] sm:$0xff] %vm72, %v3384
  %3401 = vst.msk [vmem:[#allocation5 + $0x78] sm:$0xff] %vm72, %v3385
  %v3402 = vld [vmem:[#allocation3 + $0x1] sm:$0xff]
  %v3403 = vld [vmem:[#allocation3 + $0x11] sm:$0xff]
  %v3404 = vld [vmem:[#allocation3 + $0x21] sm:$0xff]
  %v3405 = vld [vmem:[#allocation3 + $0x31] sm:$0xff]
  %v3406 = vld [vmem:[#allocation3 + $0x41] sm:$0xff]
  %v3407 = vld [vmem:[#allocation3 + $0x51] sm:$0xff]
  %v3408 = vld [vmem:[#allocation3 + $0x61] sm:$0xff]
  %v3409 = vld [vmem:[#allocation3 + $0x71] sm:$0xff]
  %v3410 = vld [vmem:[#allocation3 + $0xa1] sm:$0xff]
  %v3411 = vld [vmem:[#allocation3 + $0xb1] sm:$0xff]
  %v3412 = vld [vmem:[#allocation3 + $0xc1] sm:$0xff]
  %v3413 = vld [vmem:[#allocation3 + $0xd1] sm:$0xff]
  %v3414 = vld [vmem:[#allocation3 + $0xe1] sm:$0xff]
  %v3415 = vld [vmem:[#allocation3 + $0xf1] sm:$0xff]
  %v3416 = vld [vmem:[#allocation3 + $0x101] sm:$0xff]
  %v3417 = vld [vmem:[#allocation3 + $0x111] sm:$0xff]
  %3434 = vrot.lane.b32.xlu0 %v3402, 8
  %v3435 = vpop.permute.xlu0 %3434
  %3436 = vrot.lane.b32.xlu0 %v3403, 8
  %v3437 = vpop.permute.xlu0 %3436
  %3438 = vrot.lane.b32.xlu0 %v3404, 8
  %v3439 = vpop.permute.xlu0 %3438
  %3440 = vrot.lane.b32.xlu0 %v3405, 8
  %v3441 = vpop.permute.xlu0 %3440
  %3442 = vrot.lane.b32.xlu0 %v3406, 8
  %v3443 = vpop.permute.xlu0 %3442
  %3444 = vrot.lane.b32.xlu0 %v3407, 8
  %v3445 = vpop.permute.xlu0 %3444
  %3446 = vrot.lane.b32.xlu0 %v3408, 8
  %v3447 = vpop.permute.xlu0 %3446
  %3448 = vrot.lane.b32.xlu0 %v3409, 8
  %v3449 = vpop.permute.xlu0 %3448
  %3450 = vrot.lane.b32.xlu0 %v3410, 8
  %v3451 = vpop.permute.xlu0 %3450
  %3452 = vrot.lane.b32.xlu0 %v3411, 8
  %v3453 = vpop.permute.xlu0 %3452
  %3454 = vrot.lane.b32.xlu0 %v3412, 8
  %v3455 = vpop.permute.xlu0 %3454
  %3456 = vrot.lane.b32.xlu0 %v3413, 8
  %v3457 = vpop.permute.xlu0 %3456
  %3458 = vrot.lane.b32.xlu0 %v3414, 8
  %v3459 = vpop.permute.xlu0 %3458
  %3460 = vrot.lane.b32.xlu0 %v3415, 8
  %v3461 = vpop.permute.xlu0 %3460
  %3462 = vrot.lane.b32.xlu0 %v3416, 8
  %v3463 = vpop.permute.xlu0 %3462
  %3464 = vrot.lane.b32.xlu0 %v3417, 8
  %v3465 = vpop.permute.xlu0 %3464
  %vm3482 = vcmask 130112
  %3483 = vst.msk [vmem:[#allocation5] sm:$0xff] %vm3482, %v3435
  %3484 = vst.msk [vmem:[#allocation5 + $0x8] sm:$0xff] %vm3482, %v3437
  %3485 = vst.msk [vmem:[#allocation5 + $0x10] sm:$0xff] %vm3482, %v3439
  %3486 = vst.msk [vmem:[#allocation5 + $0x18] sm:$0xff] %vm3482, %v3441
  %3487 = vst.msk [vmem:[#allocation5 + $0x20] sm:$0xff] %vm3482, %v3443
  %3488 = vst.msk [vmem:[#allocation5 + $0x28] sm:$0xff] %vm3482, %v3445
  %3489 = vst.msk [vmem:[#allocation5 + $0x30] sm:$0xff] %vm3482, %v3447
  %3490 = vst.msk [vmem:[#allocation5 + $0x38] sm:$0xff] %vm3482, %v3449
  %3491 = vst.msk [vmem:[#allocation5 + $0x40] sm:$0xff] %vm3482, %v3451
  %3492 = vst.msk [vmem:[#allocation5 + $0x48] sm:$0xff] %vm3482, %v3453
  %3493 = vst.msk [vmem:[#allocation5 + $0x50] sm:$0xff] %vm3482, %v3455
  %3494 = vst.msk [vmem:[#allocation5 + $0x58] sm:$0xff] %vm3482, %v3457
  %3495 = vst.msk [vmem:[#allocation5 + $0x60] sm:$0xff] %vm3482, %v3459
  %3496 = vst.msk [vmem:[#allocation5 + $0x68] sm:$0xff] %vm3482, %v3461
  %3497 = vst.msk [vmem:[#allocation5 + $0x70] sm:$0xff] %vm3482, %v3463
  %3498 = vst.msk [vmem:[#allocation5 + $0x78] sm:$0xff] %vm3482, %v3465
  %v3499 = vld [vmem:[#allocation3 + $0x2] sm:$0xff]
  %v3500 = vld [vmem:[#allocation3 + $0x12] sm:$0xff]
  %v3501 = vld [vmem:[#allocation3 + $0x22] sm:$0xff]
  %v3502 = vld [vmem:[#allocation3 + $0x32] sm:$0xff]
  %v3503 = vld [vmem:[#allocation3 + $0x42] sm:$0xff]
  %v3504 = vld [vmem:[#allocation3 + $0x52] sm:$0xff]
  %v3505 = vld [vmem:[#allocation3 + $0x62] sm:$0xff]
  %v3506 = vld [vmem:[#allocation3 + $0x72] sm:$0xff]
  %v3507 = vld [vmem:[#allocation3 + $0xa2] sm:$0xff]
  %v3508 = vld [vmem:[#allocation3 + $0xb2] sm:$0xff]
  %v3509 = vld [vmem:[#allocation3 + $0xc2] sm:$0xff]
  %v3510 = vld [vmem:[#allocation3 + $0xd2] sm:$0xff]
  %v3511 = vld [vmem:[#allocation3 + $0xe2] sm:$0xff]
  %v3512 = vld [vmem:[#allocation3 + $0xf2] sm:$0xff]
  %v3513 = vld [vmem:[#allocation3 + $0x102] sm:$0xff]
  %v3514 = vld [vmem:[#allocation3 + $0x112] sm:$0xff]
  %3531 = vrot.lane.b32.xlu0 %v3499, 16
  %v3532 = vpop.permute.xlu0 %3531
  %3533 = vrot.lane.b32.xlu0 %v3500, 16
  %v3534 = vpop.permute.xlu0 %3533
  %3535 = vrot.lane.b32.xlu0 %v3501, 16
  %v3536 = vpop.permute.xlu0 %3535
  %3537 = vrot.lane.b32.xlu0 %v3502, 16
  %v3538 = vpop.permute.xlu0 %3537
  %3539 = vrot.lane.b32.xlu0 %v3503, 16
  %v3540 = vpop.permute.xlu0 %3539
  %3541 = vrot.lane.b32.xlu0 %v3504, 16
  %v3542 = vpop.permute.xlu0 %3541
  %3543 = vrot.lane.b32.xlu0 %v3505, 16
  %v3544 = vpop.permute.xlu0 %3543
  %3545 = vrot.lane.b32.xlu0 %v3506, 16
  %v3546 = vpop.permute.xlu0 %3545
  %3547 = vrot.lane.b32.xlu0 %v3507, 16
  %v3548 = vpop.permute.xlu0 %3547
  %3549 = vrot.lane.b32.xlu0 %v3508, 16
  %v3550 = vpop.permute.xlu0 %3549
  %3551 = vrot.lane.b32.xlu0 %v3509, 16
  %v3552 = vpop.permute.xlu0 %3551
  %3553 = vrot.lane.b32.xlu0 %v3510, 16
  %v3554 = vpop.permute.xlu0 %3553
  %3555 = vrot.lane.b32.xlu0 %v3511, 16
  %v3556 = vpop.permute.xlu0 %3555
  %3557 = vrot.lane.b32.xlu0 %v3512, 16
  %v3558 = vpop.permute.xlu0 %3557
  %3559 = vrot.lane.b32.xlu0 %v3513, 16
  %v3560 = vpop.permute.xlu0 %3559
  %3561 = vrot.lane.b32.xlu0 %v3514, 16
  %v3562 = vpop.permute.xlu0 %3561
  %vm3579 = vcmask 195712
  %3580 = vst.msk [vmem:[#allocation5] sm:$0xff] %vm3579, %v3532
  %3581 = vst.msk [vmem:[#allocation5 + $0x8] sm:$0xff] %vm3579, %v3534
  %3582 = vst.msk [vmem:[#allocation5 + $0x10] sm:$0xff] %vm3579, %v3536
  %3583 = vst.msk [vmem:[#allocation5 + $0x18] sm:$0xff] %vm3579, %v3538
  %3584 = vst.msk [vmem:[#allocation5 + $0x20] sm:$0xff] %vm3579, %v3540
  %3585 = vst.msk [vmem:[#allocation5 + $0x28] sm:$0xff] %vm3579, %v3542
  %3586 = vst.msk [vmem:[#allocation5 + $0x30] sm:$0xff] %vm3579, %v3544
  %3587 = vst.msk [vmem:[#allocation5 + $0x38] sm:$0xff] %vm3579, %v3546
  %3588 = vst.msk [vmem:[#allocation5 + $0x40] sm:$0xff] %vm3579, %v3548
  %3589 = vst.msk [vmem:[#allocation5 + $0x48] sm:$0xff] %vm3579, %v3550
  %3590 = vst.msk [vmem:[#allocation5 + $0x50] sm:$0xff] %vm3579, %v3552
  %3591 = vst.msk [vmem:[#allocation5 + $0x58] sm:$0xff] %vm3579, %v3554
  %3592 = vst.msk [vmem:[#allocation5 + $0x60] sm:$0xff] %vm3579, %v3556
  %3593 = vst.msk [vmem:[#allocation5 + $0x68] sm:$0xff] %vm3579, %v3558
  %3594 = vst.msk [vmem:[#allocation5 + $0x70] sm:$0xff] %vm3579, %v3560
  %3595 = vst.msk [vmem:[#allocation5 + $0x78] sm:$0xff] %vm3579, %v3562
  %v3596 = vld [vmem:[%s3353] sm:$0xff]
  %v3597 = vld [vmem:[%s3353 + $0x10] sm:$0xff]
  %v3598 = vld [vmem:[%s3353 + $0x20] sm:$0xff]
  %v3599 = vld [vmem:[%s3353 + $0x30] sm:$0xff]
  %v3600 = vld [vmem:[%s3353 + $0x40] sm:$0xff]
  %v3601 = vld [vmem:[%s3353 + $0x50] sm:$0xff]
  %v3602 = vld [vmem:[%s3353 + $0x60] sm:$0xff]
  %v3603 = vld [vmem:[%s3353 + $0x70] sm:$0xff]
  %v3604 = vld [vmem:[%s3353 + $0xa0] sm:$0xff]
  %v3605 = vld [vmem:[%s3353 + $0xb0] sm:$0xff]
  %v3606 = vld [vmem:[%s3353 + $0xc0] sm:$0xff]
  %v3607 = vld [vmem:[%s3353 + $0xd0] sm:$0xff]
  %v3608 = vld [vmem:[%s3353 + $0xe0] sm:$0xff]
  %v3609 = vld [vmem:[%s3353 + $0xf0] sm:$0xff]
  %v3610 = vld [vmem:[%s3353 + $0x100] sm:$0xff]
  %v3611 = vld [vmem:[%s3353 + $0x110] sm:$0xff]
  %3628 = vrot.lane.b32.xlu0 %v3596, 24
  %v3629 = vpop.permute.xlu0 %3628
  %3630 = vrot.lane.b32.xlu0 %v3597, 24
  %v3631 = vpop.permute.xlu0 %3630
  %3632 = vrot.lane.b32.xlu0 %v3598, 24
  %v3633 = vpop.permute.xlu0 %3632
  %3634 = vrot.lane.b32.xlu0 %v3599, 24
  %v3635 = vpop.permute.xlu0 %3634
  %3636 = vrot.lane.b32.xlu0 %v3600, 24
  %v3637 = vpop.permute.xlu0 %3636
  %3638 = vrot.lane.b32.xlu0 %v3601, 24
  %v3639 = vpop.permute.xlu0 %3638
  %3640 = vrot.lane.b32.xlu0 %v3602, 24
  %v3641 = vpop.permute.xlu0 %3640
  %3642 = vrot.lane.b32.xlu0 %v3603, 24
  %v3643 = vpop.permute.xlu0 %3642
  %3644 = vrot.lane.b32.xlu0 %v3604, 24
  %v3645 = vpop.permute.xlu0 %3644
  %3646 = vrot.lane.b32.xlu0 %v3605, 24
  %v3647 = vpop.permute.xlu0 %3646
  %3648 = vrot.lane.b32.xlu0 %v3606, 24
  %v3649 = vpop.permute.xlu0 %3648
  %3650 = vrot.lane.b32.xlu0 %v3607, 24
  %v3651 = vpop.permute.xlu0 %3650
  %3652 = vrot.lane.b32.xlu0 %v3608, 24
  %v3653 = vpop.permute.xlu0 %3652
  %3654 = vrot.lane.b32.xlu0 %v3609, 24
  %v3655 = vpop.permute.xlu0 %3654
  %3656 = vrot.lane.b32.xlu0 %v3610, 24
  %v3657 = vpop.permute.xlu0 %3656
  %3658 = vrot.lane.b32.xlu0 %v3611, 24
  %v3659 = vpop.permute.xlu0 %3658
  %vm3676 = vcmask 261312
  %3677 = vst.msk [vmem:[#allocation5] sm:$0xff] %vm3676, %v3629
  %3678 = vst.msk [vmem:[#allocation5 + $0x8] sm:$0xff] %vm3676, %v3631
  %3679 = vst.msk [vmem:[#allocation5 + $0x10] sm:$0xff] %vm3676, %v3633
  %3680 = vst.msk [vmem:[#allocation5 + $0x18] sm:$0xff] %vm3676, %v3635
  %3681 = vst.msk [vmem:[#allocation5 + $0x20] sm:$0xff] %vm3676, %v3637
  %3682 = vst.msk [vmem:[#allocation5 + $0x28] sm:$0xff] %vm3676, %v3639
  %3683 = vst.msk [vmem:[#allocation5 + $0x30] sm:$0xff] %vm3676, %v3641
  %3684 = vst.msk [vmem:[#allocation5 + $0x38] sm:$0xff] %vm3676, %v3643
  %3685 = vst.msk [vmem:[#allocation5 + $0x40] sm:$0xff] %vm3676, %v3645
  %3686 = vst.msk [vmem:[#allocation5 + $0x48] sm:$0xff] %vm3676, %v3647
  %3687 = vst.msk [vmem:[#allocation5 + $0x50] sm:$0xff] %vm3676, %v3649
  %3688 = vst.msk [vmem:[#allocation5 + $0x58] sm:$0xff] %vm3676, %v3651
  %3689 = vst.msk [vmem:[#allocation5 + $0x60] sm:$0xff] %vm3676, %v3653
  %3690 = vst.msk [vmem:[#allocation5 + $0x68] sm:$0xff] %vm3676, %v3655
  %3691 = vst.msk [vmem:[#allocation5 + $0x70] sm:$0xff] %vm3676, %v3657
  %3692 = vst.msk [vmem:[#allocation5 + $0x78] sm:$0xff] %vm3676, %v3659
  %v3693 = vld [vmem:[%s3353 + $0x1] sm:$0xff]
  %v3694 = vld [vmem:[%s3353 + $0x11] sm:$0xff]
  %v3695 = vld [vmem:[%s3353 + $0x21] sm:$0xff]
  %v3696 = vld [vmem:[%s3353 + $0x31] sm:$0xff]
  %v3697 = vld [vmem:[%s3353 + $0x41] sm:$0xff]
  %v3698 = vld [vmem:[%s3353 + $0x51] sm:$0xff]
  %v3699 = vld [vmem:[%s3353 + $0x61] sm:$0xff]
  %v3700 = vld [vmem:[%s3353 + $0x71] sm:$0xff]
  %v3701 = vld [vmem:[%s3353 + $0xa1] sm:$0xff]
  %v3702 = vld [vmem:[%s3353 + $0xb1] sm:$0xff]
  %v3703 = vld [vmem:[%s3353 + $0xc1] sm:$0xff]
  %v3704 = vld [vmem:[%s3353 + $0xd1] sm:$0xff]
  %v3705 = vld [vmem:[%s3353 + $0xe1] sm:$0xff]
  %v3706 = vld [vmem:[%s3353 + $0xf1] sm:$0xff]
  %v3707 = vld [vmem:[%s3353 + $0x101] sm:$0xff]
  %v3708 = vld [vmem:[%s3353 + $0x111] sm:$0xff]
  %3725 = vrot.lane.b32.xlu0 %v3693, 32
  %v3726 = vpop.permute.xlu0 %3725
  %3727 = vrot.lane.b32.xlu0 %v3694, 32
  %v3728 = vpop.permute.xlu0 %3727
  %3729 = vrot.lane.b32.xlu0 %v3695, 32
  %v3730 = vpop.permute.xlu0 %3729
  %3731 = vrot.lane.b32.xlu0 %v3696, 32
  %v3732 = vpop.permute.xlu0 %3731
  %3733 = vrot.lane.b32.xlu0 %v3697, 32
  %v3734 = vpop.permute.xlu0 %3733
  %3735 = vrot.lane.b32.xlu0 %v3698, 32
  %v3736 = vpop.permute.xlu0 %3735
  %3737 = vrot.lane.b32.xlu0 %v3699, 32
  %v3738 = vpop.permute.xlu0 %3737
  %3739 = vrot.lane.b32.xlu0 %v3700, 32
  %v3740 = vpop.permute.xlu0 %3739
  %3741 = vrot.lane.b32.xlu0 %v3701, 32
  %v3742 = vpop.permute.xlu0 %3741
  %3743 = vrot.lane.b32.xlu0 %v3702, 32
  %v3744 = vpop.permute.xlu0 %3743
  %3745 = vrot.lane.b32.xlu0 %v3703, 32
  %v3746 = vpop.permute.xlu0 %3745
  %3747 = vrot.lane.b32.xlu0 %v3704, 32
  %v3748 = vpop.permute.xlu0 %3747
  %3749 = vrot.lane.b32.xlu0 %v3705, 32
  %v3750 = vpop.permute.xlu0 %3749
  %3751 = vrot.lane.b32.xlu0 %v3706, 32
  %v3752 = vpop.permute.xlu0 %3751
  %3753 = vrot.lane.b32.xlu0 %v3707, 32
  %v3754 = vpop.permute.xlu0 %3753
  %3755 = vrot.lane.b32.xlu0 %v3708, 32
  %v3756 = vpop.permute.xlu0 %3755
  %vm3773 = vcmask 326912
  %3774 = vst.msk [vmem:[#allocation5] sm:$0xff] %vm3773, %v3726
  %3775 = vst.msk [vmem:[#allocation5 + $0x8] sm:$0xff] %vm3773, %v3728
  %3776 = vst.msk [vmem:[#allocation5 + $0x10] sm:$0xff] %vm3773, %v3730
  %3777 = vst.msk [vmem:[#allocation5 + $0x18] sm:$0xff] %vm3773, %v3732
  %3778 = vst.msk [vmem:[#allocation5 + $0x20] sm:$0xff] %vm3773, %v3734
  %3779 = vst.msk [vmem:[#allocation5 + $0x28] sm:$0xff] %vm3773, %v3736
  %3780 = vst.msk [vmem:[#allocation5 + $0x30] sm:$0xff] %vm3773, %v3738
  %3781 = vst.msk [vmem:[#allocation5 + $0x38] sm:$0xff] %vm3773, %v3740
  %3782 = vst.msk [vmem:[#allocation5 + $0x40] sm:$0xff] %vm3773, %v3742
  %3783 = vst.msk [vmem:[#allocation5 + $0x48] sm:$0xff] %vm3773, %v3744
  %3784 = vst.msk [vmem:[#allocation5 + $0x50] sm:$0xff] %vm3773, %v3746
  %3785 = vst.msk [vmem:[#allocation5 + $0x58] sm:$0xff] %vm3773, %v3748
  %3786 = vst.msk [vmem:[#allocation5 + $0x60] sm:$0xff] %vm3773, %v3750
  %3787 = vst.msk [vmem:[#allocation5 + $0x68] sm:$0xff] %vm3773, %v3752
  %3788 = vst.msk [vmem:[#allocation5 + $0x70] sm:$0xff] %vm3773, %v3754
  %3789 = vst.msk [vmem:[#allocation5 + $0x78] sm:$0xff] %vm3773, %v3756
  %v3790 = vld [vmem:[%s3353 + $0x2] sm:$0xff]
  %v3791 = vld [vmem:[%s3353 + $0x12] sm:$0xff]
  %v3792 = vld [vmem:[%s3353 + $0x22] sm:$0xff]
  %v3793 = vld [vmem:[%s3353 + $0x32] sm:$0xff]
  %v3794 = vld [vmem:[%s3353 + $0x42] sm:$0xff]
  %v3795 = vld [vmem:[%s3353 + $0x52] sm:$0xff]
  %v3796 = vld [vmem:[%s3353 + $0x62] sm:$0xff]
  %v3797 = vld [vmem:[%s3353 + $0x72] sm:$0xff]
  %v3798 = vld [vmem:[%s3353 + $0xa2] sm:$0xff]
  %v3799 = vld [vmem:[%s3353 + $0xb2] sm:$0xff]
  %v3800 = vld [vmem:[%s3353 + $0xc2] sm:$0xff]
  %v3801 = vld [vmem:[%s3353 + $0xd2] sm:$0xff]
  %v3802 = vld [vmem:[%s3353 + $0xe2] sm:$0xff]
  %v3803 = vld [vmem:[%s3353 + $0xf2] sm:$0xff]
  %v3804 = vld [vmem:[%s3353 + $0x102] sm:$0xff]
  %v3805 = vld [vmem:[%s3353 + $0x112] sm:$0xff]
  %3822 = vrot.lane.b32.xlu0 %v3790, 40
  %v3823 = vpop.permute.xlu0 %3822
  %3824 = vrot.lane.b32.xlu0 %v3791, 40
  %v3825 = vpop.permute.xlu0 %3824
  %3826 = vrot.lane.b32.xlu0 %v3792, 40
  %v3827 = vpop.permute.xlu0 %3826
  %3828 = vrot.lane.b32.xlu0 %v3793, 40
  %v3829 = vpop.permute.xlu0 %3828
  %3830 = vrot.lane.b32.xlu0 %v3794, 40
  %v3831 = vpop.permute.xlu0 %3830
  %3832 = vrot.lane.b32.xlu0 %v3795, 40
  %v3833 = vpop.permute.xlu0 %3832
  %3834 = vrot.lane.b32.xlu0 %v3796, 40
  %v3835 = vpop.permute.xlu0 %3834
  %3836 = vrot.lane.b32.xlu0 %v3797, 40
  %v3837 = vpop.permute.xlu0 %3836
  %3838 = vrot.lane.b32.xlu0 %v3798, 40
  %v3839 = vpop.permute.xlu0 %3838
  %3840 = vrot.lane.b32.xlu0 %v3799, 40
  %v3841 = vpop.permute.xlu0 %3840
  %3842 = vrot.lane.b32.xlu0 %v3800, 40
  %v3843 = vpop.permute.xlu0 %3842
  %3844 = vrot.lane.b32.xlu0 %v3801, 40
  %v3845 = vpop.permute.xlu0 %3844
  %3846 = vrot.lane.b32.xlu0 %v3802, 40
  %v3847 = vpop.permute.xlu0 %3846
  %3848 = vrot.lane.b32.xlu0 %v3803, 40
  %v3849 = vpop.permute.xlu0 %3848
  %3850 = vrot.lane.b32.xlu0 %v3804, 40
  %v3851 = vpop.permute.xlu0 %3850
  %3852 = vrot.lane.b32.xlu0 %v3805, 40
  %v3853 = vpop.permute.xlu0 %3852
  %vm3870 = vcmask 392512
  %3871 = vst.msk [vmem:[#allocation5] sm:$0xff] %vm3870, %v3823
  %3872 = vst.msk [vmem:[#allocation5 + $0x8] sm:$0xff] %vm3870, %v3825
  %3873 = vst.msk [vmem:[#allocation5 + $0x10] sm:$0xff] %vm3870, %v3827
  %3874 = vst.msk [vmem:[#allocation5 + $0x18] sm:$0xff] %vm3870, %v3829
  %3875 = vst.msk [vmem:[#allocation5 + $0x20] sm:$0xff] %vm3870, %v3831
  %3876 = vst.msk [vmem:[#allocation5 + $0x28] sm:$0xff] %vm3870, %v3833
  %3877 = vst.msk [vmem:[#allocation5 + $0x30] sm:$0xff] %vm3870, %v3835
  %3878 = vst.msk [vmem:[#allocation5 + $0x38] sm:$0xff] %vm3870, %v3837
  %3879 = vst.msk [vmem:[#allocation5 + $0x40] sm:$0xff] %vm3870, %v3839
  %3880 = vst.msk [vmem:[#allocation5 + $0x48] sm:$0xff] %vm3870, %v3841
  %3881 = vst.msk [vmem:[#allocation5 + $0x50] sm:$0xff] %vm3870, %v3843
  %3882 = vst.msk [vmem:[#allocation5 + $0x58] sm:$0xff] %vm3870, %v3845
  %3883 = vst.msk [vmem:[#allocation5 + $0x60] sm:$0xff] %vm3870, %v3847
  %3884 = vst.msk [vmem:[#allocation5 + $0x68] sm:$0xff] %vm3870, %v3849
  %3885 = vst.msk [vmem:[#allocation5 + $0x70] sm:$0xff] %vm3870, %v3851
  %3886 = vst.msk [vmem:[#allocation5 + $0x78] sm:$0xff] %vm3870, %v3853
  %s3887 = scalar_lea.vmem [#allocation3], 32
  %v3888 = vld [vmem:[%s3887] sm:$0xff]
  %v3889 = vld [vmem:[%s3887 + $0x10] sm:$0xff]
  %v3890 = vld [vmem:[%s3887 + $0x20] sm:$0xff]
  %v3891 = vld [vmem:[%s3887 + $0x30] sm:$0xff]
  %v3892 = vld [vmem:[%s3887 + $0x40] sm:$0xff]
  %v3893 = vld [vmem:[%s3887 + $0x50] sm:$0xff]
  %v3894 = vld [vmem:[%s3887 + $0x60] sm:$0xff]
  %v3895 = vld [vmem:[%s3887 + $0x70] sm:$0xff]
  %v3896 = vld [vmem:[%s3887 + $0xa0] sm:$0xff]
  %v3897 = vld [vmem:[%s3887 + $0xb0] sm:$0xff]
  %v3898 = vld [vmem:[%s3887 + $0xc0] sm:$0xff]
  %v3899 = vld [vmem:[%s3887 + $0xd0] sm:$0xff]
  %v3900 = vld [vmem:[%s3887 + $0xe0] sm:$0xff]
  %v3901 = vld [vmem:[%s3887 + $0xf0] sm:$0xff]
  %v3902 = vld [vmem:[%s3887 + $0x100] sm:$0xff]
  %v3903 = vld [vmem:[%s3887 + $0x110] sm:$0xff]
  %3920 = vrot.lane.b32.xlu0 %v3888, 48
  %v3921 = vpop.permute.xlu0 %3920
  %3922 = vrot.lane.b32.xlu0 %v3889, 48
  %v3923 = vpop.permute.xlu0 %3922
  %3924 = vrot.lane.b32.xlu0 %v3890, 48
  %v3925 = vpop.permute.xlu0 %3924
  %3926 = vrot.lane.b32.xlu0 %v3891, 48
  %v3927 = vpop.permute.xlu0 %3926
  %3928 = vrot.lane.b32.xlu0 %v3892, 48
  %v3929 = vpop.permute.xlu0 %3928
  %3930 = vrot.lane.b32.xlu0 %v3893, 48
  %v3931 = vpop.permute.xlu0 %3930
  %3932 = vrot.lane.b32.xlu0 %v3894, 48
  %v3933 = vpop.permute.xlu0 %3932
  %3934 = vrot.lane.b32.xlu0 %v3895, 48
  %v3935 = vpop.permute.xlu0 %3934
  %3936 = vrot.lane.b32.xlu0 %v3896, 48
  %v3937 = vpop.permute.xlu0 %3936
  %3938 = vrot.lane.b32.xlu0 %v3897, 48
  %v3939 = vpop.permute.xlu0 %3938
  %3940 = vrot.lane.b32.xlu0 %v3898, 48
  %v3941 = vpop.permute.xlu0 %3940
  %3942 = vrot.lane.b32.xlu0 %v3899, 48
  %v3943 = vpop.permute.xlu0 %3942
  %3944 = vrot.lane.b32.xlu0 %v3900, 48
  %v3945 = vpop.permute.xlu0 %3944
  %3946 = vrot.lane.b32.xlu0 %v3901, 48
  %v3947 = vpop.permute.xlu0 %3946
  %3948 = vrot.lane.b32.xlu0 %v3902, 48
  %v3949 = vpop.permute.xlu0 %3948
  %3950 = vrot.lane.b32.xlu0 %v3903, 48
  %v3951 = vpop.permute.xlu0 %3950
  %vm3968 = vcmask 458112
  %3969 = vst.msk [vmem:[#allocation5] sm:$0xff] %vm3968, %v3921
  %3970 = vst.msk [vmem:[#allocation5 + $0x8] sm:$0xff] %vm3968, %v3923
  %3971 = vst.msk [vmem:[#allocation5 + $0x10] sm:$0xff] %vm3968, %v3925
  %3972 = vst.msk [vmem:[#allocation5 + $0x18] sm:$0xff] %vm3968, %v3927
  %3973 = vst.msk [vmem:[#allocation5 + $0x20] sm:$0xff] %vm3968, %v3929
  %3974 = vst.msk [vmem:[#allocation5 + $0x28] sm:$0xff] %vm3968, %v3931
  %3975 = vst.msk [vmem:[#allocation5 + $0x30] sm:$0xff] %vm3968, %v3933
  %3976 = vst.msk [vmem:[#allocation5 + $0x38] sm:$0xff] %vm3968, %v3935
  %3977 = vst.msk [vmem:[#allocation5 + $0x40] sm:$0xff] %vm3968, %v3937
  %3978 = vst.msk [vmem:[#allocation5 + $0x48] sm:$0xff] %vm3968, %v3939
  %3979 = vst.msk [vmem:[#allocation5 + $0x50] sm:$0xff] %vm3968, %v3941
  %3980 = vst.msk [vmem:[#allocation5 + $0x58] sm:$0xff] %vm3968, %v3943
  %3981 = vst.msk [vmem:[#allocation5 + $0x60] sm:$0xff] %vm3968, %v3945
  %3982 = vst.msk [vmem:[#allocation5 + $0x68] sm:$0xff] %vm3968, %v3947
  %3983 = vst.msk [vmem:[#allocation5 + $0x70] sm:$0xff] %vm3968, %v3949
  %3984 = vst.msk [vmem:[#allocation5 + $0x78] sm:$0xff] %vm3968, %v3951
  %v3985 = vld [vmem:[%s3887 + $0x1] sm:$0xff]
  %v3986 = vld [vmem:[%s3887 + $0x11] sm:$0xff]
  %v3987 = vld [vmem:[%s3887 + $0x21] sm:$0xff]
  %v3988 = vld [vmem:[%s3887 + $0x31] sm:$0xff]
  %v3989 = vld [vmem:[%s3887 + $0x41] sm:$0xff]
  %v3990 = vld [vmem:[%s3887 + $0x51] sm:$0xff]
  %v3991 = vld [vmem:[%s3887 + $0x61] sm:$0xff]
  %v3992 = vld [vmem:[%s3887 + $0x71] sm:$0xff]
  %v3993 = vld [vmem:[%s3887 + $0xa1] sm:$0xff]
  %v3994 = vld [vmem:[%s3887 + $0xb1] sm:$0xff]
  %v3995 = vld [vmem:[%s3887 + $0xc1] sm:$0xff]
  %v3996 = vld [vmem:[%s3887 + $0xd1] sm:$0xff]
  %v3997 = vld [vmem:[%s3887 + $0xe1] sm:$0xff]
  %v3998 = vld [vmem:[%s3887 + $0xf1] sm:$0xff]
  %v3999 = vld [vmem:[%s3887 + $0x101] sm:$0xff]
  %v4000 = vld [vmem:[%s3887 + $0x111] sm:$0xff]
  %4017 = vrot.lane.b32.xlu0 %v3985, 56
  %v4018 = vpop.permute.xlu0 %4017
  %4019 = vrot.lane.b32.xlu0 %v3986, 56
  %v4020 = vpop.permute.xlu0 %4019
  %4021 = vrot.lane.b32.xlu0 %v3987, 56
  %v4022 = vpop.permute.xlu0 %4021
  %4023 = vrot.lane.b32.xlu0 %v3988, 56
  %v4024 = vpop.permute.xlu0 %4023
  %4025 = vrot.lane.b32.xlu0 %v3989, 56
  %v4026 = vpop.permute.xlu0 %4025
  %4027 = vrot.lane.b32.xlu0 %v3990, 56
  %v4028 = vpop.permute.xlu0 %4027
  %4029 = vrot.lane.b32.xlu0 %v3991, 56
  %v4030 = vpop.permute.xlu0 %4029
  %4031 = vrot.lane.b32.xlu0 %v3992, 56
  %v4032 = vpop.permute.xlu0 %4031
  %4033 = vrot.lane.b32.xlu0 %v3993, 56
  %v4034 = vpop.permute.xlu0 %4033
  %4035 = vrot.lane.b32.xlu0 %v3994, 56
  %v4036 = vpop.permute.xlu0 %4035
  %4037 = vrot.lane.b32.xlu0 %v3995, 56
  %v4038 = vpop.permute.xlu0 %4037
  %4039 = vrot.lane.b32.xlu0 %v3996, 56
  %v4040 = vpop.permute.xlu0 %4039
  %4041 = vrot.lane.b32.xlu0 %v3997, 56
  %v4042 = vpop.permute.xlu0 %4041
  %4043 = vrot.lane.b32.xlu0 %v3998, 56
  %v4044 = vpop.permute.xlu0 %4043
  %4045 = vrot.lane.b32.xlu0 %v3999, 56
  %v4046 = vpop.permute.xlu0 %4045
  %4047 = vrot.lane.b32.xlu0 %v4000, 56
  %v4048 = vpop.permute.xlu0 %4047
  %vm4065 = vcmask 523712
  %4066 = vst.msk [vmem:[#allocation5] sm:$0xff] %vm4065, %v4018
  %4067 = vst.msk [vmem:[#allocation5 + $0x8] sm:$0xff] %vm4065, %v4020
  %4068 = vst.msk [vmem:[#allocation5 + $0x10] sm:$0xff] %vm4065, %v4022
  %4069 = vst.msk [vmem:[#allocation5 + $0x18] sm:$0xff] %vm4065, %v4024
  %4070 = vst.msk [vmem:[#allocation5 + $0x20] sm:$0xff] %vm4065, %v4026
  %4071 = vst.msk [vmem:[#allocation5 + $0x28] sm:$0xff] %vm4065, %v4028
  %4072 = vst.msk [vmem:[#allocation5 + $0x30] sm:$0xff] %vm4065, %v4030
  %4073 = vst.msk [vmem:[#allocation5 + $0x38] sm:$0xff] %vm4065, %v4032
  %4074 = vst.msk [vmem:[#allocation5 + $0x40] sm:$0xff] %vm4065, %v4034
  %4075 = vst.msk [vmem:[#allocation5 + $0x48] sm:$0xff] %vm4065, %v4036
  %4076 = vst.msk [vmem:[#allocation5 + $0x50] sm:$0xff] %vm4065, %v4038
  %4077 = vst.msk [vmem:[#allocation5 + $0x58] sm:$0xff] %vm4065, %v4040
  %4078 = vst.msk [vmem:[#allocation5 + $0x60] sm:$0xff] %vm4065, %v4042
  %4079 = vst.msk [vmem:[#allocation5 + $0x68] sm:$0xff] %vm4065, %v4044
  %4080 = vst.msk [vmem:[#allocation5 + $0x70] sm:$0xff] %vm4065, %v4046
  %4081 = vst.msk [vmem:[#allocation5 + $0x78] sm:$0xff] %vm4065, %v4048
  %v4082 = vld [vmem:[%s3887 + $0x2] sm:$0xff]
  %v4083 = vld [vmem:[%s3887 + $0x12] sm:$0xff]
  %v4084 = vld [vmem:[%s3887 + $0x22] sm:$0xff]
  %v4085 = vld [vmem:[%s3887 + $0x32] sm:$0xff]
  %v4086 = vld [vmem:[%s3887 + $0x42] sm:$0xff]
  %v4087 = vld [vmem:[%s3887 + $0x52] sm:$0xff]
  %v4088 = vld [vmem:[%s3887 + $0x62] sm:$0xff]
  %v4089 = vld [vmem:[%s3887 + $0x72] sm:$0xff]
  %v4090 = vld [vmem:[%s3887 + $0xa2] sm:$0xff]
  %v4091 = vld [vmem:[%s3887 + $0xb2] sm:$0xff]
  %v4092 = vld [vmem:[%s3887 + $0xc2] sm:$0xff]
  %v4093 = vld [vmem:[%s3887 + $0xd2] sm:$0xff]
  %v4094 = vld [vmem:[%s3887 + $0xe2] sm:$0xff]
  %v4095 = vld [vmem:[%s3887 + $0xf2] sm:$0xff]
  %v4096 = vld [vmem:[%s3887 + $0x102] sm:$0xff]
  %v4097 = vld [vmem:[%s3887 + $0x112] sm:$0xff]
  %4114 = vrot.lane.b32.xlu0 %v4082, 64
  %v4115 = vpop.permute.xlu0 %4114
  %4116 = vrot.lane.b32.xlu0 %v4083, 64
  %v4117 = vpop.permute.xlu0 %4116
  %4118 = vrot.lane.b32.xlu0 %v4084, 64
  %v4119 = vpop.permute.xlu0 %4118
  %4120 = vrot.lane.b32.xlu0 %v4085, 64
  %v4121 = vpop.permute.xlu0 %4120
  %4122 = vrot.lane.b32.xlu0 %v4086, 64
  %v4123 = vpop.permute.xlu0 %4122
  %4124 = vrot.lane.b32.xlu0 %v4087, 64
  %v4125 = vpop.permute.xlu0 %4124
  %4126 = vrot.lane.b32.xlu0 %v4088, 64
  %v4127 = vpop.permute.xlu0 %4126
  %4128 = vrot.lane.b32.xlu0 %v4089, 64
  %v4129 = vpop.permute.xlu0 %4128
  %4130 = vrot.lane.b32.xlu0 %v4090, 64
  %v4131 = vpop.permute.xlu0 %4130
  %4132 = vrot.lane.b32.xlu0 %v4091, 64
  %v4133 = vpop.permute.xlu0 %4132
  %4134 = vrot.lane.b32.xlu0 %v4092, 64
  %v4135 = vpop.permute.xlu0 %4134
  %4136 = vrot.lane.b32.xlu0 %v4093, 64
  %v4137 = vpop.permute.xlu0 %4136
  %4138 = vrot.lane.b32.xlu0 %v4094, 64
  %v4139 = vpop.permute.xlu0 %4138
  %4140 = vrot.lane.b32.xlu0 %v4095, 64
  %v4141 = vpop.permute.xlu0 %4140
  %4142 = vrot.lane.b32.xlu0 %v4096, 64
  %v4143 = vpop.permute.xlu0 %4142
  %4144 = vrot.lane.b32.xlu0 %v4097, 64
  %v4145 = vpop.permute.xlu0 %4144
  %vm4162 = vcmask 589312
  %4163 = vst.msk [vmem:[#allocation5] sm:$0xff] %vm4162, %v4115
  %4164 = vst.msk [vmem:[#allocation5 + $0x8] sm:$0xff] %vm4162, %v4117
  %4165 = vst.msk [vmem:[#allocation5 + $0x10] sm:$0xff] %vm4162, %v4119
  %4166 = vst.msk [vmem:[#allocation5 + $0x18] sm:$0xff] %vm4162, %v4121
  %4167 = vst.msk [vmem:[#allocation5 + $0x20] sm:$0xff] %vm4162, %v4123
  %4168 = vst.msk [vmem:[#allocation5 + $0x28] sm:$0xff] %vm4162, %v4125
  %4169 = vst.msk [vmem:[#allocation5 + $0x30] sm:$0xff] %vm4162, %v4127
  %4170 = vst.msk [vmem:[#allocation5 + $0x38] sm:$0xff] %vm4162, %v4129
  %4171 = vst.msk [vmem:[#allocation5 + $0x40] sm:$0xff] %vm4162, %v4131
  %4172 = vst.msk [vmem:[#allocation5 + $0x48] sm:$0xff] %vm4162, %v4133
  %4173 = vst.msk [vmem:[#allocation5 + $0x50] sm:$0xff] %vm4162, %v4135
  %4174 = vst.msk [vmem:[#allocation5 + $0x58] sm:$0xff] %vm4162, %v4137
  %4175 = vst.msk [vmem:[#allocation5 + $0x60] sm:$0xff] %vm4162, %v4139
  %4176 = vst.msk [vmem:[#allocation5 + $0x68] sm:$0xff] %vm4162, %v4141
  %4177 = vst.msk [vmem:[#allocation5 + $0x70] sm:$0xff] %vm4162, %v4143
  %4178 = vst.msk [vmem:[#allocation5 + $0x78] sm:$0xff] %vm4162, %v4145
  %v4179 = vld [vmem:[#allocation5] sm:$0xff]
  %v4180 = vld [vmem:[#allocation5 + $0x8] sm:$0xff]
  %v4181 = vld [vmem:[#allocation5 + $0x10] sm:$0xff]
  %v4182 = vld [vmem:[#allocation5 + $0x18] sm:$0xff]
  %v4183 = vld [vmem:[#allocation5 + $0x20] sm:$0xff]
  %v4184 = vld [vmem:[#allocation5 + $0x28] sm:$0xff]
  %v4185 = vld [vmem:[#allocation5 + $0x30] sm:$0xff]
  %v4186 = vld [vmem:[#allocation5 + $0x38] sm:$0xff]
  %v4187 = vld [vmem:[#allocation5 + $0x40] sm:$0xff]
  %v4188 = vld [vmem:[#allocation5 + $0x48] sm:$0xff]
  %v4189 = vld [vmem:[#allocation5 + $0x50] sm:$0xff]
  %v4190 = vld [vmem:[#allocation5 + $0x58] sm:$0xff]
  %v4191 = vld [vmem:[#allocation5 + $0x60] sm:$0xff]
  %v4192 = vld [vmem:[#allocation5 + $0x68] sm:$0xff]
  %v4193 = vld [vmem:[#allocation5 + $0x70] sm:$0xff]
  %v4194 = vld [vmem:[#allocation5 + $0x78] sm:$0xff]
  %v4195 = vld [vmem:[%s3] sm:$0xff]
  %v4196 = vld [vmem:[%s3 + $0x8] sm:$0xff]
  %v4197 = vld [vmem:[%s3 + $0x10] sm:$0xff]
  %v4198 = vld [vmem:[%s3 + $0x18] sm:$0xff]
  %v4199 = vld [vmem:[%s3 + $0x20] sm:$0xff]
  %v4200 = vld [vmem:[%s3 + $0x28] sm:$0xff]
  %v4201 = vld [vmem:[%s3 + $0x30] sm:$0xff]
  %v4202 = vld [vmem:[%s3 + $0x38] sm:$0xff]
  %v4203 = vld [vmem:[%s3 + $0x40] sm:$0xff]
  %v4204 = vld [vmem:[%s4] sm:$0x1]
  %v4206 = vlaneseq
  %v4207 = vshrl.u32 %v4206, 7
  %v4208 = vsub.s32 0, %v4207
  %v4209 = vrot.slane %v4204, %v4208
  %vm4211 = vcmask 588800
  %v4213 = vsel %vm4211, %v4179, 0
  %v4216 = vsel %vm4211, %v4180, 0
  %v4219 = vsel %vm4211, %v4181, 0
  %v4222 = vsel %vm4211, %v4182, 0
  %v4225 = vsel %vm4211, %v4183, 0
  %v4228 = vsel %vm4211, %v4184, 0
  %v4231 = vsel %vm4211, %v4185, 0
  %v4234 = vsel %vm4211, %v4186, 0
  %v4237 = vsel %vm4211, %v4187, 0
  %v4240 = vsel %vm4211, %v4188, 0
  %v4243 = vsel %vm4211, %v4189, 0
  %v4246 = vsel %vm4211, %v4190, 0
  %v4249 = vsel %vm4211, %v4191, 0
  %v4252 = vsel %vm4211, %v4192, 0
  %v4255 = vsel %vm4211, %v4193, 0
  %v4258 = vsel %vm4211, %v4194, 0
  %4260 = vmatprep.subr.mxu0 0.0
  %4261 = vmatpush1.msra.mxu0 %v4195
  %4262 = vmatprep.subr.mxu0 0.0
  %4263 = vmatpush1.msra.mxu0 %v4196
  %4264 = vmatprep.subr.mxu0 0.0
  %4265 = vmatpush1.msra.mxu0 %v4197
  %4266 = vmatprep.subr.mxu0 0.0
  %4267 = vmatpush1.msra.mxu0 %v4198
  %4268 = vmatprep.subr.mxu0 0.0
  %4269 = vmatpush1.msra.mxu0 %v4199
  %4270 = vmatprep.subr.mxu0 0.0
  %4271 = vmatpush1.msra.mxu0 %v4200
  %4272 = vmatprep.subr.mxu0 0.0
  %4273 = vmatpush1.msra.mxu0 %v4201
  %4274 = vmatprep.subr.mxu0 0.0
  %4275 = vmatpush1.msra.mxu0 %v4202
  %4276 = vmatprep.subr.mxu0 0.0
  %4277 = vmatpush1.msra.mxu0 %v4203
  %4278 = vmatprep.subr.mxu0 0.0
  %4279 = vmatpush1.msra.mxu0 0.0
  %4280 = vmatprep.subr.mxu0 0.0
  %4281 = vmatpush1.msra.mxu0 0.0
  %4282 = vmatprep.subr.mxu0 0.0
  %4283 = vmatpush1.msra.mxu0 0.0
  %4284 = vmatprep.subr.mxu0 0.0
  %4285 = vmatpush1.msra.mxu0 0.0
  %4286 = vmatprep.subr.mxu0 0.0
  %4287 = vmatpush1.msra.mxu0 0.0
  %4288 = vmatprep.subr.mxu0 0.0
  %4289 = vmatpush1.msra.mxu0 0.0
  %4290 = vmatprep.subr.mxu0 0.0
  %4291 = vmatpush1.msra.mxu0 0.0
  %4292 = vmatprep.subr.mxu0 0.0
  %4293 = vmatpush1.msra.mxu0 0.0
  %4294 = vmatprep.subr.mxu0 0.0
  %4295 = vmatpush1.msra.mxu0 0.0
  %4296 = vmatprep.subr.mxu0 0.0
  %4297 = vmatpush1.msra.mxu0 0.0
  %4298 = vmatprep.subr.mxu0 0.0
  %4299 = vmatpush1.msra.mxu0 0.0
  %4300 = vmatprep.subr.mxu0 0.0
  %4301 = vmatpush1.msra.mxu0 0.0
  %4302 = vmatprep.subr.mxu0 0.0
  %4303 = vmatpush1.msra.mxu0 0.0
  %4304 = vmatprep.subr.mxu0 0.0
  %4305 = vmatpush1.msra.mxu0 0.0
  %4306 = vmatprep.subr.mxu0 0.0
  %4307 = vmatpush1.msra.mxu0 0.0
  %4308 = vmatprep.subr.mxu0 0.0
  %4309 = vmatpush1.msra.mxu0 0.0
  %4310 = vmatprep.subr.mxu0 0.0
  %4311 = vmatpush1.msra.mxu0 0.0
  %4312 = vmatprep.subr.mxu0 0.0
  %4313 = vmatpush1.msra.mxu0 0.0
  %4314 = vmatprep.subr.mxu0 0.0
  %4315 = vmatpush1.msra.mxu0 0.0
  %4316 = vmatprep.subr.mxu0 0.0
  %4317 = vmatpush1.msra.mxu0 0.0
  %4318 = vmatprep.subr.mxu0 0.0
  %4319 = vmatpush1.msra.mxu0 0.0
  %4320 = vmatprep.subr.mxu0 0.0
  %4321 = vmatpush1.msra.mxu0 0.0
  %4322 = vmatprep.subr.mxu0 0.0
  %4323 = vmatpush1.msra.mxu0 0.0
  %4324 = vmatprep.mubr.f32.mxu0 0.0
  %4325 = vmatmul.mubr.f32.gmra.mrb[0].mxu0 %v4213
  %v4326 = vpop.f32.mrb[0].mxu0
  %v4327 = vadd.f32 %v4209, %v4326
  %v4328 = vpop.f32.mrb[0].mxu0
  %4329 = vmatprep.mubr.f32.mxu0 0.0
  %4330 = vmatmul.mubr.f32.gmra.mrb[0].mxu0 %v4216
  %v4331 = vpop.f32.mrb[0].mxu0
  %v4332 = vadd.f32 %v4209, %v4331
  %v4333 = vpop.f32.mrb[0].mxu0
  %4334 = vmatprep.mubr.f32.mxu0 0.0
  %4335 = vmatmul.mubr.f32.gmra.mrb[0].mxu0 %v4219
  %v4336 = vpop.f32.mrb[0].mxu0
  %v4337 = vadd.f32 %v4209, %v4336
  %v4338 = vpop.f32.mrb[0].mxu0
  %4339 = vmatprep.mubr.f32.mxu0 0.0
  %4340 = vmatmul.mubr.f32.gmra.mrb[0].mxu0 %v4222
  %v4341 = vpop.f32.mrb[0].mxu0
  %v4342 = vadd.f32 %v4209, %v4341
  %v4343 = vpop.f32.mrb[0].mxu0
  %4344 = vmatprep.mubr.f32.mxu0 0.0
  %4345 = vmatmul.mubr.f32.gmra.mrb[0].mxu0 %v4225
  %v4346 = vpop.f32.mrb[0].mxu0
  %v4347 = vadd.f32 %v4209, %v4346
  %v4348 = vpop.f32.mrb[0].mxu0
  %4349 = vmatprep.mubr.f32.mxu0 0.0
  %4350 = vmatmul.mubr.f32.gmra.mrb[0].mxu0 %v4228
  %v4351 = vpop.f32.mrb[0].mxu0
  %v4352 = vadd.f32 %v4209, %v4351
  %v4353 = vpop.f32.mrb[0].mxu0
  %4354 = vmatprep.mubr.f32.mxu0 0.0
  %4355 = vmatmul.mubr.f32.gmra.mrb[0].mxu0 %v4231
  %v4356 = vpop.f32.mrb[0].mxu0
  %v4357 = vadd.f32 %v4209, %v4356
  %v4358 = vpop.f32.mrb[0].mxu0
  %4359 = vmatprep.mubr.f32.mxu0 0.0
  %4360 = vmatmul.mubr.f32.gmra.mrb[0].mxu0 %v4234
  %v4361 = vpop.f32.mrb[0].mxu0
  %v4362 = vadd.f32 %v4209, %v4361
  %v4363 = vpop.f32.mrb[0].mxu0
  %4364 = vmatprep.mubr.f32.mxu0 0.0
  %4365 = vmatmul.mubr.f32.gmra.mrb[0].mxu0 %v4237
  %v4366 = vpop.f32.mrb[0].mxu0
  %v4367 = vadd.f32 %v4209, %v4366
  %v4368 = vpop.f32.mrb[0].mxu0
  %4369 = vmatprep.mubr.f32.mxu0 0.0
  %4370 = vmatmul.mubr.f32.gmra.mrb[0].mxu0 %v4240
  %v4371 = vpop.f32.mrb[0].mxu0
  %v4372 = vadd.f32 %v4209, %v4371
  %v4373 = vpop.f32.mrb[0].mxu0
  %4374 = vmatprep.mubr.f32.mxu0 0.0
  %4375 = vmatmul.mubr.f32.gmra.mrb[0].mxu0 %v4243
  %v4376 = vpop.f32.mrb[0].mxu0
  %v4377 = vadd.f32 %v4209, %v4376
  %v4378 = vpop.f32.mrb[0].mxu0
  %4379 = vmatprep.mubr.f32.mxu0 0.0
  %4380 = vmatmul.mubr.f32.gmra.mrb[0].mxu0 %v4246
  %v4381 = vpop.f32.mrb[0].mxu0
  %v4382 = vadd.f32 %v4209, %v4381
  %v4383 = vpop.f32.mrb[0].mxu0
  %4384 = vmatprep.mubr.f32.mxu0 0.0
  %4385 = vmatmul.mubr.f32.gmra.mrb[0].mxu0 %v4249
  %v4386 = vpop.f32.mrb[0].mxu0
  %v4387 = vadd.f32 %v4209, %v4386
  %v4388 = vpop.f32.mrb[0].mxu0
  %4389 = vmatprep.mubr.f32.mxu0 0.0
  %4390 = vmatmul.mubr.f32.gmra.mrb[0].mxu0 %v4252
  %v4391 = vpop.f32.mrb[0].mxu0
  %v4392 = vadd.f32 %v4209, %v4391
  %v4393 = vpop.f32.mrb[0].mxu0
  %4394 = vmatprep.mubr.f32.mxu0 0.0
  %4395 = vmatmul.mubr.f32.gmra.mrb[0].mxu0 %v4255
  %v4396 = vpop.f32.mrb[0].mxu0
  %v4397 = vadd.f32 %v4209, %v4396
  %v4398 = vpop.f32.mrb[0].mxu0
  %4399 = vmatprep.mubr.f32.mxu0 0.0
  %4400 = vmatmul.mubr.f32.gmra.mrb[0].mxu0 %v4258
  %v4401 = vpop.f32.mrb[0].mxu0
  %v4402 = vadd.f32 %v4209, %v4401
  %v4403 = vpop.f32.mrb[0].mxu0
  %4404 = vdwg.mxu0
  %v4405 = vmax.f32 %v4327, 0.0
  %v4406 = vmax.f32 %v4332, 0.0
  %v4407 = vmax.f32 %v4337, 0.0
  %v4408 = vmax.f32 %v4342, 0.0
  %v4409 = vmax.f32 %v4347, 0.0
  %v4410 = vmax.f32 %v4352, 0.0
  %v4411 = vmax.f32 %v4357, 0.0
  %v4412 = vmax.f32 %v4362, 0.0
  %v4413 = vmax.f32 %v4367, 0.0
  %v4414 = vmax.f32 %v4372, 0.0
  %v4415 = vmax.f32 %v4377, 0.0
  %v4416 = vmax.f32 %v4382, 0.0
  %v4417 = vmax.f32 %v4387, 0.0
  %v4418 = vmax.f32 %v4392, 0.0
  %v4419 = vmax.f32 %v4397, 0.0
  %v4420 = vmax.f32 %v4402, 0.0
  %4421 = vxpose.xlu0.b32.start [1/16] %v4405, 128
  %4422 = vxpose.xlu0.b32.cont [2/16] %v4406, 128
  %4423 = vxpose.xlu0.b32.cont [3/16] %v4407, 128
  %4424 = vxpose.xlu0.b32.cont [4/16] %v4408, 128
  %4425 = vxpose.xlu0.b32.cont [5/16] %v4409, 128
  %4426 = vxpose.xlu0.b32.cont [6/16] %v4410, 128
  %4427 = vxpose.xlu0.b32.cont [7/16] %v4411, 128
  %4428 = vxpose.xlu0.b32.cont [8/16] %v4412, 128
  %4429 = vxpose.xlu0.b32.cont [9/16] 0.0, 128
  %4430 = vxpose.xlu0.b32.cont [10/16] 0.0, 128
  %4431 = vxpose.xlu0.b32.cont [11/16] 0.0, 128
  %4432 = vxpose.xlu0.b32.cont [12/16] 0.0, 128
  %4433 = vxpose.xlu0.b32.cont [13/16] 0.0, 128
  %4434 = vxpose.xlu0.b32.cont [14/16] 0.0, 128
  %4435 = vxpose.xlu0.b32.cont [15/16] 0.0, 128
  %4436 = vxpose.xlu0.b32.end [16/16] 0.0, 128
  %v4437 = vpop.trf.xlu0
  %v4438 = vpop.trf.xlu0
  %v4439 = vpop.trf.xlu0
  %v4440 = vpop.trf.xlu0
  %v4441 = vpop.trf.xlu0
  %v4442 = vpop.trf.xlu0
  %v4443 = vpop.trf.xlu0
  %v4444 = vpop.trf.xlu0
  %v4445 = vpop.trf.xlu0
  %v4446 = vpop.trf.xlu0
  %v4447 = vpop.trf.xlu0
  %v4448 = vpop.trf.xlu0
  %v4449 = vpop.trf.xlu0
  %v4450 = vpop.trf.xlu0
  %v4451 = vpop.trf.xlu0
  %v4452 = vpop.trf.xlu0
  %vm4453 = vcmask 523264
  %4454 = vst.msk [vmem:[%s5] sm:$0xff] %vm4453, %v4437
  %4455 = vxpose.xlu0.b32.start [1/16] %v4413, 128
  %4456 = vxpose.xlu0.b32.cont [2/16] %v4414, 128
  %4457 = vxpose.xlu0.b32.cont [3/16] %v4415, 128
  %4458 = vxpose.xlu0.b32.cont [4/16] %v4416, 128
  %4459 = vxpose.xlu0.b32.cont [5/16] %v4417, 128
  %4460 = vxpose.xlu0.b32.cont [6/16] %v4418, 128
  %4461 = vxpose.xlu0.b32.cont [7/16] %v4419, 128
  %4462 = vxpose.xlu0.b32.cont [8/16] %v4420, 128
  %4463 = vxpose.xlu0.b32.cont [9/16] 0.0, 128
  %4464 = vxpose.xlu0.b32.cont [10/16] 0.0, 128
  %4465 = vxpose.xlu0.b32.cont [11/16] 0.0, 128
  %4466 = vxpose.xlu0.b32.cont [12/16] 0.0, 128
  %4467 = vxpose.xlu0.b32.cont [13/16] 0.0, 128
  %4468 = vxpose.xlu0.b32.cont [14/16] 0.0, 128
  %4469 = vxpose.xlu0.b32.cont [15/16] 0.0, 128
  %4470 = vxpose.xlu0.b32.end [16/16] 0.0, 128
  %v4471 = vpop.trf.xlu0
  %v4472 = vpop.trf.xlu0
  %v4473 = vpop.trf.xlu0
  %v4474 = vpop.trf.xlu0
  %v4475 = vpop.trf.xlu0
  %v4476 = vpop.trf.xlu0
  %v4477 = vpop.trf.xlu0
  %v4478 = vpop.trf.xlu0
  %v4479 = vpop.trf.xlu0
  %v4480 = vpop.trf.xlu0
  %v4481 = vpop.trf.xlu0
  %v4482 = vpop.trf.xlu0
  %v4483 = vpop.trf.xlu0
  %v4484 = vpop.trf.xlu0
  %v4485 = vpop.trf.xlu0
  %v4486 = vpop.trf.xlu0
  %s4487 = scalar_lea.vmem %s5, 8
  %4488 = vst.msk [vmem:[%s4487] sm:$0xff] %vm4453, %v4471
  // Predicated region
  $region22: #{down_forward.1} parent=0 // pred_check
    _
  $region23: #{down_forward.1} parent=0 // pred_check_branch
    %4490 = sbr.rel (0) target = $region25
  $region24: #{down_forward.1} parent=0 // pred_region
    _
  $region25: #{down_forward.1} parent=0 // pred_fallthru
    _
  // Predicated region
  $region26: #{down_forward.1} parent=0 // pred_check
    _
  $region27: #{down_forward.1} parent=0 // pred_check_branch
    %4492 = sbr.rel (0) target = $region29
  $region28: #{down_forward.1} parent=0 // pred_region
    _
  $region29: #{down_forward.1} parent=0 // pred_fallthru
    _

</llo_original>
